<compile_context>
chip_gen: v5e
topology: v5e:2x2
jax: 0.10.0
libtpu: 0.0.40
codegen_flags: <defaults>
</compile_context>

<pallas_src>
import functools

import jax
import jax.numpy as jnp
from jax.experimental import pallas as pl
from jax.experimental.pallas import tpu as pltpu

LEVELS = ("P3", "P4", "P5", "P6", "P7")
STRIDES = {"P3": 8, "P4": 16, "P5": 32, "P6": 64, "P7": 128}
SCALES = {f"P{i}": float(2 ** i) for i in range(3, 8)}   # init_scales

TILE_T = 512              # rows per grid step (512 good on all gens)
HEAD_PAD = 128            # lane-dense padded width of the fused head output
CIN_ALIGN = 128           # pad input channels to a multiple of 128


# ----------------------------------------------------------------------------
# Pallas kernel: fused per-tile head.  The level is selected purely by the
# BlockSpec index_maps via the scalar-prefetched per-tile level-id table.
# ----------------------------------------------------------------------------
def _fcos_head_kernel(num_classes, cf,
                      lvl_ref,                    # scalar prefetch (unused here)
                      x_ref,                      # [TILE_T, cin_pad] bf16
                      wf_ref, bf_ref,             # [cin_pad, cf] bf16, [1, cf] f32
                      w1_ref, b1_ref,             # [cf, 2cf]  (= [wc1 | wr1])
                      w2_ref, b2_ref,             # [cf, 2cf]  (= [wc2 | wr2])
                      wh_ref, bh_ref,             # [2cf, 128], [1, 128]
                      out_ref):                   # [TILE_T, 128] bf16
    x = x_ref[...]

    # FeatureExtractor: 1x1 projection + ReLU (f32 accumulation).
    feat = jnp.maximum(
        jnp.dot(x, wf_ref[...], preferred_element_type=jnp.float32)
        + bf_ref[...], 0.0).astype(jnp.bfloat16)

    # Fused tower layer 1: feat @ [wc1 | wr1] in one MXU push.
    cr = jnp.maximum(
        jnp.dot(feat, w1_ref[...], preferred_element_type=jnp.float32)
        + b1_ref[...], 0.0)
    c1 = cr[:, :cf].astype(jnp.bfloat16)          # lane-aligned (cf % 128 == 0)
    r1 = cr[:, cf:].astype(jnp.bfloat16)

    # Un-fused tower layer 2: two [T,cf]x[cf,cf] dots, no block-diagonal zeros.
    c2 = jnp.maximum(
        jnp.dot(c1, w2_ref[:, :cf], preferred_element_type=jnp.float32)
        + b2_ref[:, :cf], 0.0).astype(jnp.bfloat16)
    r2 = jnp.maximum(
        jnp.dot(r1, w2_ref[:, cf:], preferred_element_type=jnp.float32)
        + b2_ref[:, cf:], 0.0).astype(jnp.bfloat16)

    # Fused output head as two half-dots (lane-dense 128-wide output):
    #   [classes | centerness | scale*boxes | pad]
    y = (jnp.dot(c2, wh_ref[:cf, :], preferred_element_type=jnp.float32)
         + jnp.dot(r2, wh_ref[cf:, :], preferred_element_type=jnp.float32)
         + bh_ref[...])

    # ReLU only on the box columns (scale>0 already folded into wh/bh).
    lane = jax.lax.broadcasted_iota(jnp.int32, y.shape, 1)
    box_mask = (lane >= num_classes + 1) & (lane < num_classes + 5)
    out_ref[...] = jnp.where(box_mask, jnp.maximum(y, 0.0), y).astype(out_ref.dtype)


# ----------------------------------------------------------------------------
# Parameter setup (deterministic, in-script) + packing into fused/stacked form
# ----------------------------------------------------------------------------
def _dense(key, fan_in, fan_out):
    w = jax.random.normal(key, (fan_in, fan_out), jnp.float32) / jnp.sqrt(
        jnp.float32(fan_in))
    b = jnp.full((1, fan_out), 0.01, jnp.float32)
    return w, b


def init_params(key, cin, cf, num_classes):
    params = {}
    for li, name in enumerate(LEVELS):
        lkey = jax.random.fold_in(key, li)
        ks = jax.random.split(lkey, 8)
        wf, bf = _dense(ks[0], cin, cf)          # feature projection
        wc1, bc1 = _dense(ks[1], cf, cf)         # clf tower
        wc2, bc2 = _dense(ks[2], cf, cf)
        wcls, bcls = _dense(ks[3], cf, num_classes)
        wctr, bctr = _dense(ks[4], cf, 1)
        wr1, br1 = _dense(ks[5], cf, cf)         # reg tower
        wr2, br2 = _dense(ks[6], cf, cf)
        wbox, bbox = _dense(ks[7], cf, 4)
        params[name] = (wf, bf, wc1, bc1, wc2, bc2, wcls, bcls, wctr, bctr,
                        wr1, br1, wr2, br2, wbox, bbox)
    return params


def pack_params(params, cin, cin_pad, cf, num_classes):
    """Stack per-level weights ([L, ...]) with fusions applied."""
    assert num_classes + 5 <= HEAD_PAD, "num_classes too large for HEAD_PAD"
    assert cf % 128 == 0, "fext_channels must be a multiple of 128 for lane-aligned slicing"
    head_cols = num_classes + 1 + 4
    wf_l, bf_l, w1_l, b1_l, w2_l, b2_l, wh_l, bh_l = ([] for _ in range(8))
    for name in LEVELS:
        (wf, bf, wc1, bc1, wc2, bc2, wcls, bcls, wctr, bctr,
         wr1, br1, wr2, br2, wbox, bbox) = params[name]
        scale = SCALES[name]

        # feature projection, zero-padded along the (padded) input-channel axis
        wf_p = jnp.zeros((cin_pad, cf), jnp.float32).at[:cin, :].set(wf)

        # fused tower layer 1: feat -> [c1 | r1]
        w1 = jnp.concatenate([wc1, wr1], axis=1)
        b1 = jnp.concatenate([bc1, br1], axis=1)

        # tower layer 2: side-by-side (NOT block-diagonal) -> two half-dots
        w2 = jnp.concatenate([wc2, wr2], axis=1)
        b2 = jnp.concatenate([bc2, br2], axis=1)

        # fused, lane-padded output head; box scale folded into weights/bias
        wh = jnp.zeros((2 * cf, HEAD_PAD), jnp.float32)
        wh = wh.at[:cf, :num_classes].set(wcls)
        wh = wh.at[:cf, num_classes:num_classes + 1].set(wctr)
        wh = wh.at[cf:, num_classes + 1:head_cols].set(scale * wbox)
        bh = jnp.zeros((1, HEAD_PAD), jnp.float32)
        bh = bh.at[:, :num_classes].set(bcls)
        bh = bh.at[:, num_classes:num_classes + 1].set(bctr)
        bh = bh.at[:, num_classes + 1:head_cols].set(scale * bbox)

        wf_l.append(wf_p); bf_l.append(bf)
        w1_l.append(w1);  b1_l.append(b1)
        w2_l.append(w2);  b2_l.append(b2)
        wh_l.append(wh);  bh_l.append(bh)

    stack = lambda lst, dt: jnp.stack(lst).astype(dt)
    return (stack(wf_l, jnp.bfloat16), stack(bf_l, jnp.float32),
            stack(w1_l, jnp.bfloat16), stack(b1_l, jnp.float32),
            stack(w2_l, jnp.bfloat16), stack(b2_l, jnp.float32),
            stack(wh_l, jnp.bfloat16), stack(bh_l, jnp.float32))


# ----------------------------------------------------------------------------
# Forward pass (glue: pooling / layout, hot path: one fused Pallas kernel)
# ----------------------------------------------------------------------------
def fcos_core_forward(x, packed, num_classes):
    """x: NCHW float32 [B, Cin, H, W]; H, W must be multiples of 128 (P7)."""
    B, Cin, H, W = x.shape
    cin_pad = packed[0].shape[1]
    cf = packed[0].shape[2]

    # NCHW -> NHWC once, then progressive 2x average pooling for the pyramid.
    nhwc = jnp.transpose(x, (0, 2, 3, 1))

    def pool(t, f):
        b, h, w, c = t.shape
        return t.reshape(b, h // f, f, w // f, f, c).mean(axis=(2, 4))

    feats = [pool(nhwc, STRIDES[LEVELS[0]])]
    for _ in LEVELS[1:]:
        feats.append(pool(feats[-1], 2))

    # Level-contiguous token slab + per-tile level-id table (scalar prefetch).
    level_ids, meta = [], []
    row = 0
    for li, f in enumerate(feats):
        b, h, w, c = f.shape
        t = b * h * w
        n_tiles = pl.cdiv(t, TILE_T)
        level_ids += [li] * n_tiles
        meta.append((row, t, h, w))
        row += n_tiles * TILE_T
    total_rows = row

    # Write tokens of each level directly into one preallocated slab
    # (no per-level pad + concat extra HBM round trip).
    tokens = jnp.zeros((total_rows, cin_pad), jnp.bfloat16)
    for (start, t, h, w), f in zip(meta, feats):
        tok = f.reshape(t, Cin).astype(jnp.bfloat16)
        tokens = jax.lax.dynamic_update_slice(tokens, tok, (start, 0))

    level_ids = jnp.asarray(level_ids, jnp.int32)
    num_tiles = int(level_ids.shape[0])

    # Per-level weight selection via scalar prefetch; weights re-DMA only when
    # the level id changes between consecutive grid steps.
    wspec = lambda k, n: pl.BlockSpec((None, k, n), lambda i, lvl: (lvl[i], 0, 0))
    grid_spec = pltpu.PrefetchScalarGridSpec(
        num_scalar_prefetch=1,
        grid=(num_tiles,),
        in_specs=[
            pl.BlockSpec((TILE_T, cin_pad), lambda i, lvl: (i, 0)),
            wspec(cin_pad, cf), wspec(1, cf),
            wspec(cf, 2 * cf), wspec(1, 2 * cf),
            wspec(cf, 2 * cf), wspec(1, 2 * cf),
            wspec(2 * cf, HEAD_PAD), wspec(1, HEAD_PAD),
        ],
        out_specs=pl.BlockSpec((TILE_T, HEAD_PAD), lambda i, lvl: (i, 0)),
    )

    out = pl.pallas_call(
        functools.partial(_fcos_head_kernel, num_classes, cf),
        out_shape=jax.ShapeDtypeStruct((num_tiles * TILE_T, HEAD_PAD),
                                       jnp.bfloat16),
        grid_spec=grid_spec,
        compiler_params=pltpu.CompilerParams(
            dimension_semantics=("parallel",),
            vmem_limit_bytes=32 * 1024 * 1024),
    )(level_ids, tokens, *packed)

    # Split the lane-dense fused output back into the three per-level heads.
    classes, centerness, boxes = [], [], []
    for (start, t, h, w) in meta:
        y = out[start:start + t]
        classes.append(y[:, :num_classes].reshape(B, h * w, num_classes))
        centerness.append(
            y[:, num_classes:num_classes + 1].reshape(B, h * w, 1))
        boxes.append(
            y[:, num_classes + 1:num_classes + 5].reshape(B, h * w, 4))
    return {
        "classes": jnp.concatenate(classes, axis=1),
        "centerness": jnp.concatenate(centerness, axis=1),
        "boxes": jnp.concatenate(boxes, axis=1),
    }


if __name__ == "__main__":
    B, CIN, H, W = 2, 4, 128, 128      # spatial must cover P7 stride 128
    FEXT_CHANNELS = 128                # small, lane-aligned stand-in for 256
    NUM_CLASSES = 8
    CIN_PAD = -(-CIN // CIN_ALIGN) * CIN_ALIGN   # pad cin to a multiple of 128

    root = jax.random.PRNGKey(0)
    kx, kp = jax.random.split(root)
    x = jax.random.normal(kx, (B, CIN, H, W), jnp.float32)
    raw_params = init_params(kp, CIN, FEXT_CHANNELS, NUM_CLASSES)
    packed = pack_params(raw_params, CIN, CIN_PAD, FEXT_CHANNELS, NUM_CLASSES)

    fwd = jax.jit(functools.partial(fcos_core_forward,
                                    num_classes=NUM_CLASSES))
    out = fwd(x, packed)
    jax.block_until_ready(out)

    total_hw = sum((H // STRIDES[n]) * (W // STRIDES[n]) for n in LEVELS)
    assert out["classes"].shape == (B, total_hw, NUM_CLASSES)
    assert out["centerness"].shape == (B, total_hw, 1)
    assert out["boxes"].shape == (B, total_hw, 4)
    assert bool(jnp.all(jnp.isfinite(out["classes"].astype(jnp.float32))))
    assert bool(jnp.all(out["boxes"].astype(jnp.float32) >= 0.0))
    print("KERNEL_OK")
</pallas_src>

<mosaic_0001>
module attributes {stable_mosaic.version = 11 : i64} {
  func.func @_fcos_head_kernel(%arg0: i32, %arg1: memref<5xi32, #tpu.memory_space<smem>>, %arg2: memref<512x128xbf16, #tpu.memory_space<vmem>>, %arg3: memref<1x128x128xbf16, #tpu.memory_space<vmem>>, %arg4: memref<1x1x128xf32, #tpu.memory_space<vmem>>, %arg5: memref<1x128x256xbf16, #tpu.memory_space<vmem>>, %arg6: memref<1x1x256xf32, #tpu.memory_space<vmem>>, %arg7: memref<1x128x256xbf16, #tpu.memory_space<vmem>>, %arg8: memref<1x1x256xf32, #tpu.memory_space<vmem>>, %arg9: memref<1x256x128xbf16, #tpu.memory_space<vmem>>, %arg10: memref<1x1x128xf32, #tpu.memory_space<vmem>>, %arg11: memref<512x128xbf16, #tpu.memory_space<vmem>>) attributes {dimension_semantics = [#tpu.dimension_semantics<parallel>], iteration_bounds = array<i64: 5>, scalar_prefetch = 1 : i64, scratch_operands = 0 : i64, tpu.core_type = #tpu.core_type<tc>, window_params = [{transform_indices = @transform_0, window_bounds = array<i64: 512, 128>}, {transform_indices = @transform_1, window_bounds = array<i64: 1, 128, 128>}, {transform_indices = @transform_2, window_bounds = array<i64: 1, 1, 128>}, {transform_indices = @transform_3, window_bounds = array<i64: 1, 128, 256>}, {transform_indices = @transform_4, window_bounds = array<i64: 1, 1, 256>}, {transform_indices = @transform_5, window_bounds = array<i64: 1, 128, 256>}, {transform_indices = @transform_6, window_bounds = array<i64: 1, 1, 256>}, {transform_indices = @transform_7, window_bounds = array<i64: 1, 256, 128>}, {transform_indices = @transform_8, window_bounds = array<i64: 1, 1, 128>}, {transform_indices = @transform_9, window_bounds = array<i64: 512, 128>}]} {
    %c0 = arith.constant 0 : index
    %c0_0 = arith.constant 0 : index
    %0 = vector.load %arg2[%c0, %c0_0] : memref<512x128xbf16, #tpu.memory_space<vmem>>, vector<512x128xbf16>
    %c0_1 = arith.constant 0 : index
    %c0_2 = arith.constant 0 : index
    %c0_3 = arith.constant 0 : index
    %1 = vector.load %arg3[%c0_1, %c0_2, %c0_3] : memref<1x128x128xbf16, #tpu.memory_space<vmem>>, vector<1x128x128xbf16>
    %2 = vector.shape_cast %1 : vector<1x128x128xbf16> to vector<128x128xbf16>
    %cst = arith.constant dense<0.000000e+00> : vector<512x128xf32>
    %3 = tpu.matmul %0, %2, %cst {dimension_numbers = #tpu.dot_dimension_numbers<[1], [0], [0], [1], [0, 0, 1, 1], [], []>} : vector<512x128xbf16>, vector<128x128xbf16>, vector<512x128xf32> -> vector<512x128xf32>
    %c0_4 = arith.constant 0 : index
    %c0_5 = arith.constant 0 : index
    %c0_6 = arith.constant 0 : index
    %4 = vector.load %arg4[%c0_4, %c0_5, %c0_6] : memref<1x1x128xf32, #tpu.memory_space<vmem>>, vector<1x1x128xf32>
    %5 = vector.shape_cast %4 : vector<1x1x128xf32> to vector<1x128xf32>
    %6 = vector.broadcast %5 : vector<1x128xf32> to vector<512x128xf32>
    %7 = arith.addf %3, %6 : vector<512x128xf32>
    %cst_7 = arith.constant 0.000000e+00 : f32
    %8 = vector.broadcast %cst_7 : f32 to vector<512x128xf32>
    %9 = arith.maximumf %7, %8 : vector<512x128xf32>
    %10 = arith.truncf %9 : vector<512x128xf32> to vector<512x128xbf16>
    %c0_8 = arith.constant 0 : index
    %c0_9 = arith.constant 0 : index
    %c0_10 = arith.constant 0 : index
    %11 = vector.load %arg5[%c0_8, %c0_9, %c0_10] : memref<1x128x256xbf16, #tpu.memory_space<vmem>>, vector<1x128x256xbf16>
    %12 = vector.shape_cast %11 : vector<1x128x256xbf16> to vector<128x256xbf16>
    %cst_11 = arith.constant dense<0.000000e+00> : vector<512x256xf32>
    %13 = tpu.matmul %10, %12, %cst_11 {dimension_numbers = #tpu.dot_dimension_numbers<[1], [0], [0], [1], [0, 0, 1, 1], [], []>} : vector<512x128xbf16>, vector<128x256xbf16>, vector<512x256xf32> -> vector<512x256xf32>
    %c0_12 = arith.constant 0 : index
    %c0_13 = arith.constant 0 : index
    %c0_14 = arith.constant 0 : index
    %14 = vector.load %arg6[%c0_12, %c0_13, %c0_14] : memref<1x1x256xf32, #tpu.memory_space<vmem>>, vector<1x1x256xf32>
    %15 = vector.shape_cast %14 : vector<1x1x256xf32> to vector<1x256xf32>
    %16 = vector.broadcast %15 : vector<1x256xf32> to vector<512x256xf32>
    %17 = arith.addf %13, %16 : vector<512x256xf32>
    %cst_15 = arith.constant 0.000000e+00 : f32
    %18 = vector.broadcast %cst_15 : f32 to vector<512x256xf32>
    %19 = arith.maximumf %17, %18 : vector<512x256xf32>
    %20 = vector.extract_strided_slice %19 {offsets = [0, 0], sizes = [512, 128], strides = [1, 1]} : vector<512x256xf32> to vector<512x128xf32>
    %21 = arith.truncf %20 : vector<512x128xf32> to vector<512x128xbf16>
    %22 = vector.extract_strided_slice %19 {offsets = [0, 128], sizes = [512, 128], strides = [1, 1]} : vector<512x256xf32> to vector<512x128xf32>
    %23 = arith.truncf %22 : vector<512x128xf32> to vector<512x128xbf16>
    %c0_16 = arith.constant 0 : index
    %c0_17 = arith.constant 0 : index
    %c0_18 = arith.constant 0 : index
    %24 = vector.load %arg7[%c0_16, %c0_17, %c0_18] : memref<1x128x256xbf16, #tpu.memory_space<vmem>>, vector<1x128x128xbf16>
    %25 = vector.shape_cast %24 : vector<1x128x128xbf16> to vector<128x128xbf16>
    %cst_19 = arith.constant dense<0.000000e+00> : vector<512x128xf32>
    %26 = tpu.matmul %21, %25, %cst_19 {dimension_numbers = #tpu.dot_dimension_numbers<[1], [0], [0], [1], [0, 0, 1, 1], [], []>} : vector<512x128xbf16>, vector<128x128xbf16>, vector<512x128xf32> -> vector<512x128xf32>
    %c0_20 = arith.constant 0 : index
    %c0_21 = arith.constant 0 : index
    %c0_22 = arith.constant 0 : index
    %27 = vector.load %arg8[%c0_20, %c0_21, %c0_22] : memref<1x1x256xf32, #tpu.memory_space<vmem>>, vector<1x1x128xf32>
    %28 = vector.shape_cast %27 : vector<1x1x128xf32> to vector<1x128xf32>
    %29 = vector.broadcast %28 : vector<1x128xf32> to vector<512x128xf32>
    %30 = arith.addf %26, %29 : vector<512x128xf32>
    %cst_23 = arith.constant 0.000000e+00 : f32
    %31 = vector.broadcast %cst_23 : f32 to vector<512x128xf32>
    %32 = arith.maximumf %30, %31 : vector<512x128xf32>
    %33 = arith.truncf %32 : vector<512x128xf32> to vector<512x128xbf16>
    %c0_24 = arith.constant 0 : index
    %c0_25 = arith.constant 0 : index
    %c128 = arith.constant 128 : index
    %34 = vector.load %arg7[%c0_24, %c0_25, %c128] : memref<1x128x256xbf16, #tpu.memory_space<vmem>>, vector<1x128x128xbf16>
    %35 = vector.shape_cast %34 : vector<1x128x128xbf16> to vector<128x128xbf16>
    %cst_26 = arith.constant dense<0.000000e+00> : vector<512x128xf32>
    %36 = tpu.matmul %23, %35, %cst_26 {dimension_numbers = #tpu.dot_dimension_numbers<[1], [0], [0], [1], [0, 0, 1, 1], [], []>} : vector<512x128xbf16>, vector<128x128xbf16>, vector<512x128xf32> -> vector<512x128xf32>
    %c0_27 = arith.constant 0 : index
    %c0_28 = arith.constant 0 : index
    %c128_29 = arith.constant 128 : index
    %37 = vector.load %arg8[%c0_27, %c0_28, %c128_29] : memref<1x1x256xf32, #tpu.memory_space<vmem>>, vector<1x1x128xf32>
    %38 = vector.shape_cast %37 : vector<1x1x128xf32> to vector<1x128xf32>
    %39 = vector.broadcast %38 : vector<1x128xf32> to vector<512x128xf32>
    %40 = arith.addf %36, %39 : vector<512x128xf32>
    %cst_30 = arith.constant 0.000000e+00 : f32
    %41 = vector.broadcast %cst_30 : f32 to vector<512x128xf32>
    %42 = arith.maximumf %40, %41 : vector<512x128xf32>
    %43 = arith.truncf %42 : vector<512x128xf32> to vector<512x128xbf16>
    %c0_31 = arith.constant 0 : index
    %c0_32 = arith.constant 0 : index
    %c0_33 = arith.constant 0 : index
    %44 = vector.load %arg9[%c0_31, %c0_32, %c0_33] : memref<1x256x128xbf16, #tpu.memory_space<vmem>>, vector<1x128x128xbf16>
    %45 = vector.shape_cast %44 : vector<1x128x128xbf16> to vector<128x128xbf16>
    %cst_34 = arith.constant dense<0.000000e+00> : vector<512x128xf32>
    %46 = tpu.matmul %33, %45, %cst_34 {dimension_numbers = #tpu.dot_dimension_numbers<[1], [0], [0], [1], [0, 0, 1, 1], [], []>} : vector<512x128xbf16>, vector<128x128xbf16>, vector<512x128xf32> -> vector<512x128xf32>
    %c0_35 = arith.constant 0 : index
    %c128_36 = arith.constant 128 : index
    %c0_37 = arith.constant 0 : index
    %47 = vector.load %arg9[%c0_35, %c128_36, %c0_37] : memref<1x256x128xbf16, #tpu.memory_space<vmem>>, vector<1x128x128xbf16>
    %48 = vector.shape_cast %47 : vector<1x128x128xbf16> to vector<128x128xbf16>
    %cst_38 = arith.constant dense<0.000000e+00> : vector<512x128xf32>
    %49 = tpu.matmul %43, %48, %cst_38 {dimension_numbers = #tpu.dot_dimension_numbers<[1], [0], [0], [1], [0, 0, 1, 1], [], []>} : vector<512x128xbf16>, vector<128x128xbf16>, vector<512x128xf32> -> vector<512x128xf32>
    %50 = arith.addf %46, %49 : vector<512x128xf32>
    %c0_39 = arith.constant 0 : index
    %c0_40 = arith.constant 0 : index
    %c0_41 = arith.constant 0 : index
    %51 = vector.load %arg10[%c0_39, %c0_40, %c0_41] : memref<1x1x128xf32, #tpu.memory_space<vmem>>, vector<1x1x128xf32>
    %52 = vector.shape_cast %51 : vector<1x1x128xf32> to vector<1x128xf32>
    %53 = vector.broadcast %52 : vector<1x128xf32> to vector<512x128xf32>
    %54 = arith.addf %50, %53 : vector<512x128xf32>
    %55 = tpu.iota {dimensions = array<i32: 1>} : vector<512x128xi32>
    %c9_i32 = arith.constant 9 : i32
    %56 = vector.broadcast %c9_i32 : i32 to vector<512x128xi32>
    %57 = arith.cmpi sge, %55, %56 : vector<512x128xi32>
    %c13_i32 = arith.constant 13 : i32
    %58 = vector.broadcast %c13_i32 : i32 to vector<512x128xi32>
    %59 = arith.cmpi slt, %55, %58 : vector<512x128xi32>
    %60 = arith.andi %57, %59 : vector<512x128xi1>
    %cst_42 = arith.constant 0.000000e+00 : f32
    %61 = vector.broadcast %cst_42 : f32 to vector<512x128xf32>
    %62 = arith.maximumf %54, %61 : vector<512x128xf32>
    %63 = arith.select %60, %62, %54 : vector<512x128xi1>, vector<512x128xf32>
    %64 = arith.truncf %63 : vector<512x128xf32> to vector<512x128xbf16>
    %c0_43 = arith.constant 0 : index
    %c0_44 = arith.constant 0 : index
    %65 = vector.load %arg11[%c0_43, %c0_44] : memref<512x128xbf16, #tpu.memory_space<vmem>>, vector<512x128xbf16>
    tpu.vector_store %arg11[%c0_43, %c0_44], %64 {strides = array<i32>} : memref<512x128xbf16, #tpu.memory_space<vmem>>, vector<512x128xbf16>,
    return
  }
  func.func @transform_0(%arg0: i32, %arg1: memref<5xi32, #tpu.memory_space<smem>>) -> (i32, i32) {
    %c0_i32 = arith.constant 0 : i32
    %c0_i32_0 = arith.constant 0 : i32
    return %arg0, %c0_i32 : i32, i32
  }
  func.func @transform_1(%arg0: i32, %arg1: memref<5xi32, #tpu.memory_space<smem>>) -> (i32, i32, i32) {
    %0 = arith.index_cast %arg0 : i32 to index
    %1 = memref.load %arg1[%0] : memref<5xi32, #tpu.memory_space<smem>>
    %c0_i32 = arith.constant 0 : i32
    %c0_i32_0 = arith.constant 0 : i32
    %c0_i32_1 = arith.constant 0 : i32
    return %1, %c0_i32, %c0_i32_0 : i32, i32, i32
  }
  func.func @transform_2(%arg0: i32, %arg1: memref<5xi32, #tpu.memory_space<smem>>) -> (i32, i32, i32) {
    %0 = arith.index_cast %arg0 : i32 to index
    %1 = memref.load %arg1[%0] : memref<5xi32, #tpu.memory_space<smem>>
    %c0_i32 = arith.constant 0 : i32
    %c0_i32_0 = arith.constant 0 : i32
    %c0_i32_1 = arith.constant 0 : i32
    return %1, %c0_i32, %c0_i32_0 : i32, i32, i32
  }
  func.func @transform_3(%arg0: i32, %arg1: memref<5xi32, #tpu.memory_space<smem>>) -> (i32, i32, i32) {
    %0 = arith.index_cast %arg0 : i32 to index
    %1 = memref.load %arg1[%0] : memref<5xi32, #tpu.memory_space<smem>>
    %c0_i32 = arith.constant 0 : i32
    %c0_i32_0 = arith.constant 0 : i32
    %c0_i32_1 = arith.constant 0 : i32
    return %1, %c0_i32, %c0_i32_0 : i32, i32, i32
  }
  func.func @transform_4(%arg0: i32, %arg1: memref<5xi32, #tpu.memory_space<smem>>) -> (i32, i32, i32) {
    %0 = arith.index_cast %arg0 : i32 to index
    %1 = memref.load %arg1[%0] : memref<5xi32, #tpu.memory_space<smem>>
    %c0_i32 = arith.constant 0 : i32
    %c0_i32_0 = arith.constant 0 : i32
    %c0_i32_1 = arith.constant 0 : i32
    return %1, %c0_i32, %c0_i32_0 : i32, i32, i32
  }
  func.func @transform_5(%arg0: i32, %arg1: memref<5xi32, #tpu.memory_space<smem>>) -> (i32, i32, i32) {
    %0 = arith.index_cast %arg0 : i32 to index
    %1 = memref.load %arg1[%0] : memref<5xi32, #tpu.memory_space<smem>>
    %c0_i32 = arith.constant 0 : i32
    %c0_i32_0 = arith.constant 0 : i32
    %c0_i32_1 = arith.constant 0 : i32
    return %1, %c0_i32, %c0_i32_0 : i32, i32, i32
  }
  func.func @transform_6(%arg0: i32, %arg1: memref<5xi32, #tpu.memory_space<smem>>) -> (i32, i32, i32) {
    %0 = arith.index_cast %arg0 : i32 to index
    %1 = memref.load %arg1[%0] : memref<5xi32, #tpu.memory_space<smem>>
    %c0_i32 = arith.constant 0 : i32
    %c0_i32_0 = arith.constant 0 : i32
    %c0_i32_1 = arith.constant 0 : i32
    return %1, %c0_i32, %c0_i32_0 : i32, i32, i32
  }
  func.func @transform_7(%arg0: i32, %arg1: memref<5xi32, #tpu.memory_space<smem>>) -> (i32, i32, i32) {
    %0 = arith.index_cast %arg0 : i32 to index
    %1 = memref.load %arg1[%0] : memref<5xi32, #tpu.memory_space<smem>>
    %c0_i32 = arith.constant 0 : i32
    %c0_i32_0 = arith.constant 0 : i32
    %c0_i32_1 = arith.constant 0 : i32
    return %1, %c0_i32, %c0_i32_0 : i32, i32, i32
  }
  func.func @transform_8(%arg0: i32, %arg1: memref<5xi32, #tpu.memory_space<smem>>) -> (i32, i32, i32) {
    %0 = arith.index_cast %arg0 : i32 to index
    %1 = memref.load %arg1[%0] : memref<5xi32, #tpu.memory_space<smem>>
    %c0_i32 = arith.constant 0 : i32
    %c0_i32_0 = arith.constant 0 : i32
    %c0_i32_1 = arith.constant 0 : i32
    return %1, %c0_i32, %c0_i32_0 : i32, i32, i32
  }
  func.func @transform_9(%arg0: i32, %arg1: memref<5xi32, #tpu.memory_space<smem>>) -> (i32, i32) {
    %c0_i32 = arith.constant 0 : i32
    %c0_i32_0 = arith.constant 0 : i32
    return %arg0, %c0_i32 : i32, i32
  }
}

</mosaic_0001>

<llo_original>
// kernel: fcos_core_forward.1
$region0: #{fcos_core_forward.1}
  #allocation0 [shape = 'u32[]', space=smem, size = 0x4, offset = 0x4, fixed_abs, tag = 'smem constant byte address 0x4 - core index']
  #allocation1 [shape = 'u32[72,128]{1,0:T(1,128)}', space=vmem, size = 0x9000, scoped, tag = 'internal scratch']
  #allocation2 [shape = 's32[1]{0}', space=sflag, size = 0x4, scoped, tag = 'scoped memory for fcos_core_forward.1']
  #allocation3 [shape = 'u8[512]{0}', space=smem, size = 0x200, scoped, tag = 'prefetched SMEM operand 0']
  %s0 = inlined_call_operand.vmem [shape: s32[5], index: 0, kind: input, shape index: {}]
  %s1 = inlined_call_operand.vmem [shape: bf16[2560,128], index: 1, kind: input, shape index: {}]
  %s2 = inlined_call_operand.vmem [shape: bf16[5,128,128], index: 2, kind: input, shape index: {}]
  %s3 = inlined_call_operand.vmem [shape: f32[5,1,128], index: 3, kind: input, shape index: {}]
  %s4 = inlined_call_operand.vmem [shape: bf16[5,128,256], index: 4, kind: input, shape index: {}]
  %s5 = inlined_call_operand.vmem [shape: f32[5,1,256], index: 5, kind: input, shape index: {}]
  %s6 = inlined_call_operand.vmem [shape: bf16[5,128,256], index: 6, kind: input, shape index: {}]
  %s7 = inlined_call_operand.vmem [shape: f32[5,1,256], index: 7, kind: input, shape index: {}]
  %s8 = inlined_call_operand.vmem [shape: bf16[5,256,128], index: 8, kind: input, shape index: {}]
  %s9 = inlined_call_operand.vmem [shape: f32[5,1,128], index: 9, kind: input, shape index: {}]
  %s10 = inlined_call_operand.vmem [shape: bf16[2560,128], index: 10, kind: output, shape index: {}]
  %s11 = sld [smem:[#allocation0]]
  $region69: #{fcos_core_forward.1} parent=0
    _
  %s13 = ssub.s32 1, %s11
  %s14 = scalar_select 0, %s13, %s11
  %s16 = sshll.u32 %s0, 4
  %s17 = int_to_ptr.vmem [resolvable:$true] %s16
  %19 = dma.vmem_to_smem %s17, 16, [#allocation3], [#allocation2]
  %21 = dma.done [#allocation2], 16
  %22 = sfence
  loop: start=0, step=1, limit=7
  $region2: #{fcos_core_forward.1} parent=0 // loop_pre_header
    _
  $region3: #{fcos_core_forward.1} parent=0 // loop_header
    %s24 = sphi 0, %s28
    %p25 = scmp.ge.s32.totalorder %s24, 7
    %s34 = sphi 0, %s36
    %s37 = sphi 0, %s34
    %s38 = sphi 0, %s37
    %s54 = sphi 0, %s38
    %s62 = sphi 0, %s64
    %s65 = sphi 0, %s62
    %s66 = sphi 0, %s65
    %s82 = sphi 0, %s66
    %s90 = sphi 0, %s92
    %s93 = sphi 0, %s90
    %s94 = sphi 0, %s93
    %s110 = sphi 0, %s94
    %s118 = sphi 0, %s120
    %s121 = sphi 0, %s118
    %s122 = sphi 0, %s121
    %s138 = sphi 0, %s122
    %s146 = sphi 0, %s148
    %s149 = sphi 0, %s146
    %s150 = sphi 0, %s149
    %s166 = sphi 0, %s150
    %s174 = sphi 0, %s176
    %s177 = sphi 0, %s174
    %s178 = sphi 0, %s177
    %s194 = sphi 0, %s178
    %s202 = sphi 0, %s204
    %s205 = sphi 0, %s202
    %s206 = sphi 0, %s205
    %s222 = sphi 0, %s206
    %s230 = sphi 0, %s232
    %s233 = sphi 0, %s230
    %s234 = sphi 0, %s233
    %s250 = sphi 0, %s234
    %s258 = sphi 0, %s260
    %s261 = sphi 0, %s258
    %s262 = sphi 0, %s261
    %s278 = sphi 0, %s262
    %s284 = sphi 0, %s286
    %s287 = sphi 0, %s284
    %s288 = sphi 0, %s287
    %s304 = sphi 0, %s288
  $region4: #{fcos_core_forward.1} parent=0 // loop_header_branch
    %27 = sbr.rel (%p25) target = $region8
  $region5: #{fcos_core_forward.1} parent=0 // loop_body
    %s29 = ssub.s32 %s24, 1
    %s30 = ssub.s32 %s24, 2
    %s31 = sadd.s32 %s24, 1
    %s32 = ssub.s32 %s24, %s31
    %p33 = scmp.eq.s32.totalorder %s32, 0
    %s35 = sadd.s32 %s34, 1
    %s36 = scalar_select %p33, %s34, %s35
    %p39 = pneg %p33
    %p40 = scmp.eq.s32.totalorder %s24, 4
    %p41 = por %p39, %p40
    %p42 = scmp.ne.s32.totalorder %s34, %s37
    %p43 = scmp.eq.s32.totalorder %s24, 0
    %p44 = por %p42, %p43
    %p45 = scmp.ne.s32.totalorder %s34, %s37
    %p46 = scmp.eq.s32.totalorder %s29, 4
    %p47 = por %p45, %p46
    %p48 = scmp.ne.s32.totalorder %s37, %s38
    %p49 = scmp.eq.s32.totalorder %s29, 0
    %p50 = por %p48, %p49
    %p51 = scmp.ne.s32.totalorder %s37, %s38
    %p52 = scmp.eq.s32.totalorder %s30, 4
    %p53 = por %p51, %p52
    %p55 = scmp.ne.s32.totalorder %s38, %s54
    %p56 = scmp.eq.s32.totalorder %s30, 0
    %p57 = por %p55, %p56
    %s58 = sld [smem:[#allocation3 + %s24]]
    %s59 = sld [smem:[#allocation3 + %s31]]
    %s60 = ssub.s32 %s58, %s59
    %p61 = scmp.eq.s32.totalorder %s60, 0
    %s63 = sadd.s32 %s62, 1
    %s64 = scalar_select %p61, %s62, %s63
    %p67 = pneg %p61
    %p68 = scmp.eq.s32.totalorder %s24, 4
    %p69 = por %p67, %p68
    %p70 = scmp.ne.s32.totalorder %s62, %s65
    %p71 = scmp.eq.s32.totalorder %s24, 0
    %p72 = por %p70, %p71
    %p73 = scmp.ne.s32.totalorder %s62, %s65
    %p74 = scmp.eq.s32.totalorder %s29, 4
    %p75 = por %p73, %p74
    %p76 = scmp.ne.s32.totalorder %s65, %s66
    %p77 = scmp.eq.s32.totalorder %s29, 0
    %p78 = por %p76, %p77
    %p79 = scmp.ne.s32.totalorder %s65, %s66
    %p80 = scmp.eq.s32.totalorder %s30, 4
    %p81 = por %p79, %p80
    %p83 = scmp.ne.s32.totalorder %s66, %s82
    %p84 = scmp.eq.s32.totalorder %s30, 0
    %p85 = por %p83, %p84
    %s86 = sld [smem:[#allocation3 + %s24]]
    %s87 = sld [smem:[#allocation3 + %s31]]
    %s88 = ssub.s32 %s86, %s87
    %p89 = scmp.eq.s32.totalorder %s88, 0
    %s91 = sadd.s32 %s90, 1
    %s92 = scalar_select %p89, %s90, %s91
    %p95 = pneg %p89
    %p96 = scmp.eq.s32.totalorder %s24, 4
    %p97 = por %p95, %p96
    %p98 = scmp.ne.s32.totalorder %s90, %s93
    %p99 = scmp.eq.s32.totalorder %s24, 0
    %p100 = por %p98, %p99
    %p101 = scmp.ne.s32.totalorder %s90, %s93
    %p102 = scmp.eq.s32.totalorder %s29, 4
    %p103 = por %p101, %p102
    %p104 = scmp.ne.s32.totalorder %s93, %s94
    %p105 = scmp.eq.s32.totalorder %s29, 0
    %p106 = por %p104, %p105
    %p107 = scmp.ne.s32.totalorder %s93, %s94
    %p108 = scmp.eq.s32.totalorder %s30, 4
    %p109 = por %p107, %p108
    %p111 = scmp.ne.s32.totalorder %s94, %s110
    %p112 = scmp.eq.s32.totalorder %s30, 0
    %p113 = por %p111, %p112
    %s114 = sld [smem:[#allocation3 + %s24]]
    %s115 = sld [smem:[#allocation3 + %s31]]
    %s116 = ssub.s32 %s114, %s115
    %p117 = scmp.eq.s32.totalorder %s116, 0
    %s119 = sadd.s32 %s118, 1
    %s120 = scalar_select %p117, %s118, %s119
    %p123 = pneg %p117
    %p124 = scmp.eq.s32.totalorder %s24, 4
    %p125 = por %p123, %p124
    %p126 = scmp.ne.s32.totalorder %s118, %s121
    %p127 = scmp.eq.s32.totalorder %s24, 0
    %p128 = por %p126, %p127
    %p129 = scmp.ne.s32.totalorder %s118, %s121
    %p130 = scmp.eq.s32.totalorder %s29, 4
    %p131 = por %p129, %p130
    %p132 = scmp.ne.s32.totalorder %s121, %s122
    %p133 = scmp.eq.s32.totalorder %s29, 0
    %p134 = por %p132, %p133
    %p135 = scmp.ne.s32.totalorder %s121, %s122
    %p136 = scmp.eq.s32.totalorder %s30, 4
    %p137 = por %p135, %p136
    %p139 = scmp.ne.s32.totalorder %s122, %s138
    %p140 = scmp.eq.s32.totalorder %s30, 0
    %p141 = por %p139, %p140
    %s142 = sld [smem:[#allocation3 + %s24]]
    %s143 = sld [smem:[#allocation3 + %s31]]
    %s144 = ssub.s32 %s142, %s143
    %p145 = scmp.eq.s32.totalorder %s144, 0
    %s147 = sadd.s32 %s146, 1
    %s148 = scalar_select %p145, %s146, %s147
    %p151 = pneg %p145
    %p152 = scmp.eq.s32.totalorder %s24, 4
    %p153 = por %p151, %p152
    %p154 = scmp.ne.s32.totalorder %s146, %s149
    %p155 = scmp.eq.s32.totalorder %s24, 0
    %p156 = por %p154, %p155
    %p157 = scmp.ne.s32.totalorder %s146, %s149
    %p158 = scmp.eq.s32.totalorder %s29, 4
    %p159 = por %p157, %p158
    %p160 = scmp.ne.s32.totalorder %s149, %s150
    %p161 = scmp.eq.s32.totalorder %s29, 0
    %p162 = por %p160, %p161
    %p163 = scmp.ne.s32.totalorder %s149, %s150
    %p164 = scmp.eq.s32.totalorder %s30, 4
    %p165 = por %p163, %p164
    %p167 = scmp.ne.s32.totalorder %s150, %s166
    %p168 = scmp.eq.s32.totalorder %s30, 0
    %p169 = por %p167, %p168
    %s170 = sld [smem:[#allocation3 + %s24]]
    %s171 = sld [smem:[#allocation3 + %s31]]
    %s172 = ssub.s32 %s170, %s171
    %p173 = scmp.eq.s32.totalorder %s172, 0
    %s175 = sadd.s32 %s174, 1
    %s176 = scalar_select %p173, %s174, %s175
    %p179 = pneg %p173
    %p180 = scmp.eq.s32.totalorder %s24, 4
    %p181 = por %p179, %p180
    %p182 = scmp.ne.s32.totalorder %s174, %s177
    %p183 = scmp.eq.s32.totalorder %s24, 0
    %p184 = por %p182, %p183
    %p185 = scmp.ne.s32.totalorder %s174, %s177
    %p186 = scmp.eq.s32.totalorder %s29, 4
    %p187 = por %p185, %p186
    %p188 = scmp.ne.s32.totalorder %s177, %s178
    %p189 = scmp.eq.s32.totalorder %s29, 0
    %p190 = por %p188, %p189
    %p191 = scmp.ne.s32.totalorder %s177, %s178
    %p192 = scmp.eq.s32.totalorder %s30, 4
    %p193 = por %p191, %p192
    %p195 = scmp.ne.s32.totalorder %s178, %s194
    %p196 = scmp.eq.s32.totalorder %s30, 0
    %p197 = por %p195, %p196
    %s198 = sld [smem:[#allocation3 + %s24]]
    %s199 = sld [smem:[#allocation3 + %s31]]
    %s200 = ssub.s32 %s198, %s199
    %p201 = scmp.eq.s32.totalorder %s200, 0
    %s203 = sadd.s32 %s202, 1
    %s204 = scalar_select %p201, %s202, %s203
    %p207 = pneg %p201
    %p208 = scmp.eq.s32.totalorder %s24, 4
    %p209 = por %p207, %p208
    %p210 = scmp.ne.s32.totalorder %s202, %s205
    %p211 = scmp.eq.s32.totalorder %s24, 0
    %p212 = por %p210, %p211
    %p213 = scmp.ne.s32.totalorder %s202, %s205
    %p214 = scmp.eq.s32.totalorder %s29, 4
    %p215 = por %p213, %p214
    %p216 = scmp.ne.s32.totalorder %s205, %s206
    %p217 = scmp.eq.s32.totalorder %s29, 0
    %p218 = por %p216, %p217
    %p219 = scmp.ne.s32.totalorder %s205, %s206
    %p220 = scmp.eq.s32.totalorder %s30, 4
    %p221 = por %p219, %p220
    %p223 = scmp.ne.s32.totalorder %s206, %s222
    %p224 = scmp.eq.s32.totalorder %s30, 0
    %p225 = por %p223, %p224
    %s226 = sld [smem:[#allocation3 + %s24]]
    %s227 = sld [smem:[#allocation3 + %s31]]
    %s228 = ssub.s32 %s226, %s227
    %p229 = scmp.eq.s32.totalorder %s228, 0
    %s231 = sadd.s32 %s230, 1
    %s232 = scalar_select %p229, %s230, %s231
    %p235 = pneg %p229
    %p236 = scmp.eq.s32.totalorder %s24, 4
    %p237 = por %p235, %p236
    %p238 = scmp.ne.s32.totalorder %s230, %s233
    %p239 = scmp.eq.s32.totalorder %s24, 0
    %p240 = por %p238, %p239
    %p241 = scmp.ne.s32.totalorder %s230, %s233
    %p242 = scmp.eq.s32.totalorder %s29, 4
    %p243 = por %p241, %p242
    %p244 = scmp.ne.s32.totalorder %s233, %s234
    %p245 = scmp.eq.s32.totalorder %s29, 0
    %p246 = por %p244, %p245
    %p247 = scmp.ne.s32.totalorder %s233, %s234
    %p248 = scmp.eq.s32.totalorder %s30, 4
    %p249 = por %p247, %p248
    %p251 = scmp.ne.s32.totalorder %s234, %s250
    %p252 = scmp.eq.s32.totalorder %s30, 0
    %p253 = por %p251, %p252
    %s254 = sld [smem:[#allocation3 + %s24]]
    %s255 = sld [smem:[#allocation3 + %s31]]
    %s256 = ssub.s32 %s254, %s255
    %p257 = scmp.eq.s32.totalorder %s256, 0
    %s259 = sadd.s32 %s258, 1
    %s260 = scalar_select %p257, %s258, %s259
    %p263 = pneg %p257
    %p264 = scmp.eq.s32.totalorder %s24, 4
    %p265 = por %p263, %p264
    %p266 = scmp.ne.s32.totalorder %s258, %s261
    %p267 = scmp.eq.s32.totalorder %s24, 0
    %p268 = por %p266, %p267
    %p269 = scmp.ne.s32.totalorder %s258, %s261
    %p270 = scmp.eq.s32.totalorder %s29, 4
    %p271 = por %p269, %p270
    %p272 = scmp.ne.s32.totalorder %s261, %s262
    %p273 = scmp.eq.s32.totalorder %s29, 0
    %p274 = por %p272, %p273
    %p275 = scmp.ne.s32.totalorder %s261, %s262
    %p276 = scmp.eq.s32.totalorder %s30, 4
    %p277 = por %p275, %p276
    %p279 = scmp.ne.s32.totalorder %s262, %s278
    %p280 = scmp.eq.s32.totalorder %s30, 0
    %p281 = por %p279, %p280
    %s282 = ssub.s32 %s24, %s31
    %p283 = scmp.eq.s32.totalorder %s282, 0
    %s285 = sadd.s32 %s284, 1
    %s286 = scalar_select %p283, %s284, %s285
    %p289 = pneg %p283
    %p290 = scmp.eq.s32.totalorder %s24, 4
    %p291 = por %p289, %p290
    %p292 = scmp.ne.s32.totalorder %s284, %s287
    %p293 = scmp.eq.s32.totalorder %s24, 0
    %p294 = por %p292, %p293
    %p295 = scmp.ne.s32.totalorder %s284, %s287
    %p296 = scmp.eq.s32.totalorder %s29, 4
    %p297 = por %p295, %p296
    %p298 = scmp.ne.s32.totalorder %s287, %s288
    %p299 = scmp.eq.s32.totalorder %s29, 0
    %p300 = por %p298, %p299
    %p301 = scmp.ne.s32.totalorder %s287, %s288
    %p302 = scmp.eq.s32.totalorder %s30, 4
    %p303 = por %p301, %p302
    %p305 = scmp.ne.s32.totalorder %s288, %s304
    %p306 = scmp.eq.s32.totalorder %s30, 0
    %p307 = por %p305, %p306
    %p308 = scmp.le.s32.totalorder 1, %s24
    %p309 = scmp.lt.s32.totalorder %s24, 6
    %p310 = pnand %p308, %p309
    %p311 = pneg %p310
    // Predicated region
    $region9: #{fcos_core_forward.1} parent=5 // pred_check
      _
    $region10: #{fcos_core_forward.1} parent=5 // pred_check_branch
      %313 = sbr.rel (%p310) target = $region12
    $region11: #{fcos_core_forward.1} parent=5 // pred_region
      %s314 = ssub.s32 %s24, 1
    $region12: #{fcos_core_forward.1} parent=5 // pred_fallthru
      _
    %p315 = scmp.lt.s32.totalorder %s24, 5
    // Predicated region
    $region13: #{fcos_core_forward.1} parent=5 // pred_check
      %p316 = pneg %p315
    $region14: #{fcos_core_forward.1} parent=5 // pred_check_branch
      %318 = sbr.rel (%p316) target = $region16
    $region15: #{fcos_core_forward.1} parent=5 // pred_region
      // Predicated region
      $region17: #{fcos_core_forward.1} parent=15 // pred_check
        %p319 = pneg %p44
      $region18: #{fcos_core_forward.1} parent=15 // pred_check_branch
        %321 = sbr.rel (%p319) target = $region20
      $region19: #{fcos_core_forward.1} parent=15 // pred_region
        %s322 = smul.u32 64, %s24
        %p323 = scmp.lt.s32.totalorder %s322, 319
        %s324 = scalar_select %p323, %s322, 319
        %s325 = smul.addr %s324, 4
        %s326 = scalar_lea.vmem %s1, %s325
        %s327 = smul.u32 64, %s24
      $region20: #{fcos_core_forward.1} parent=15 // pred_fallthru
        _
      // Predicated region
      $region21: #{fcos_core_forward.1} parent=15 // pred_check
        %p328 = pneg %p72
      $region22: #{fcos_core_forward.1} parent=15 // pred_check_branch
        %330 = sbr.rel (%p328) target = $region24
      $region23: #{fcos_core_forward.1} parent=15 // pred_region
        %s331 = sld [smem:[#allocation3 + %s24]]
        %p332 = scmp.lt.s32.totalorder %s331, 4
        %s333 = scalar_select %p332, %s331, 4
        %s334 = smul.addr %s333, 16
        %s335 = smul.addr %s334, 4
        %s336 = scalar_lea.vmem %s2, %s335
        %s337 = sld [smem:[#allocation3 + %s24]]
      $region24: #{fcos_core_forward.1} parent=15 // pred_fallthru
        _
      // Predicated region
      $region25: #{fcos_core_forward.1} parent=15 // pred_check
        %p338 = pneg %p100
      $region26: #{fcos_core_forward.1} parent=15 // pred_check_branch
        %340 = sbr.rel (%p338) target = $region28
      $region27: #{fcos_core_forward.1} parent=15 // pred_region
        %s341 = sld [smem:[#allocation3 + %s24]]
        %p342 = scmp.lt.s32.totalorder %s341, 4
        %s343 = scalar_select %p342, %s341, 4
        %s344 = scalar_lea.vmem %s3, %s343
        %s345 = sld [smem:[#allocation3 + %s24]]
      $region28: #{fcos_core_forward.1} parent=15 // pred_fallthru
        _
      // Predicated region
      $region29: #{fcos_core_forward.1} parent=15 // pred_check
        %p346 = pneg %p128
      $region30: #{fcos_core_forward.1} parent=15 // pred_check_branch
        %348 = sbr.rel (%p346) target = $region32
      $region31: #{fcos_core_forward.1} parent=15 // pred_region
        %s349 = sld [smem:[#allocation3 + %s24]]
        %p350 = scmp.lt.s32.totalorder %s349, 4
        %s351 = scalar_select %p350, %s349, 4
        %s352 = smul.addr %s351, 32
        %s353 = smul.addr %s352, 4
        %s354 = scalar_lea.vmem %s4, %s353
        %s355 = sld [smem:[#allocation3 + %s24]]
      $region32: #{fcos_core_forward.1} parent=15 // pred_fallthru
        _
      // Predicated region
      $region33: #{fcos_core_forward.1} parent=15 // pred_check
        %p356 = pneg %p156
      $region34: #{fcos_core_forward.1} parent=15 // pred_check_branch
        %358 = sbr.rel (%p356) target = $region36
      $region35: #{fcos_core_forward.1} parent=15 // pred_region
        %s359 = sld [smem:[#allocation3 + %s24]]
        %p360 = scmp.lt.s32.totalorder %s359, 4
        %s361 = scalar_select %p360, %s359, 4
        %s362 = smul.addr %s361, 2
        %s363 = scalar_lea.vmem %s5, %s362
        %s364 = sld [smem:[#allocation3 + %s24]]
      $region36: #{fcos_core_forward.1} parent=15 // pred_fallthru
        _
      // Predicated region
      $region37: #{fcos_core_forward.1} parent=15 // pred_check
        %p365 = pneg %p184
      $region38: #{fcos_core_forward.1} parent=15 // pred_check_branch
        %367 = sbr.rel (%p365) target = $region40
      $region39: #{fcos_core_forward.1} parent=15 // pred_region
        %s368 = sld [smem:[#allocation3 + %s24]]
        %p369 = scmp.lt.s32.totalorder %s368, 4
        %s370 = scalar_select %p369, %s368, 4
        %s371 = smul.addr %s370, 32
        %s372 = smul.addr %s371, 4
        %s373 = scalar_lea.vmem %s6, %s372
        %s374 = sld [smem:[#allocation3 + %s24]]
      $region40: #{fcos_core_forward.1} parent=15 // pred_fallthru
        _
      // Predicated region
      $region41: #{fcos_core_forward.1} parent=15 // pred_check
        %p375 = pneg %p212
      $region42: #{fcos_core_forward.1} parent=15 // pred_check_branch
        %377 = sbr.rel (%p375) target = $region44
      $region43: #{fcos_core_forward.1} parent=15 // pred_region
        %s378 = sld [smem:[#allocation3 + %s24]]
        %p379 = scmp.lt.s32.totalorder %s378, 4
        %s380 = scalar_select %p379, %s378, 4
        %s381 = smul.addr %s380, 2
        %s382 = scalar_lea.vmem %s7, %s381
        %s383 = sld [smem:[#allocation3 + %s24]]
      $region44: #{fcos_core_forward.1} parent=15 // pred_fallthru
        _
      // Predicated region
      $region45: #{fcos_core_forward.1} parent=15 // pred_check
        %p384 = pneg %p240
      $region46: #{fcos_core_forward.1} parent=15 // pred_check_branch
        %386 = sbr.rel (%p384) target = $region48
      $region47: #{fcos_core_forward.1} parent=15 // pred_region
        %s387 = sld [smem:[#allocation3 + %s24]]
        %p388 = scmp.lt.s32.totalorder %s387, 4
        %s389 = scalar_select %p388, %s387, 4
        %s390 = smul.addr %s389, 32
        %s391 = smul.addr %s390, 4
        %s392 = scalar_lea.vmem %s8, %s391
        %s393 = sld [smem:[#allocation3 + %s24]]
      $region48: #{fcos_core_forward.1} parent=15 // pred_fallthru
        _
      // Predicated region
      $region49: #{fcos_core_forward.1} parent=15 // pred_check
        %p394 = pneg %p268
      $region50: #{fcos_core_forward.1} parent=15 // pred_check_branch
        %396 = sbr.rel (%p394) target = $region52
      $region51: #{fcos_core_forward.1} parent=15 // pred_region
        %s397 = sld [smem:[#allocation3 + %s24]]
        %p398 = scmp.lt.s32.totalorder %s397, 4
        %s399 = scalar_select %p398, %s397, 4
        %s400 = scalar_lea.vmem %s9, %s399
        %s401 = sld [smem:[#allocation3 + %s24]]
      $region52: #{fcos_core_forward.1} parent=15 // pred_fallthru
        _
    $region16: #{fcos_core_forward.1} parent=5 // pred_fallthru
      _
    %p402 = scmp.le.s32.totalorder 1, %s24
    %p403 = scmp.lt.s32.totalorder %s24, 6
    %p404 = pnand %p402, %p403
    %p405 = pneg %p404
    // Predicated region
    $region53: #{fcos_core_forward.1} parent=5 // pred_check
      _
    $region54: #{fcos_core_forward.1} parent=5 // pred_check_branch
      %407 = sbr.rel (%p404) target = $region56
    $region55: #{fcos_core_forward.1} parent=5 // pred_region
      %s408 = ssub.s32 %s24, 1
      %s409 = smul.u32 64, %s29
      %p410 = scmp.lt.s32.totalorder %s409, 319
      %s411 = scalar_select %p410, %s409, 319
      %s412 = smul.addr %s411, 4
      %s413 = scalar_lea.vmem %s1, %s412
      %p414 = pneg %p50
      %p415 = pneg %p47
      %s416 = sld [smem:[#allocation3 + %s29]]
      %p417 = scmp.lt.s32.totalorder %s416, 4
      %s418 = scalar_select %p417, %s416, 4
      %s419 = smul.addr %s418, 16
      %s420 = smul.addr %s419, 4
      %s421 = scalar_lea.vmem %s2, %s420
      %p422 = pneg %p78
      %p423 = pneg %p75
      %s424 = sld [smem:[#allocation3 + %s29]]
      %p425 = scmp.lt.s32.totalorder %s424, 4
      %s426 = scalar_select %p425, %s424, 4
      %s427 = scalar_lea.vmem %s3, %s426
      %p428 = pneg %p106
      %p429 = pneg %p103
      %s430 = sld [smem:[#allocation3 + %s29]]
      %p431 = scmp.lt.s32.totalorder %s430, 4
      %s432 = scalar_select %p431, %s430, 4
      %s433 = smul.addr %s432, 32
      %s434 = smul.addr %s433, 4
      %s435 = scalar_lea.vmem %s4, %s434
      %p436 = pneg %p134
      %p437 = pneg %p131
      %s438 = sld [smem:[#allocation3 + %s29]]
      %p439 = scmp.lt.s32.totalorder %s438, 4
      %s440 = scalar_select %p439, %s438, 4
      %s441 = smul.addr %s440, 2
      %s442 = scalar_lea.vmem %s5, %s441
      %p443 = pneg %p162
      %p444 = pneg %p159
      %s445 = sld [smem:[#allocation3 + %s29]]
      %p446 = scmp.lt.s32.totalorder %s445, 4
      %s447 = scalar_select %p446, %s445, 4
      %s448 = smul.addr %s447, 32
      %s449 = smul.addr %s448, 4
      %s450 = scalar_lea.vmem %s6, %s449
      %p451 = pneg %p190
      %p452 = pneg %p187
      %s453 = sld [smem:[#allocation3 + %s29]]
      %p454 = scmp.lt.s32.totalorder %s453, 4
      %s455 = scalar_select %p454, %s453, 4
      %s456 = smul.addr %s455, 2
      %s457 = scalar_lea.vmem %s7, %s456
      %p458 = pneg %p218
      %p459 = pneg %p215
      %s460 = sld [smem:[#allocation3 + %s29]]
      %p461 = scmp.lt.s32.totalorder %s460, 4
      %s462 = scalar_select %p461, %s460, 4
      %s463 = smul.addr %s462, 32
      %s464 = smul.addr %s463, 4
      %s465 = scalar_lea.vmem %s8, %s464
      %p466 = pneg %p246
      %p467 = pneg %p243
      %s468 = sld [smem:[#allocation3 + %s29]]
      %p469 = scmp.lt.s32.totalorder %s468, 4
      %s470 = scalar_select %p469, %s468, 4
      %s471 = scalar_lea.vmem %s9, %s470
      %p472 = pneg %p274
      %p473 = pneg %p271
      %p474 = pneg %p300
      %p475 = pneg %p297
      %s476 = smul.u32 64, %s29
      %p477 = scmp.lt.s32.totalorder %s476, 319
      %s478 = scalar_select %p477, %s476, 319
      %s479 = smul.addr %s478, 4
      %s480 = scalar_lea.vmem %s10, %s479
      %s481 = smul.u32 64, %s29
      %p482 = scmp.lt.s32.totalorder %s481, 319
      %s483 = scalar_select %p482, %s481, 319
      %s484 = smul.addr %s483, 4
      %s485 = scalar_lea.vmem %s1, %s484
      %s486 = smul.u32 64, %s29
      %s487 = sld [smem:[#allocation3 + %s29]]
      %p488 = scmp.lt.s32.totalorder %s487, 4
      %s489 = scalar_select %p488, %s487, 4
      %s490 = smul.addr %s489, 16
      %s491 = smul.addr %s490, 4
      %s492 = scalar_lea.vmem %s2, %s491
      %s493 = sld [smem:[#allocation3 + %s29]]
      %s494 = sld [smem:[#allocation3 + %s29]]
      %p495 = scmp.lt.s32.totalorder %s494, 4
      %s496 = scalar_select %p495, %s494, 4
      %s497 = scalar_lea.vmem %s3, %s496
      %s498 = sld [smem:[#allocation3 + %s29]]
      %s499 = sld [smem:[#allocation3 + %s29]]
      %p500 = scmp.lt.s32.totalorder %s499, 4
      %s501 = scalar_select %p500, %s499, 4
      %s502 = smul.addr %s501, 32
      %s503 = smul.addr %s502, 4
      %s504 = scalar_lea.vmem %s4, %s503
      %s505 = sld [smem:[#allocation3 + %s29]]
      %s506 = sld [smem:[#allocation3 + %s29]]
      %p507 = scmp.lt.s32.totalorder %s506, 4
      %s508 = scalar_select %p507, %s506, 4
      %s509 = smul.addr %s508, 2
      %s510 = scalar_lea.vmem %s5, %s509
      %s511 = sld [smem:[#allocation3 + %s29]]
      %s512 = sld [smem:[#allocation3 + %s29]]
      %p513 = scmp.lt.s32.totalorder %s512, 4
      %s514 = scalar_select %p513, %s512, 4
      %s515 = smul.addr %s514, 32
      %s516 = smul.addr %s515, 4
      %s517 = scalar_lea.vmem %s6, %s516
      %s518 = sld [smem:[#allocation3 + %s29]]
      %s519 = sld [smem:[#allocation3 + %s29]]
      %p520 = scmp.lt.s32.totalorder %s519, 4
      %s521 = scalar_select %p520, %s519, 4
      %s522 = smul.addr %s521, 2
      %s523 = scalar_lea.vmem %s7, %s522
      %s524 = sld [smem:[#allocation3 + %s29]]
      %s525 = sld [smem:[#allocation3 + %s29]]
      %p526 = scmp.lt.s32.totalorder %s525, 4
      %s527 = scalar_select %p526, %s525, 4
      %s528 = smul.addr %s527, 32
      %s529 = smul.addr %s528, 4
      %s530 = scalar_lea.vmem %s8, %s529
      %s531 = sld [smem:[#allocation3 + %s29]]
      %s532 = sld [smem:[#allocation3 + %s29]]
      %p533 = scmp.lt.s32.totalorder %s532, 4
      %s534 = scalar_select %p533, %s532, 4
      %s535 = scalar_lea.vmem %s9, %s534
      %s536 = sld [smem:[#allocation3 + %s29]]
      %s537 = smul.u32 64, %s29
      %p538 = scmp.lt.s32.totalorder %s537, 319
      %s539 = scalar_select %p538, %s537, 319
      %s540 = smul.addr %s539, 4
      %s541 = scalar_lea.vmem %s10, %s540
      %s542 = smul.u32 64, %s29
      %v543 = vld [vmem:[%s485] sm:$0xf]
      %v544 = vld [vmem:[%s485 + $0x4] sm:$0xf]
      %v545 = vld [vmem:[%s485 + $0x8] sm:$0xf]
      %v546 = vld [vmem:[%s485 + $0xc] sm:$0xf]
      %v547 = vld [vmem:[%s485 + $0x10] sm:$0xf]
      %v548 = vld [vmem:[%s485 + $0x14] sm:$0xf]
      %v549 = vld [vmem:[%s485 + $0x18] sm:$0xf]
      %v550 = vld [vmem:[%s485 + $0x1c] sm:$0xf]
      %v551 = vld [vmem:[%s485 + $0x20] sm:$0xf]
      %v552 = vld [vmem:[%s485 + $0x24] sm:$0xf]
      %v553 = vld [vmem:[%s485 + $0x28] sm:$0xf]
      %v554 = vld [vmem:[%s485 + $0x2c] sm:$0xf]
      %v555 = vld [vmem:[%s485 + $0x30] sm:$0xf]
      %v556 = vld [vmem:[%s485 + $0x34] sm:$0xf]
      %v557 = vld [vmem:[%s485 + $0x38] sm:$0xf]
      %v558 = vld [vmem:[%s485 + $0x3c] sm:$0xf]
      %v559 = vld [vmem:[%s485 + $0x40] sm:$0xf]
      %v560 = vld [vmem:[%s485 + $0x44] sm:$0xf]
      %v561 = vld [vmem:[%s485 + $0x48] sm:$0xf]
      %v562 = vld [vmem:[%s485 + $0x4c] sm:$0xf]
      %v563 = vld [vmem:[%s485 + $0x50] sm:$0xf]
      %v564 = vld [vmem:[%s485 + $0x54] sm:$0xf]
      %v565 = vld [vmem:[%s485 + $0x58] sm:$0xf]
      %v566 = vld [vmem:[%s485 + $0x5c] sm:$0xf]
      %v567 = vld [vmem:[%s485 + $0x60] sm:$0xf]
      %v568 = vld [vmem:[%s485 + $0x64] sm:$0xf]
      %v569 = vld [vmem:[%s485 + $0x68] sm:$0xf]
      %v570 = vld [vmem:[%s485 + $0x6c] sm:$0xf]
      %v571 = vld [vmem:[%s485 + $0x70] sm:$0xf]
      %v572 = vld [vmem:[%s485 + $0x74] sm:$0xf]
      %v573 = vld [vmem:[%s485 + $0x78] sm:$0xf]
      %v574 = vld [vmem:[%s485 + $0x7c] sm:$0xf]
      %v575 = vld [vmem:[%s485 + $0x80] sm:$0xf]
      %v576 = vld [vmem:[%s485 + $0x84] sm:$0xf]
      %v577 = vld [vmem:[%s485 + $0x88] sm:$0xf]
      %v578 = vld [vmem:[%s485 + $0x8c] sm:$0xf]
      %v579 = vld [vmem:[%s485 + $0x90] sm:$0xf]
      %v580 = vld [vmem:[%s485 + $0x94] sm:$0xf]
      %v581 = vld [vmem:[%s485 + $0x98] sm:$0xf]
      %v582 = vld [vmem:[%s485 + $0x9c] sm:$0xf]
      %v583 = vld [vmem:[%s485 + $0xa0] sm:$0xf]
      %v584 = vld [vmem:[%s485 + $0xa4] sm:$0xf]
      %v585 = vld [vmem:[%s485 + $0xa8] sm:$0xf]
      %v586 = vld [vmem:[%s485 + $0xac] sm:$0xf]
      %v587 = vld [vmem:[%s485 + $0xb0] sm:$0xf]
      %v588 = vld [vmem:[%s485 + $0xb4] sm:$0xf]
      %v589 = vld [vmem:[%s485 + $0xb8] sm:$0xf]
      %v590 = vld [vmem:[%s485 + $0xbc] sm:$0xf]
      %v591 = vld [vmem:[%s485 + $0xc0] sm:$0xf]
      %v592 = vld [vmem:[%s485 + $0xc4] sm:$0xf]
      %v593 = vld [vmem:[%s485 + $0xc8] sm:$0xf]
      %v594 = vld [vmem:[%s485 + $0xcc] sm:$0xf]
      %v595 = vld [vmem:[%s485 + $0xd0] sm:$0xf]
      %v596 = vld [vmem:[%s485 + $0xd4] sm:$0xf]
      %v597 = vld [vmem:[%s485 + $0xd8] sm:$0xf]
      %v598 = vld [vmem:[%s485 + $0xdc] sm:$0xf]
      %v599 = vld [vmem:[%s485 + $0xe0] sm:$0xf]
      %v600 = vld [vmem:[%s485 + $0xe4] sm:$0xf]
      %v601 = vld [vmem:[%s485 + $0xe8] sm:$0xf]
      %v602 = vld [vmem:[%s485 + $0xec] sm:$0xf]
      %v603 = vld [vmem:[%s485 + $0xf0] sm:$0xf]
      %v604 = vld [vmem:[%s485 + $0xf4] sm:$0xf]
      %v605 = vld [vmem:[%s485 + $0xf8] sm:$0xf]
      %v606 = vld [vmem:[%s485 + $0xfc] sm:$0xf]
      %v607 = vld [vmem:[%s492] sm:$0xf]
      %v608 = vld [vmem:[%s492 + $0x4] sm:$0xf]
      %v609 = vld [vmem:[%s492 + $0x8] sm:$0xf]
      %v610 = vld [vmem:[%s492 + $0xc] sm:$0xf]
      %v611 = vld [vmem:[%s492 + $0x10] sm:$0xf]
      %v612 = vld [vmem:[%s492 + $0x14] sm:$0xf]
      %v613 = vld [vmem:[%s492 + $0x18] sm:$0xf]
      %v614 = vld [vmem:[%s492 + $0x1c] sm:$0xf]
      %v615 = vld [vmem:[%s492 + $0x20] sm:$0xf]
      %v616 = vld [vmem:[%s492 + $0x24] sm:$0xf]
      %v617 = vld [vmem:[%s492 + $0x28] sm:$0xf]
      %v618 = vld [vmem:[%s492 + $0x2c] sm:$0xf]
      %v619 = vld [vmem:[%s492 + $0x30] sm:$0xf]
      %v620 = vld [vmem:[%s492 + $0x34] sm:$0xf]
      %v621 = vld [vmem:[%s492 + $0x38] sm:$0xf]
      %v622 = vld [vmem:[%s492 + $0x3c] sm:$0xf]
      %v623 = vld [vmem:[%s497] sm:$0x1]
      %v625 = vperm.slane %v623, 0
      %v691 = vunpack.c.l.b16 %v543
      %v692 = vunpack.c.l.b16 %v544
      %v693 = vunpack.c.l.b16 %v545
      %v694 = vunpack.c.l.b16 %v546
      %v695 = vunpack.c.l.b16 %v547
      %v696 = vunpack.c.l.b16 %v548
      %v697 = vunpack.c.l.b16 %v549
      %v698 = vunpack.c.l.b16 %v550
      %v699 = vunpack.c.l.b16 %v551
      %v700 = vunpack.c.l.b16 %v552
      %v701 = vunpack.c.l.b16 %v553
      %v702 = vunpack.c.l.b16 %v554
      %v703 = vunpack.c.l.b16 %v555
      %v704 = vunpack.c.l.b16 %v556
      %v705 = vunpack.c.l.b16 %v557
      %v706 = vunpack.c.l.b16 %v558
      %v707 = vunpack.c.l.b16 %v559
      %v708 = vunpack.c.l.b16 %v560
      %v709 = vunpack.c.l.b16 %v561
      %v710 = vunpack.c.l.b16 %v562
      %v711 = vunpack.c.l.b16 %v563
      %v712 = vunpack.c.l.b16 %v564
      %v713 = vunpack.c.l.b16 %v565
      %v714 = vunpack.c.l.b16 %v566
      %v715 = vunpack.c.l.b16 %v567
      %v716 = vunpack.c.l.b16 %v568
      %v717 = vunpack.c.l.b16 %v569
      %v718 = vunpack.c.l.b16 %v570
      %v719 = vunpack.c.l.b16 %v571
      %v720 = vunpack.c.l.b16 %v572
      %v721 = vunpack.c.l.b16 %v573
      %v722 = vunpack.c.l.b16 %v574
      %v723 = vunpack.c.l.b16 %v575
      %v724 = vunpack.c.l.b16 %v576
      %v725 = vunpack.c.l.b16 %v577
      %v726 = vunpack.c.l.b16 %v578
      %v727 = vunpack.c.l.b16 %v579
      %v728 = vunpack.c.l.b16 %v580
      %v729 = vunpack.c.l.b16 %v581
      %v730 = vunpack.c.l.b16 %v582
      %v731 = vunpack.c.l.b16 %v583
      %v732 = vunpack.c.l.b16 %v584
      %v733 = vunpack.c.l.b16 %v585
      %v734 = vunpack.c.l.b16 %v586
      %v735 = vunpack.c.l.b16 %v587
      %v736 = vunpack.c.l.b16 %v588
      %v737 = vunpack.c.l.b16 %v589
      %v738 = vunpack.c.l.b16 %v590
      %v739 = vunpack.c.l.b16 %v591
      %v740 = vunpack.c.l.b16 %v592
      %v741 = vunpack.c.l.b16 %v593
      %v742 = vunpack.c.l.b16 %v594
      %v743 = vunpack.c.l.b16 %v595
      %v744 = vunpack.c.l.b16 %v596
      %v745 = vunpack.c.l.b16 %v597
      %v746 = vunpack.c.l.b16 %v598
      %v747 = vunpack.c.l.b16 %v599
      %v748 = vunpack.c.l.b16 %v600
      %v749 = vunpack.c.l.b16 %v601
      %v750 = vunpack.c.l.b16 %v602
      %v751 = vunpack.c.l.b16 %v603
      %v752 = vunpack.c.l.b16 %v604
      %v753 = vunpack.c.l.b16 %v605
      %v754 = vunpack.c.l.b16 %v606
      %v755 = vpack.c.b16 %v692, %v691
      %v756 = vpack.c.b16 %v694, %v693
      %v757 = vpack.c.b16 %v696, %v695
      %v758 = vpack.c.b16 %v698, %v697
      %v759 = vpack.c.b16 %v700, %v699
      %v760 = vpack.c.b16 %v702, %v701
      %v761 = vpack.c.b16 %v704, %v703
      %v762 = vpack.c.b16 %v706, %v705
      %v763 = vpack.c.b16 %v708, %v707
      %v764 = vpack.c.b16 %v710, %v709
      %v765 = vpack.c.b16 %v712, %v711
      %v766 = vpack.c.b16 %v714, %v713
      %v767 = vpack.c.b16 %v716, %v715
      %v768 = vpack.c.b16 %v718, %v717
      %v769 = vpack.c.b16 %v720, %v719
      %v770 = vpack.c.b16 %v722, %v721
      %v771 = vpack.c.b16 %v724, %v723
      %v772 = vpack.c.b16 %v726, %v725
      %v773 = vpack.c.b16 %v728, %v727
      %v774 = vpack.c.b16 %v730, %v729
      %v775 = vpack.c.b16 %v732, %v731
      %v776 = vpack.c.b16 %v734, %v733
      %v777 = vpack.c.b16 %v736, %v735
      %v778 = vpack.c.b16 %v738, %v737
      %v779 = vpack.c.b16 %v740, %v739
      %v780 = vpack.c.b16 %v742, %v741
      %v781 = vpack.c.b16 %v744, %v743
      %v782 = vpack.c.b16 %v746, %v745
      %v783 = vpack.c.b16 %v748, %v747
      %v784 = vpack.c.b16 %v750, %v749
      %v785 = vpack.c.b16 %v752, %v751
      %v786 = vpack.c.b16 %v754, %v753
      %v835 = vunpack.c.l.b16 %v607
      %v836 = vunpack.c.l.b16 %v608
      %v837 = vunpack.c.l.b16 %v609
      %v838 = vunpack.c.l.b16 %v610
      %v839 = vunpack.c.l.b16 %v611
      %v840 = vunpack.c.l.b16 %v612
      %v841 = vunpack.c.l.b16 %v613
      %v842 = vunpack.c.l.b16 %v614
      %v843 = vunpack.c.l.b16 %v615
      %v844 = vunpack.c.l.b16 %v616
      %v845 = vunpack.c.l.b16 %v617
      %v846 = vunpack.c.l.b16 %v618
      %v847 = vunpack.c.l.b16 %v619
      %v848 = vunpack.c.l.b16 %v620
      %v849 = vunpack.c.l.b16 %v621
      %v850 = vunpack.c.l.b16 %v622
      %v851 = vpack.c.b16 %v836, %v835
      %v852 = vpack.c.b16 %v838, %v837
      %v853 = vpack.c.b16 %v840, %v839
      %v854 = vpack.c.b16 %v842, %v841
      %v855 = vpack.c.b16 %v844, %v843
      %v856 = vpack.c.b16 %v846, %v845
      %v857 = vpack.c.b16 %v848, %v847
      %v858 = vpack.c.b16 %v850, %v849
      %867 = vmatpush.bf16.msra.mxu0 %v858
      %868 = vmatpush.bf16.msra.mxu0 %v857
      %869 = vmatpush.bf16.msra.mxu0 %v856
      %870 = vmatpush.bf16.msra.mxu0 %v855
      %871 = vmatpush.bf16.msra.mxu0 %v854
      %872 = vmatpush.bf16.msra.mxu0 %v853
      %873 = vmatpush.bf16.msra.mxu0 %v852
      %874 = vmatpush.bf16.msra.mxu0 %v851
      %875 = vmatmul.bf16.gmra.mxu0 %v755
      %v876 = vpop.f32.mrf.mxu0
      %v877 = vadd.f32 %v625, %v876
      %v878 = vpop.f32.mrf.mxu0
      %v879 = vadd.f32 %v625, %v878
      %880 = vmatmul.bf16.gmra.mxu0 %v756
      %v881 = vpop.f32.mrf.mxu0
      %v882 = vadd.f32 %v625, %v881
      %v883 = vpop.f32.mrf.mxu0
      %v884 = vadd.f32 %v625, %v883
      %885 = vmatmul.bf16.gmra.mxu0 %v757
      %v886 = vpop.f32.mrf.mxu0
      %v887 = vadd.f32 %v625, %v886
      %v888 = vpop.f32.mrf.mxu0
      %v889 = vadd.f32 %v625, %v888
      %890 = vmatmul.bf16.gmra.mxu0 %v758
      %v891 = vpop.f32.mrf.mxu0
      %v892 = vadd.f32 %v625, %v891
      %v893 = vpop.f32.mrf.mxu0
      %v894 = vadd.f32 %v625, %v893
      %895 = vmatmul.bf16.gmra.mxu0 %v759
      %v896 = vpop.f32.mrf.mxu0
      %v897 = vadd.f32 %v625, %v896
      %v898 = vpop.f32.mrf.mxu0
      %v899 = vadd.f32 %v625, %v898
      %900 = vmatmul.bf16.gmra.mxu0 %v760
      %v901 = vpop.f32.mrf.mxu0
      %v902 = vadd.f32 %v625, %v901
      %v903 = vpop.f32.mrf.mxu0
      %v904 = vadd.f32 %v625, %v903
      %905 = vmatmul.bf16.gmra.mxu0 %v761
      %v906 = vpop.f32.mrf.mxu0
      %v907 = vadd.f32 %v625, %v906
      %v908 = vpop.f32.mrf.mxu0
      %v909 = vadd.f32 %v625, %v908
      %910 = vmatmul.bf16.gmra.mxu0 %v762
      %v911 = vpop.f32.mrf.mxu0
      %v912 = vadd.f32 %v625, %v911
      %v913 = vpop.f32.mrf.mxu0
      %v914 = vadd.f32 %v625, %v913
      %915 = vmatmul.bf16.gmra.mxu0 %v763
      %v916 = vpop.f32.mrf.mxu0
      %v917 = vadd.f32 %v625, %v916
      %v918 = vpop.f32.mrf.mxu0
      %v919 = vadd.f32 %v625, %v918
      %920 = vmatmul.bf16.gmra.mxu0 %v764
      %v921 = vpop.f32.mrf.mxu0
      %v922 = vadd.f32 %v625, %v921
      %v923 = vpop.f32.mrf.mxu0
      %v924 = vadd.f32 %v625, %v923
      %925 = vmatmul.bf16.gmra.mxu0 %v765
      %v926 = vpop.f32.mrf.mxu0
      %v927 = vadd.f32 %v625, %v926
      %v928 = vpop.f32.mrf.mxu0
      %v929 = vadd.f32 %v625, %v928
      %930 = vmatmul.bf16.gmra.mxu0 %v766
      %v931 = vpop.f32.mrf.mxu0
      %v932 = vadd.f32 %v625, %v931
      %v933 = vpop.f32.mrf.mxu0
      %v934 = vadd.f32 %v625, %v933
      %935 = vmatmul.bf16.gmra.mxu0 %v767
      %v936 = vpop.f32.mrf.mxu0
      %v937 = vadd.f32 %v625, %v936
      %v938 = vpop.f32.mrf.mxu0
      %v939 = vadd.f32 %v625, %v938
      %940 = vmatmul.bf16.gmra.mxu0 %v768
      %v941 = vpop.f32.mrf.mxu0
      %v942 = vadd.f32 %v625, %v941
      %v943 = vpop.f32.mrf.mxu0
      %v944 = vadd.f32 %v625, %v943
      %945 = vmatmul.bf16.gmra.mxu0 %v769
      %v946 = vpop.f32.mrf.mxu0
      %v947 = vadd.f32 %v625, %v946
      %v948 = vpop.f32.mrf.mxu0
      %v949 = vadd.f32 %v625, %v948
      %950 = vmatmul.bf16.gmra.mxu0 %v770
      %v951 = vpop.f32.mrf.mxu0
      %v952 = vadd.f32 %v625, %v951
      %v953 = vpop.f32.mrf.mxu0
      %v954 = vadd.f32 %v625, %v953
      %955 = vmatmul.bf16.gmra.mxu0 %v771
      %v956 = vpop.f32.mrf.mxu0
      %v957 = vadd.f32 %v625, %v956
      %v958 = vpop.f32.mrf.mxu0
      %v959 = vadd.f32 %v625, %v958
      %960 = vmatmul.bf16.gmra.mxu0 %v772
      %v961 = vpop.f32.mrf.mxu0
      %v962 = vadd.f32 %v625, %v961
      %v963 = vpop.f32.mrf.mxu0
      %v964 = vadd.f32 %v625, %v963
      %965 = vmatmul.bf16.gmra.mxu0 %v773
      %v966 = vpop.f32.mrf.mxu0
      %v967 = vadd.f32 %v625, %v966
      %v968 = vpop.f32.mrf.mxu0
      %v969 = vadd.f32 %v625, %v968
      %970 = vmatmul.bf16.gmra.mxu0 %v774
      %v971 = vpop.f32.mrf.mxu0
      %v972 = vadd.f32 %v625, %v971
      %v973 = vpop.f32.mrf.mxu0
      %v974 = vadd.f32 %v625, %v973
      %975 = vmatmul.bf16.gmra.mxu0 %v775
      %v976 = vpop.f32.mrf.mxu0
      %v977 = vadd.f32 %v625, %v976
      %v978 = vpop.f32.mrf.mxu0
      %v979 = vadd.f32 %v625, %v978
      %980 = vmatmul.bf16.gmra.mxu0 %v776
      %v981 = vpop.f32.mrf.mxu0
      %v982 = vadd.f32 %v625, %v981
      %v983 = vpop.f32.mrf.mxu0
      %v984 = vadd.f32 %v625, %v983
      %985 = vmatmul.bf16.gmra.mxu0 %v777
      %v986 = vpop.f32.mrf.mxu0
      %v987 = vadd.f32 %v625, %v986
      %v988 = vpop.f32.mrf.mxu0
      %v989 = vadd.f32 %v625, %v988
      %990 = vmatmul.bf16.gmra.mxu0 %v778
      %v991 = vpop.f32.mrf.mxu0
      %v992 = vadd.f32 %v625, %v991
      %v993 = vpop.f32.mrf.mxu0
      %v994 = vadd.f32 %v625, %v993
      %995 = vmatmul.bf16.gmra.mxu0 %v779
      %v996 = vpop.f32.mrf.mxu0
      %v997 = vadd.f32 %v625, %v996
      %v998 = vpop.f32.mrf.mxu0
      %v999 = vadd.f32 %v625, %v998
      %1000 = vmatmul.bf16.gmra.mxu0 %v780
      %v1001 = vpop.f32.mrf.mxu0
      %v1002 = vadd.f32 %v625, %v1001
      %v1003 = vpop.f32.mrf.mxu0
      %v1004 = vadd.f32 %v625, %v1003
      %1005 = vmatmul.bf16.gmra.mxu0 %v781
      %v1006 = vpop.f32.mrf.mxu0
      %v1007 = vadd.f32 %v625, %v1006
      %v1008 = vpop.f32.mrf.mxu0
      %v1009 = vadd.f32 %v625, %v1008
      %1010 = vmatmul.bf16.gmra.mxu0 %v782
      %v1011 = vpop.f32.mrf.mxu0
      %v1012 = vadd.f32 %v625, %v1011
      %v1013 = vpop.f32.mrf.mxu0
      %v1014 = vadd.f32 %v625, %v1013
      %1015 = vmatmul.bf16.gmra.mxu0 %v783
      %v1016 = vpop.f32.mrf.mxu0
      %v1017 = vadd.f32 %v625, %v1016
      %v1018 = vpop.f32.mrf.mxu0
      %v1019 = vadd.f32 %v625, %v1018
      %1020 = vmatmul.bf16.gmra.mxu0 %v784
      %v1021 = vpop.f32.mrf.mxu0
      %v1022 = vadd.f32 %v625, %v1021
      %v1023 = vpop.f32.mrf.mxu0
      %v1024 = vadd.f32 %v625, %v1023
      %1025 = vmatmul.bf16.gmra.mxu0 %v785
      %v1026 = vpop.f32.mrf.mxu0
      %v1027 = vadd.f32 %v625, %v1026
      %v1028 = vpop.f32.mrf.mxu0
      %v1029 = vadd.f32 %v625, %v1028
      %1030 = vmatmul.bf16.gmra.mxu0 %v786
      %v1031 = vpop.f32.mrf.mxu0
      %v1032 = vadd.f32 %v625, %v1031
      %v1033 = vpop.f32.mrf.mxu0
      %v1034 = vadd.f32 %v625, %v1033
      %1035 = vdwg.mxu0
      %v1036 = vmax.f32 %v877, 0.0
      %v1037 = vmax.f32 %v879, 0.0
      %v1038 = vmax.f32 %v882, 0.0
      %v1039 = vmax.f32 %v884, 0.0
      %v1040 = vmax.f32 %v887, 0.0
      %v1041 = vmax.f32 %v889, 0.0
      %v1042 = vmax.f32 %v892, 0.0
      %v1043 = vmax.f32 %v894, 0.0
      %v1044 = vmax.f32 %v897, 0.0
      %v1045 = vmax.f32 %v899, 0.0
      %v1046 = vmax.f32 %v902, 0.0
      %v1047 = vmax.f32 %v904, 0.0
      %v1048 = vmax.f32 %v907, 0.0
      %v1049 = vmax.f32 %v909, 0.0
      %v1050 = vmax.f32 %v912, 0.0
      %v1051 = vmax.f32 %v914, 0.0
      %v1052 = vmax.f32 %v917, 0.0
      %v1053 = vmax.f32 %v919, 0.0
      %v1054 = vmax.f32 %v922, 0.0
      %v1055 = vmax.f32 %v924, 0.0
      %v1056 = vmax.f32 %v927, 0.0
      %v1057 = vmax.f32 %v929, 0.0
      %v1058 = vmax.f32 %v932, 0.0
      %v1059 = vmax.f32 %v934, 0.0
      %v1060 = vmax.f32 %v937, 0.0
      %v1061 = vmax.f32 %v939, 0.0
      %v1062 = vmax.f32 %v942, 0.0
      %v1063 = vmax.f32 %v944, 0.0
      %v1064 = vmax.f32 %v947, 0.0
      %v1065 = vmax.f32 %v949, 0.0
      %v1066 = vmax.f32 %v952, 0.0
      %v1067 = vmax.f32 %v954, 0.0
      %v1068 = vmax.f32 %v957, 0.0
      %v1069 = vmax.f32 %v959, 0.0
      %v1070 = vmax.f32 %v962, 0.0
      %v1071 = vmax.f32 %v964, 0.0
      %v1072 = vmax.f32 %v967, 0.0
      %v1073 = vmax.f32 %v969, 0.0
      %v1074 = vmax.f32 %v972, 0.0
      %v1075 = vmax.f32 %v974, 0.0
      %v1076 = vmax.f32 %v977, 0.0
      %v1077 = vmax.f32 %v979, 0.0
      %v1078 = vmax.f32 %v982, 0.0
      %v1079 = vmax.f32 %v984, 0.0
      %v1080 = vmax.f32 %v987, 0.0
      %v1081 = vmax.f32 %v989, 0.0
      %v1082 = vmax.f32 %v992, 0.0
      %v1083 = vmax.f32 %v994, 0.0
      %v1084 = vmax.f32 %v997, 0.0
      %v1085 = vmax.f32 %v999, 0.0
      %v1086 = vmax.f32 %v1002, 0.0
      %v1087 = vmax.f32 %v1004, 0.0
      %v1088 = vmax.f32 %v1007, 0.0
      %v1089 = vmax.f32 %v1009, 0.0
      %v1090 = vmax.f32 %v1012, 0.0
      %v1091 = vmax.f32 %v1014, 0.0
      %v1092 = vmax.f32 %v1017, 0.0
      %v1093 = vmax.f32 %v1019, 0.0
      %v1094 = vmax.f32 %v1022, 0.0
      %v1095 = vmax.f32 %v1024, 0.0
      %v1096 = vmax.f32 %v1027, 0.0
      %v1097 = vmax.f32 %v1029, 0.0
      %v1098 = vmax.f32 %v1032, 0.0
      %v1099 = vmax.f32 %v1034, 0.0
      %v1100 = vpack.c.bf16 %v1037, %v1036
      %v1101 = vpack.c.bf16 %v1039, %v1038
      %v1102 = vpack.c.bf16 %v1041, %v1040
      %v1103 = vpack.c.bf16 %v1043, %v1042
      %v1104 = vpack.c.bf16 %v1045, %v1044
      %v1105 = vpack.c.bf16 %v1047, %v1046
      %v1106 = vpack.c.bf16 %v1049, %v1048
      %v1107 = vpack.c.bf16 %v1051, %v1050
      %v1108 = vpack.c.bf16 %v1053, %v1052
      %v1109 = vpack.c.bf16 %v1055, %v1054
      %v1110 = vpack.c.bf16 %v1057, %v1056
      %v1111 = vpack.c.bf16 %v1059, %v1058
      %v1112 = vpack.c.bf16 %v1061, %v1060
      %v1113 = vpack.c.bf16 %v1063, %v1062
      %v1114 = vpack.c.bf16 %v1065, %v1064
      %v1115 = vpack.c.bf16 %v1067, %v1066
      %v1116 = vpack.c.bf16 %v1069, %v1068
      %v1117 = vpack.c.bf16 %v1071, %v1070
      %v1118 = vpack.c.bf16 %v1073, %v1072
      %v1119 = vpack.c.bf16 %v1075, %v1074
      %v1120 = vpack.c.bf16 %v1077, %v1076
      %v1121 = vpack.c.bf16 %v1079, %v1078
      %v1122 = vpack.c.bf16 %v1081, %v1080
      %v1123 = vpack.c.bf16 %v1083, %v1082
      %v1124 = vpack.c.bf16 %v1085, %v1084
      %v1125 = vpack.c.bf16 %v1087, %v1086
      %v1126 = vpack.c.bf16 %v1089, %v1088
      %v1127 = vpack.c.bf16 %v1091, %v1090
      %v1128 = vpack.c.bf16 %v1093, %v1092
      %v1129 = vpack.c.bf16 %v1095, %v1094
      %v1130 = vpack.c.bf16 %v1097, %v1096
      %v1131 = vpack.c.bf16 %v1099, %v1098
      %v1132 = vld [vmem:[%s504] sm:$0xff]
      %v1133 = vld [vmem:[%s504 + $0x8] sm:$0xff]
      %v1134 = vld [vmem:[%s504 + $0x10] sm:$0xff]
      %v1135 = vld [vmem:[%s504 + $0x18] sm:$0xff]
      %v1136 = vld [vmem:[%s504 + $0x20] sm:$0xff]
      %v1137 = vld [vmem:[%s504 + $0x28] sm:$0xff]
      %v1138 = vld [vmem:[%s504 + $0x30] sm:$0xff]
      %v1139 = vld [vmem:[%s504 + $0x38] sm:$0xff]
      %v1140 = vld [vmem:[%s504 + $0x40] sm:$0xff]
      %v1141 = vld [vmem:[%s504 + $0x48] sm:$0xff]
      %v1142 = vld [vmem:[%s504 + $0x50] sm:$0xff]
      %v1143 = vld [vmem:[%s504 + $0x58] sm:$0xff]
      %v1144 = vld [vmem:[%s504 + $0x60] sm:$0xff]
      %v1145 = vld [vmem:[%s504 + $0x68] sm:$0xff]
      %v1146 = vld [vmem:[%s504 + $0x70] sm:$0xff]
      %v1147 = vld [vmem:[%s504 + $0x78] sm:$0xff]
      %v1148 = vld [vmem:[%s510] sm:$0x3]
      %v1150 = vperm.slane %v1148, 0
      %v1151 = vperm.slane %v1148, 1
      %v1170 = vunpack.c.l.b16 %v1132
      %v1171 = vunpack.c.h.b16 %v1132
      %v1172 = vunpack.c.l.b16 %v1133
      %v1173 = vunpack.c.h.b16 %v1133
      %v1174 = vunpack.c.l.b16 %v1134
      %v1175 = vunpack.c.h.b16 %v1134
      %v1176 = vunpack.c.l.b16 %v1135
      %v1177 = vunpack.c.h.b16 %v1135
      %v1178 = vunpack.c.l.b16 %v1136
      %v1179 = vunpack.c.h.b16 %v1136
      %v1180 = vunpack.c.l.b16 %v1137
      %v1181 = vunpack.c.h.b16 %v1137
      %v1182 = vunpack.c.l.b16 %v1138
      %v1183 = vunpack.c.h.b16 %v1138
      %v1184 = vunpack.c.l.b16 %v1139
      %v1185 = vunpack.c.h.b16 %v1139
      %v1186 = vunpack.c.l.b16 %v1140
      %v1187 = vunpack.c.h.b16 %v1140
      %v1188 = vunpack.c.l.b16 %v1141
      %v1189 = vunpack.c.h.b16 %v1141
      %v1190 = vunpack.c.l.b16 %v1142
      %v1191 = vunpack.c.h.b16 %v1142
      %v1192 = vunpack.c.l.b16 %v1143
      %v1193 = vunpack.c.h.b16 %v1143
      %v1194 = vunpack.c.l.b16 %v1144
      %v1195 = vunpack.c.h.b16 %v1144
      %v1196 = vunpack.c.l.b16 %v1145
      %v1197 = vunpack.c.h.b16 %v1145
      %v1198 = vunpack.c.l.b16 %v1146
      %v1199 = vunpack.c.h.b16 %v1146
      %v1200 = vunpack.c.l.b16 %v1147
      %v1201 = vunpack.c.h.b16 %v1147
      %v1202 = vpack.c.b16 %v1172, %v1170
      %v1203 = vpack.c.b16 %v1173, %v1171
      %v1204 = vpack.c.b16 %v1176, %v1174
      %v1205 = vpack.c.b16 %v1177, %v1175
      %v1206 = vpack.c.b16 %v1180, %v1178
      %v1207 = vpack.c.b16 %v1181, %v1179
      %v1208 = vpack.c.b16 %v1184, %v1182
      %v1209 = vpack.c.b16 %v1185, %v1183
      %v1210 = vpack.c.b16 %v1188, %v1186
      %v1211 = vpack.c.b16 %v1189, %v1187
      %v1212 = vpack.c.b16 %v1192, %v1190
      %v1213 = vpack.c.b16 %v1193, %v1191
      %v1214 = vpack.c.b16 %v1196, %v1194
      %v1215 = vpack.c.b16 %v1197, %v1195
      %v1216 = vpack.c.b16 %v1200, %v1198
      %v1217 = vpack.c.b16 %v1201, %v1199
      %1234 = vmatpush.bf16.msra.mxu0 %v1216
      %1235 = vmatpush.bf16.msra.mxu0 %v1214
      %1236 = vmatpush.bf16.msra.mxu0 %v1212
      %1237 = vmatpush.bf16.msra.mxu0 %v1210
      %1238 = vmatpush.bf16.msra.mxu0 %v1208
      %1239 = vmatpush.bf16.msra.mxu0 %v1206
      %1240 = vmatpush.bf16.msra.mxu0 %v1204
      %1241 = vmatpush.bf16.msra.mxu0 %v1202
      %1242 = vmatmul.bf16.gmra.mxu0 %v1100
      %v1243 = vpop.f32.mrf.mxu0
      %v1244 = vadd.f32 %v1150, %v1243
      %v1245 = vpop.f32.mrf.mxu0
      %v1246 = vadd.f32 %v1150, %v1245
      %1247 = vmatmul.bf16.gmra.mxu0 %v1101
      %v1248 = vpop.f32.mrf.mxu0
      %v1249 = vadd.f32 %v1150, %v1248
      %v1250 = vpop.f32.mrf.mxu0
      %v1251 = vadd.f32 %v1150, %v1250
      %1252 = vmatmul.bf16.gmra.mxu0 %v1102
      %v1253 = vpop.f32.mrf.mxu0
      %v1254 = vadd.f32 %v1150, %v1253
      %v1255 = vpop.f32.mrf.mxu0
      %v1256 = vadd.f32 %v1150, %v1255
      %1257 = vmatmul.bf16.gmra.mxu0 %v1103
      %v1258 = vpop.f32.mrf.mxu0
      %v1259 = vadd.f32 %v1150, %v1258
      %v1260 = vpop.f32.mrf.mxu0
      %v1261 = vadd.f32 %v1150, %v1260
      %1262 = vmatmul.bf16.gmra.mxu0 %v1104
      %v1263 = vpop.f32.mrf.mxu0
      %v1264 = vadd.f32 %v1150, %v1263
      %v1265 = vpop.f32.mrf.mxu0
      %v1266 = vadd.f32 %v1150, %v1265
      %1267 = vmatmul.bf16.gmra.mxu0 %v1105
      %v1268 = vpop.f32.mrf.mxu0
      %v1269 = vadd.f32 %v1150, %v1268
      %v1270 = vpop.f32.mrf.mxu0
      %v1271 = vadd.f32 %v1150, %v1270
      %1272 = vmatmul.bf16.gmra.mxu0 %v1106
      %v1273 = vpop.f32.mrf.mxu0
      %v1274 = vadd.f32 %v1150, %v1273
      %v1275 = vpop.f32.mrf.mxu0
      %v1276 = vadd.f32 %v1150, %v1275
      %1277 = vmatmul.bf16.gmra.mxu0 %v1107
      %v1278 = vpop.f32.mrf.mxu0
      %v1279 = vadd.f32 %v1150, %v1278
      %v1280 = vpop.f32.mrf.mxu0
      %v1281 = vadd.f32 %v1150, %v1280
      %1282 = vmatmul.bf16.gmra.mxu0 %v1108
      %v1283 = vpop.f32.mrf.mxu0
      %v1284 = vadd.f32 %v1150, %v1283
      %v1285 = vpop.f32.mrf.mxu0
      %v1286 = vadd.f32 %v1150, %v1285
      %1287 = vmatmul.bf16.gmra.mxu0 %v1109
      %v1288 = vpop.f32.mrf.mxu0
      %v1289 = vadd.f32 %v1150, %v1288
      %v1290 = vpop.f32.mrf.mxu0
      %v1291 = vadd.f32 %v1150, %v1290
      %1292 = vmatmul.bf16.gmra.mxu0 %v1110
      %v1293 = vpop.f32.mrf.mxu0
      %v1294 = vadd.f32 %v1150, %v1293
      %v1295 = vpop.f32.mrf.mxu0
      %v1296 = vadd.f32 %v1150, %v1295
      %1297 = vmatmul.bf16.gmra.mxu0 %v1111
      %v1298 = vpop.f32.mrf.mxu0
      %v1299 = vadd.f32 %v1150, %v1298
      %v1300 = vpop.f32.mrf.mxu0
      %v1301 = vadd.f32 %v1150, %v1300
      %1302 = vmatmul.bf16.gmra.mxu0 %v1112
      %v1303 = vpop.f32.mrf.mxu0
      %v1304 = vadd.f32 %v1150, %v1303
      %v1305 = vpop.f32.mrf.mxu0
      %v1306 = vadd.f32 %v1150, %v1305
      %1307 = vmatmul.bf16.gmra.mxu0 %v1113
      %v1308 = vpop.f32.mrf.mxu0
      %v1309 = vadd.f32 %v1150, %v1308
      %v1310 = vpop.f32.mrf.mxu0
      %v1311 = vadd.f32 %v1150, %v1310
      %1312 = vmatmul.bf16.gmra.mxu0 %v1114
      %v1313 = vpop.f32.mrf.mxu0
      %v1314 = vadd.f32 %v1150, %v1313
      %v1315 = vpop.f32.mrf.mxu0
      %v1316 = vadd.f32 %v1150, %v1315
      %1317 = vmatmul.bf16.gmra.mxu0 %v1115
      %v1318 = vpop.f32.mrf.mxu0
      %v1319 = vadd.f32 %v1150, %v1318
      %v1320 = vpop.f32.mrf.mxu0
      %v1321 = vadd.f32 %v1150, %v1320
      %1322 = vmatmul.bf16.gmra.mxu0 %v1116
      %v1323 = vpop.f32.mrf.mxu0
      %v1324 = vadd.f32 %v1150, %v1323
      %v1325 = vpop.f32.mrf.mxu0
      %v1326 = vadd.f32 %v1150, %v1325
      %1327 = vmatmul.bf16.gmra.mxu0 %v1117
      %v1328 = vpop.f32.mrf.mxu0
      %v1329 = vadd.f32 %v1150, %v1328
      %v1330 = vpop.f32.mrf.mxu0
      %v1331 = vadd.f32 %v1150, %v1330
      %1332 = vmatmul.bf16.gmra.mxu0 %v1118
      %v1333 = vpop.f32.mrf.mxu0
      %v1334 = vadd.f32 %v1150, %v1333
      %v1335 = vpop.f32.mrf.mxu0
      %v1336 = vadd.f32 %v1150, %v1335
      %1337 = vmatmul.bf16.gmra.mxu0 %v1119
      %v1338 = vpop.f32.mrf.mxu0
      %v1339 = vadd.f32 %v1150, %v1338
      %v1340 = vpop.f32.mrf.mxu0
      %v1341 = vadd.f32 %v1150, %v1340
      %1342 = vmatmul.bf16.gmra.mxu0 %v1120
      %v1343 = vpop.f32.mrf.mxu0
      %v1344 = vadd.f32 %v1150, %v1343
      %v1345 = vpop.f32.mrf.mxu0
      %v1346 = vadd.f32 %v1150, %v1345
      %1347 = vmatmul.bf16.gmra.mxu0 %v1121
      %v1348 = vpop.f32.mrf.mxu0
      %v1349 = vadd.f32 %v1150, %v1348
      %v1350 = vpop.f32.mrf.mxu0
      %v1351 = vadd.f32 %v1150, %v1350
      %1352 = vmatmul.bf16.gmra.mxu0 %v1122
      %v1353 = vpop.f32.mrf.mxu0
      %v1354 = vadd.f32 %v1150, %v1353
      %v1355 = vpop.f32.mrf.mxu0
      %v1356 = vadd.f32 %v1150, %v1355
      %1357 = vmatmul.bf16.gmra.mxu0 %v1123
      %v1358 = vpop.f32.mrf.mxu0
      %v1359 = vadd.f32 %v1150, %v1358
      %v1360 = vpop.f32.mrf.mxu0
      %v1361 = vadd.f32 %v1150, %v1360
      %1362 = vmatmul.bf16.gmra.mxu0 %v1124
      %v1363 = vpop.f32.mrf.mxu0
      %v1364 = vadd.f32 %v1150, %v1363
      %v1365 = vpop.f32.mrf.mxu0
      %v1366 = vadd.f32 %v1150, %v1365
      %1367 = vmatmul.bf16.gmra.mxu0 %v1125
      %v1368 = vpop.f32.mrf.mxu0
      %v1369 = vadd.f32 %v1150, %v1368
      %v1370 = vpop.f32.mrf.mxu0
      %v1371 = vadd.f32 %v1150, %v1370
      %1372 = vmatmul.bf16.gmra.mxu0 %v1126
      %v1373 = vpop.f32.mrf.mxu0
      %v1374 = vadd.f32 %v1150, %v1373
      %v1375 = vpop.f32.mrf.mxu0
      %v1376 = vadd.f32 %v1150, %v1375
      %1377 = vmatmul.bf16.gmra.mxu0 %v1127
      %v1378 = vpop.f32.mrf.mxu0
      %v1379 = vadd.f32 %v1150, %v1378
      %v1380 = vpop.f32.mrf.mxu0
      %v1381 = vadd.f32 %v1150, %v1380
      %1382 = vmatmul.bf16.gmra.mxu0 %v1128
      %v1383 = vpop.f32.mrf.mxu0
      %v1384 = vadd.f32 %v1150, %v1383
      %v1385 = vpop.f32.mrf.mxu0
      %v1386 = vadd.f32 %v1150, %v1385
      %1387 = vmatmul.bf16.gmra.mxu0 %v1129
      %v1388 = vpop.f32.mrf.mxu0
      %v1389 = vadd.f32 %v1150, %v1388
      %v1390 = vpop.f32.mrf.mxu0
      %v1391 = vadd.f32 %v1150, %v1390
      %1392 = vmatmul.bf16.gmra.mxu0 %v1130
      %v1393 = vpop.f32.mrf.mxu0
      %v1394 = vadd.f32 %v1150, %v1393
      %v1395 = vpop.f32.mrf.mxu0
      %v1396 = vadd.f32 %v1150, %v1395
      %1397 = vmatmul.bf16.gmra.mxu0 %v1131
      %v1398 = vpop.f32.mrf.mxu0
      %v1399 = vadd.f32 %v1150, %v1398
      %v1400 = vpop.f32.mrf.mxu0
      %v1401 = vadd.f32 %v1150, %v1400
      %1402 = vdwg.mxu0
      %1403 = vmatpush.bf16.msra.mxu0 %v1217
      %1404 = vmatpush.bf16.msra.mxu0 %v1215
      %1405 = vmatpush.bf16.msra.mxu0 %v1213
      %1406 = vmatpush.bf16.msra.mxu0 %v1211
      %1407 = vmatpush.bf16.msra.mxu0 %v1209
      %1408 = vmatpush.bf16.msra.mxu0 %v1207
      %1409 = vmatpush.bf16.msra.mxu0 %v1205
      %1410 = vmatpush.bf16.msra.mxu0 %v1203
      %1411 = vmatmul.bf16.gmra.mxu0 %v1100
      %v1412 = vpop.f32.mrf.mxu0
      %v1413 = vadd.f32 %v1151, %v1412
      %v1414 = vpop.f32.mrf.mxu0
      %v1415 = vadd.f32 %v1151, %v1414
      %1416 = vmatmul.bf16.gmra.mxu0 %v1101
      %v1417 = vpop.f32.mrf.mxu0
      %v1418 = vadd.f32 %v1151, %v1417
      %v1419 = vpop.f32.mrf.mxu0
      %v1420 = vadd.f32 %v1151, %v1419
      %1421 = vmatmul.bf16.gmra.mxu0 %v1102
      %v1422 = vpop.f32.mrf.mxu0
      %v1423 = vadd.f32 %v1151, %v1422
      %v1424 = vpop.f32.mrf.mxu0
      %v1425 = vadd.f32 %v1151, %v1424
      %1426 = vmatmul.bf16.gmra.mxu0 %v1103
      %v1427 = vpop.f32.mrf.mxu0
      %v1428 = vadd.f32 %v1151, %v1427
      %v1429 = vpop.f32.mrf.mxu0
      %v1430 = vadd.f32 %v1151, %v1429
      %1431 = vmatmul.bf16.gmra.mxu0 %v1104
      %v1432 = vpop.f32.mrf.mxu0
      %v1433 = vadd.f32 %v1151, %v1432
      %v1434 = vpop.f32.mrf.mxu0
      %v1435 = vadd.f32 %v1151, %v1434
      %1436 = vmatmul.bf16.gmra.mxu0 %v1105
      %v1437 = vpop.f32.mrf.mxu0
      %v1438 = vadd.f32 %v1151, %v1437
      %v1439 = vpop.f32.mrf.mxu0
      %v1440 = vadd.f32 %v1151, %v1439
      %1441 = vmatmul.bf16.gmra.mxu0 %v1106
      %v1442 = vpop.f32.mrf.mxu0
      %v1443 = vadd.f32 %v1151, %v1442
      %v1444 = vpop.f32.mrf.mxu0
      %v1445 = vadd.f32 %v1151, %v1444
      %1446 = vmatmul.bf16.gmra.mxu0 %v1107
      %v1447 = vpop.f32.mrf.mxu0
      %v1448 = vadd.f32 %v1151, %v1447
      %v1449 = vpop.f32.mrf.mxu0
      %v1450 = vadd.f32 %v1151, %v1449
      %1451 = vmatmul.bf16.gmra.mxu0 %v1108
      %v1452 = vpop.f32.mrf.mxu0
      %v1453 = vadd.f32 %v1151, %v1452
      %v1454 = vpop.f32.mrf.mxu0
      %v1455 = vadd.f32 %v1151, %v1454
      %1456 = vmatmul.bf16.gmra.mxu0 %v1109
      %v1457 = vpop.f32.mrf.mxu0
      %v1458 = vadd.f32 %v1151, %v1457
      %v1459 = vpop.f32.mrf.mxu0
      %v1460 = vadd.f32 %v1151, %v1459
      %1461 = vmatmul.bf16.gmra.mxu0 %v1110
      %v1462 = vpop.f32.mrf.mxu0
      %v1463 = vadd.f32 %v1151, %v1462
      %v1464 = vpop.f32.mrf.mxu0
      %v1465 = vadd.f32 %v1151, %v1464
      %1466 = vmatmul.bf16.gmra.mxu0 %v1111
      %v1467 = vpop.f32.mrf.mxu0
      %v1468 = vadd.f32 %v1151, %v1467
      %v1469 = vpop.f32.mrf.mxu0
      %v1470 = vadd.f32 %v1151, %v1469
      %1471 = vmatmul.bf16.gmra.mxu0 %v1112
      %v1472 = vpop.f32.mrf.mxu0
      %v1473 = vadd.f32 %v1151, %v1472
      %v1474 = vpop.f32.mrf.mxu0
      %v1475 = vadd.f32 %v1151, %v1474
      %1476 = vmatmul.bf16.gmra.mxu0 %v1113
      %v1477 = vpop.f32.mrf.mxu0
      %v1478 = vadd.f32 %v1151, %v1477
      %v1479 = vpop.f32.mrf.mxu0
      %v1480 = vadd.f32 %v1151, %v1479
      %1481 = vmatmul.bf16.gmra.mxu0 %v1114
      %v1482 = vpop.f32.mrf.mxu0
      %v1483 = vadd.f32 %v1151, %v1482
      %v1484 = vpop.f32.mrf.mxu0
      %v1485 = vadd.f32 %v1151, %v1484
      %1486 = vmatmul.bf16.gmra.mxu0 %v1115
      %v1487 = vpop.f32.mrf.mxu0
      %v1488 = vadd.f32 %v1151, %v1487
      %v1489 = vpop.f32.mrf.mxu0
      %v1490 = vadd.f32 %v1151, %v1489
      %1491 = vmatmul.bf16.gmra.mxu0 %v1116
      %v1492 = vpop.f32.mrf.mxu0
      %v1493 = vadd.f32 %v1151, %v1492
      %v1494 = vpop.f32.mrf.mxu0
      %v1495 = vadd.f32 %v1151, %v1494
      %1496 = vmatmul.bf16.gmra.mxu0 %v1117
      %v1497 = vpop.f32.mrf.mxu0
      %v1498 = vadd.f32 %v1151, %v1497
      %v1499 = vpop.f32.mrf.mxu0
      %v1500 = vadd.f32 %v1151, %v1499
      %1501 = vmatmul.bf16.gmra.mxu0 %v1118
      %v1502 = vpop.f32.mrf.mxu0
      %v1503 = vadd.f32 %v1151, %v1502
      %v1504 = vpop.f32.mrf.mxu0
      %v1505 = vadd.f32 %v1151, %v1504
      %1506 = vmatmul.bf16.gmra.mxu0 %v1119
      %v1507 = vpop.f32.mrf.mxu0
      %v1508 = vadd.f32 %v1151, %v1507
      %v1509 = vpop.f32.mrf.mxu0
      %v1510 = vadd.f32 %v1151, %v1509
      %1511 = vmatmul.bf16.gmra.mxu0 %v1120
      %v1512 = vpop.f32.mrf.mxu0
      %v1513 = vadd.f32 %v1151, %v1512
      %v1514 = vpop.f32.mrf.mxu0
      %v1515 = vadd.f32 %v1151, %v1514
      %1516 = vmatmul.bf16.gmra.mxu0 %v1121
      %v1517 = vpop.f32.mrf.mxu0
      %v1518 = vadd.f32 %v1151, %v1517
      %v1519 = vpop.f32.mrf.mxu0
      %v1520 = vadd.f32 %v1151, %v1519
      %1521 = vmatmul.bf16.gmra.mxu0 %v1122
      %v1522 = vpop.f32.mrf.mxu0
      %v1523 = vadd.f32 %v1151, %v1522
      %v1524 = vpop.f32.mrf.mxu0
      %v1525 = vadd.f32 %v1151, %v1524
      %1526 = vmatmul.bf16.gmra.mxu0 %v1123
      %v1527 = vpop.f32.mrf.mxu0
      %v1528 = vadd.f32 %v1151, %v1527
      %v1529 = vpop.f32.mrf.mxu0
      %v1530 = vadd.f32 %v1151, %v1529
      %1531 = vmatmul.bf16.gmra.mxu0 %v1124
      %v1532 = vpop.f32.mrf.mxu0
      %v1533 = vadd.f32 %v1151, %v1532
      %v1534 = vpop.f32.mrf.mxu0
      %v1535 = vadd.f32 %v1151, %v1534
      %1536 = vmatmul.bf16.gmra.mxu0 %v1125
      %v1537 = vpop.f32.mrf.mxu0
      %v1538 = vadd.f32 %v1151, %v1537
      %v1539 = vpop.f32.mrf.mxu0
      %v1540 = vadd.f32 %v1151, %v1539
      %1541 = vmatmul.bf16.gmra.mxu0 %v1126
      %v1542 = vpop.f32.mrf.mxu0
      %v1543 = vadd.f32 %v1151, %v1542
      %v1544 = vpop.f32.mrf.mxu0
      %v1545 = vadd.f32 %v1151, %v1544
      %1546 = vmatmul.bf16.gmra.mxu0 %v1127
      %v1547 = vpop.f32.mrf.mxu0
      %v1548 = vadd.f32 %v1151, %v1547
      %v1549 = vpop.f32.mrf.mxu0
      %v1550 = vadd.f32 %v1151, %v1549
      %1551 = vmatmul.bf16.gmra.mxu0 %v1128
      %v1552 = vpop.f32.mrf.mxu0
      %v1553 = vadd.f32 %v1151, %v1552
      %v1554 = vpop.f32.mrf.mxu0
      %v1555 = vadd.f32 %v1151, %v1554
      %1556 = vmatmul.bf16.gmra.mxu0 %v1129
      %v1557 = vpop.f32.mrf.mxu0
      %v1558 = vadd.f32 %v1151, %v1557
      %v1559 = vpop.f32.mrf.mxu0
      %v1560 = vadd.f32 %v1151, %v1559
      %1561 = vmatmul.bf16.gmra.mxu0 %v1130
      %v1562 = vpop.f32.mrf.mxu0
      %v1563 = vadd.f32 %v1151, %v1562
      %v1564 = vpop.f32.mrf.mxu0
      %v1565 = vadd.f32 %v1151, %v1564
      %1566 = vmatmul.bf16.gmra.mxu0 %v1131
      %v1567 = vpop.f32.mrf.mxu0
      %v1568 = vadd.f32 %v1151, %v1567
      %v1569 = vpop.f32.mrf.mxu0
      %v1570 = vadd.f32 %v1151, %v1569
      %1571 = vdwg.mxu0
      %v1572 = vmax.f32 %v1244, 0.0
      %v1573 = vmax.f32 %v1413, 0.0
      %v1574 = vmax.f32 %v1246, 0.0
      %v1575 = vmax.f32 %v1415, 0.0
      %v1576 = vmax.f32 %v1249, 0.0
      %v1577 = vmax.f32 %v1418, 0.0
      %v1578 = vmax.f32 %v1251, 0.0
      %v1579 = vmax.f32 %v1420, 0.0
      %v1580 = vmax.f32 %v1254, 0.0
      %v1581 = vmax.f32 %v1423, 0.0
      %v1582 = vmax.f32 %v1256, 0.0
      %v1583 = vmax.f32 %v1425, 0.0
      %v1584 = vmax.f32 %v1259, 0.0
      %v1585 = vmax.f32 %v1428, 0.0
      %v1586 = vmax.f32 %v1261, 0.0
      %v1587 = vmax.f32 %v1430, 0.0
      %v1588 = vmax.f32 %v1264, 0.0
      %v1589 = vmax.f32 %v1433, 0.0
      %v1590 = vmax.f32 %v1266, 0.0
      %v1591 = vmax.f32 %v1435, 0.0
      %v1592 = vmax.f32 %v1269, 0.0
      %v1593 = vmax.f32 %v1438, 0.0
      %v1594 = vmax.f32 %v1271, 0.0
      %v1595 = vmax.f32 %v1440, 0.0
      %v1596 = vmax.f32 %v1274, 0.0
      %v1597 = vmax.f32 %v1443, 0.0
      %v1598 = vmax.f32 %v1276, 0.0
      %v1599 = vmax.f32 %v1445, 0.0
      %v1600 = vmax.f32 %v1279, 0.0
      %v1601 = vmax.f32 %v1448, 0.0
      %v1602 = vmax.f32 %v1281, 0.0
      %v1603 = vmax.f32 %v1450, 0.0
      %v1604 = vmax.f32 %v1284, 0.0
      %v1605 = vmax.f32 %v1453, 0.0
      %v1606 = vmax.f32 %v1286, 0.0
      %v1607 = vmax.f32 %v1455, 0.0
      %v1608 = vmax.f32 %v1289, 0.0
      %v1609 = vmax.f32 %v1458, 0.0
      %v1610 = vmax.f32 %v1291, 0.0
      %v1611 = vmax.f32 %v1460, 0.0
      %v1612 = vmax.f32 %v1294, 0.0
      %v1613 = vmax.f32 %v1463, 0.0
      %v1614 = vmax.f32 %v1296, 0.0
      %v1615 = vmax.f32 %v1465, 0.0
      %v1616 = vmax.f32 %v1299, 0.0
      %v1617 = vmax.f32 %v1468, 0.0
      %v1618 = vmax.f32 %v1301, 0.0
      %v1619 = vmax.f32 %v1470, 0.0
      %v1620 = vmax.f32 %v1304, 0.0
      %v1621 = vmax.f32 %v1473, 0.0
      %v1622 = vmax.f32 %v1306, 0.0
      %v1623 = vmax.f32 %v1475, 0.0
      %v1624 = vmax.f32 %v1309, 0.0
      %v1625 = vmax.f32 %v1478, 0.0
      %v1626 = vmax.f32 %v1311, 0.0
      %v1627 = vmax.f32 %v1480, 0.0
      %v1628 = vmax.f32 %v1314, 0.0
      %v1629 = vmax.f32 %v1483, 0.0
      %v1630 = vmax.f32 %v1316, 0.0
      %v1631 = vmax.f32 %v1485, 0.0
      %v1632 = vmax.f32 %v1319, 0.0
      %v1633 = vmax.f32 %v1488, 0.0
      %v1634 = vmax.f32 %v1321, 0.0
      %v1635 = vmax.f32 %v1490, 0.0
      %v1636 = vmax.f32 %v1324, 0.0
      %v1637 = vmax.f32 %v1493, 0.0
      %v1638 = vmax.f32 %v1326, 0.0
      %v1639 = vmax.f32 %v1495, 0.0
      %v1640 = vmax.f32 %v1329, 0.0
      %v1641 = vmax.f32 %v1498, 0.0
      %v1642 = vmax.f32 %v1331, 0.0
      %v1643 = vmax.f32 %v1500, 0.0
      %v1644 = vmax.f32 %v1334, 0.0
      %v1645 = vmax.f32 %v1503, 0.0
      %v1646 = vmax.f32 %v1336, 0.0
      %v1647 = vmax.f32 %v1505, 0.0
      %v1648 = vmax.f32 %v1339, 0.0
      %v1649 = vmax.f32 %v1508, 0.0
      %v1650 = vmax.f32 %v1341, 0.0
      %v1651 = vmax.f32 %v1510, 0.0
      %v1652 = vmax.f32 %v1344, 0.0
      %v1653 = vmax.f32 %v1513, 0.0
      %v1654 = vmax.f32 %v1346, 0.0
      %v1655 = vmax.f32 %v1515, 0.0
      %v1656 = vmax.f32 %v1349, 0.0
      %v1657 = vmax.f32 %v1518, 0.0
      %v1658 = vmax.f32 %v1351, 0.0
      %v1659 = vmax.f32 %v1520, 0.0
      %v1660 = vmax.f32 %v1354, 0.0
      %v1661 = vmax.f32 %v1523, 0.0
      %v1662 = vmax.f32 %v1356, 0.0
      %v1663 = vmax.f32 %v1525, 0.0
      %v1664 = vmax.f32 %v1359, 0.0
      %v1665 = vmax.f32 %v1528, 0.0
      %v1666 = vmax.f32 %v1361, 0.0
      %v1667 = vmax.f32 %v1530, 0.0
      %v1668 = vmax.f32 %v1364, 0.0
      %v1669 = vmax.f32 %v1533, 0.0
      %v1670 = vmax.f32 %v1366, 0.0
      %v1671 = vmax.f32 %v1535, 0.0
      %v1672 = vmax.f32 %v1369, 0.0
      %v1673 = vmax.f32 %v1538, 0.0
      %v1674 = vmax.f32 %v1371, 0.0
      %v1675 = vmax.f32 %v1540, 0.0
      %v1676 = vmax.f32 %v1374, 0.0
      %v1677 = vmax.f32 %v1543, 0.0
      %v1678 = vmax.f32 %v1376, 0.0
      %v1679 = vmax.f32 %v1545, 0.0
      %v1680 = vmax.f32 %v1379, 0.0
      %v1681 = vmax.f32 %v1548, 0.0
      %v1682 = vmax.f32 %v1381, 0.0
      %v1683 = vmax.f32 %v1550, 0.0
      %v1684 = vmax.f32 %v1384, 0.0
      %v1685 = vmax.f32 %v1553, 0.0
      %v1686 = vmax.f32 %v1386, 0.0
      %v1687 = vmax.f32 %v1555, 0.0
      %v1688 = vmax.f32 %v1389, 0.0
      %v1689 = vmax.f32 %v1558, 0.0
      %v1690 = vmax.f32 %v1391, 0.0
      %v1691 = vmax.f32 %v1560, 0.0
      %v1692 = vmax.f32 %v1394, 0.0
      %v1693 = vmax.f32 %v1563, 0.0
      %v1694 = vmax.f32 %v1396, 0.0
      %v1695 = vmax.f32 %v1565, 0.0
      %v1696 = vmax.f32 %v1399, 0.0
      %v1697 = vmax.f32 %v1568, 0.0
      %v1698 = vmax.f32 %v1401, 0.0
      %v1699 = vmax.f32 %v1570, 0.0
      %v1700 = vpack.c.bf16 %v1574, %v1572
      %v1701 = vpack.c.bf16 %v1578, %v1576
      %v1702 = vpack.c.bf16 %v1582, %v1580
      %v1703 = vpack.c.bf16 %v1586, %v1584
      %v1704 = vpack.c.bf16 %v1590, %v1588
      %v1705 = vpack.c.bf16 %v1594, %v1592
      %v1706 = vpack.c.bf16 %v1598, %v1596
      %v1707 = vpack.c.bf16 %v1602, %v1600
      %v1708 = vpack.c.bf16 %v1606, %v1604
      %v1709 = vpack.c.bf16 %v1610, %v1608
      %v1710 = vpack.c.bf16 %v1614, %v1612
      %v1711 = vpack.c.bf16 %v1618, %v1616
      %v1712 = vpack.c.bf16 %v1622, %v1620
      %v1713 = vpack.c.bf16 %v1626, %v1624
      %v1714 = vpack.c.bf16 %v1630, %v1628
      %v1715 = vpack.c.bf16 %v1634, %v1632
      %v1716 = vpack.c.bf16 %v1638, %v1636
      %v1717 = vpack.c.bf16 %v1642, %v1640
      %v1718 = vpack.c.bf16 %v1646, %v1644
      %v1719 = vpack.c.bf16 %v1650, %v1648
      %v1720 = vpack.c.bf16 %v1654, %v1652
      %v1721 = vpack.c.bf16 %v1658, %v1656
      %v1722 = vpack.c.bf16 %v1662, %v1660
      %v1723 = vpack.c.bf16 %v1666, %v1664
      %v1724 = vpack.c.bf16 %v1670, %v1668
      %v1725 = vpack.c.bf16 %v1674, %v1672
      %v1726 = vpack.c.bf16 %v1678, %v1676
      %v1727 = vpack.c.bf16 %v1682, %v1680
      %v1728 = vpack.c.bf16 %v1686, %v1684
      %v1729 = vpack.c.bf16 %v1690, %v1688
      %v1730 = vpack.c.bf16 %v1694, %v1692
      %v1731 = vpack.c.bf16 %v1698, %v1696
      %v1732 = vpack.c.bf16 %v1575, %v1573
      %v1733 = vpack.c.bf16 %v1579, %v1577
      %v1734 = vpack.c.bf16 %v1583, %v1581
      %v1735 = vpack.c.bf16 %v1587, %v1585
      %v1736 = vpack.c.bf16 %v1591, %v1589
      %v1737 = vpack.c.bf16 %v1595, %v1593
      %v1738 = vpack.c.bf16 %v1599, %v1597
      %v1739 = vpack.c.bf16 %v1603, %v1601
      %v1740 = vpack.c.bf16 %v1607, %v1605
      %v1741 = vpack.c.bf16 %v1611, %v1609
      %v1742 = vpack.c.bf16 %v1615, %v1613
      %v1743 = vpack.c.bf16 %v1619, %v1617
      %v1744 = vpack.c.bf16 %v1623, %v1621
      %v1745 = vpack.c.bf16 %v1627, %v1625
      %v1746 = vpack.c.bf16 %v1631, %v1629
      %v1747 = vpack.c.bf16 %v1635, %v1633
      %v1748 = vpack.c.bf16 %v1639, %v1637
      %v1749 = vpack.c.bf16 %v1643, %v1641
      %v1750 = vpack.c.bf16 %v1647, %v1645
      %v1751 = vpack.c.bf16 %v1651, %v1649
      %v1752 = vpack.c.bf16 %v1655, %v1653
      %v1753 = vpack.c.bf16 %v1659, %v1657
      %v1754 = vpack.c.bf16 %v1663, %v1661
      %v1755 = vpack.c.bf16 %v1667, %v1665
      %v1756 = vpack.c.bf16 %v1671, %v1669
      %v1757 = vpack.c.bf16 %v1675, %v1673
      %v1758 = vpack.c.bf16 %v1679, %v1677
      %v1759 = vpack.c.bf16 %v1683, %v1681
      %v1760 = vpack.c.bf16 %v1687, %v1685
      %v1761 = vpack.c.bf16 %v1691, %v1689
      %v1762 = vpack.c.bf16 %v1695, %v1693
      %v1763 = vpack.c.bf16 %v1699, %v1697
      %v1764 = vld [vmem:[%s517] sm:$0xf]
      %v1765 = vld [vmem:[%s517 + $0x8] sm:$0xf]
      %v1766 = vld [vmem:[%s517 + $0x10] sm:$0xf]
      %v1767 = vld [vmem:[%s517 + $0x18] sm:$0xf]
      %v1768 = vld [vmem:[%s517 + $0x20] sm:$0xf]
      %v1769 = vld [vmem:[%s517 + $0x28] sm:$0xf]
      %v1770 = vld [vmem:[%s517 + $0x30] sm:$0xf]
      %v1771 = vld [vmem:[%s517 + $0x38] sm:$0xf]
      %v1772 = vld [vmem:[%s517 + $0x40] sm:$0xf]
      %v1773 = vld [vmem:[%s517 + $0x48] sm:$0xf]
      %v1774 = vld [vmem:[%s517 + $0x50] sm:$0xf]
      %v1775 = vld [vmem:[%s517 + $0x58] sm:$0xf]
      %v1776 = vld [vmem:[%s517 + $0x60] sm:$0xf]
      %v1777 = vld [vmem:[%s517 + $0x68] sm:$0xf]
      %v1778 = vld [vmem:[%s517 + $0x70] sm:$0xf]
      %v1779 = vld [vmem:[%s517 + $0x78] sm:$0xf]
      %v1780 = vld [vmem:[%s523] sm:$0x1]
      %v1782 = vperm.slane %v1780, 0
      %v1800 = vunpack.c.l.b16 %v1764
      %v1801 = vunpack.c.l.b16 %v1765
      %v1802 = vunpack.c.l.b16 %v1766
      %v1803 = vunpack.c.l.b16 %v1767
      %v1804 = vunpack.c.l.b16 %v1768
      %v1805 = vunpack.c.l.b16 %v1769
      %v1806 = vunpack.c.l.b16 %v1770
      %v1807 = vunpack.c.l.b16 %v1771
      %v1808 = vunpack.c.l.b16 %v1772
      %v1809 = vunpack.c.l.b16 %v1773
      %v1810 = vunpack.c.l.b16 %v1774
      %v1811 = vunpack.c.l.b16 %v1775
      %v1812 = vunpack.c.l.b16 %v1776
      %v1813 = vunpack.c.l.b16 %v1777
      %v1814 = vunpack.c.l.b16 %v1778
      %v1815 = vunpack.c.l.b16 %v1779
      %v1816 = vpack.c.b16 %v1801, %v1800
      %v1817 = vpack.c.b16 %v1803, %v1802
      %v1818 = vpack.c.b16 %v1805, %v1804
      %v1819 = vpack.c.b16 %v1807, %v1806
      %v1820 = vpack.c.b16 %v1809, %v1808
      %v1821 = vpack.c.b16 %v1811, %v1810
      %v1822 = vpack.c.b16 %v1813, %v1812
      %v1823 = vpack.c.b16 %v1815, %v1814
      %1832 = vmatpush.bf16.msra.mxu0 %v1823
      %1833 = vmatpush.bf16.msra.mxu0 %v1822
      %1834 = vmatpush.bf16.msra.mxu0 %v1821
      %1835 = vmatpush.bf16.msra.mxu0 %v1820
      %1836 = vmatpush.bf16.msra.mxu0 %v1819
      %1837 = vmatpush.bf16.msra.mxu0 %v1818
      %1838 = vmatpush.bf16.msra.mxu0 %v1817
      %1839 = vmatpush.bf16.msra.mxu0 %v1816
      %1840 = vmatmul.bf16.gmra.mxu0 %v1700
      %v1841 = vpop.f32.mrf.mxu0
      %v1842 = vadd.f32 %v1782, %v1841
      %v1843 = vpop.f32.mrf.mxu0
      %v1844 = vadd.f32 %v1782, %v1843
      %1845 = vmatmul.bf16.gmra.mxu0 %v1701
      %v1846 = vpop.f32.mrf.mxu0
      %v1847 = vadd.f32 %v1782, %v1846
      %v1848 = vpop.f32.mrf.mxu0
      %v1849 = vadd.f32 %v1782, %v1848
      %1850 = vmatmul.bf16.gmra.mxu0 %v1702
      %v1851 = vpop.f32.mrf.mxu0
      %v1852 = vadd.f32 %v1782, %v1851
      %v1853 = vpop.f32.mrf.mxu0
      %v1854 = vadd.f32 %v1782, %v1853
      %1855 = vmatmul.bf16.gmra.mxu0 %v1703
      %v1856 = vpop.f32.mrf.mxu0
      %v1857 = vadd.f32 %v1782, %v1856
      %v1858 = vpop.f32.mrf.mxu0
      %v1859 = vadd.f32 %v1782, %v1858
      %1860 = vmatmul.bf16.gmra.mxu0 %v1704
      %v1861 = vpop.f32.mrf.mxu0
      %v1862 = vadd.f32 %v1782, %v1861
      %v1863 = vpop.f32.mrf.mxu0
      %v1864 = vadd.f32 %v1782, %v1863
      %1865 = vmatmul.bf16.gmra.mxu0 %v1705
      %v1866 = vpop.f32.mrf.mxu0
      %v1867 = vadd.f32 %v1782, %v1866
      %v1868 = vpop.f32.mrf.mxu0
      %v1869 = vadd.f32 %v1782, %v1868
      %1870 = vmatmul.bf16.gmra.mxu0 %v1706
      %v1871 = vpop.f32.mrf.mxu0
      %v1872 = vadd.f32 %v1782, %v1871
      %v1873 = vpop.f32.mrf.mxu0
      %v1874 = vadd.f32 %v1782, %v1873
      %1875 = vmatmul.bf16.gmra.mxu0 %v1707
      %v1876 = vpop.f32.mrf.mxu0
      %v1877 = vadd.f32 %v1782, %v1876
      %v1878 = vpop.f32.mrf.mxu0
      %v1879 = vadd.f32 %v1782, %v1878
      %1880 = vmatmul.bf16.gmra.mxu0 %v1708
      %v1881 = vpop.f32.mrf.mxu0
      %v1882 = vadd.f32 %v1782, %v1881
      %v1883 = vpop.f32.mrf.mxu0
      %v1884 = vadd.f32 %v1782, %v1883
      %1885 = vmatmul.bf16.gmra.mxu0 %v1709
      %v1886 = vpop.f32.mrf.mxu0
      %v1887 = vadd.f32 %v1782, %v1886
      %v1888 = vpop.f32.mrf.mxu0
      %v1889 = vadd.f32 %v1782, %v1888
      %1890 = vmatmul.bf16.gmra.mxu0 %v1710
      %v1891 = vpop.f32.mrf.mxu0
      %v1892 = vadd.f32 %v1782, %v1891
      %v1893 = vpop.f32.mrf.mxu0
      %v1894 = vadd.f32 %v1782, %v1893
      %1895 = vmatmul.bf16.gmra.mxu0 %v1711
      %v1896 = vpop.f32.mrf.mxu0
      %v1897 = vadd.f32 %v1782, %v1896
      %v1898 = vpop.f32.mrf.mxu0
      %v1899 = vadd.f32 %v1782, %v1898
      %1900 = vmatmul.bf16.gmra.mxu0 %v1712
      %v1901 = vpop.f32.mrf.mxu0
      %v1902 = vadd.f32 %v1782, %v1901
      %v1903 = vpop.f32.mrf.mxu0
      %v1904 = vadd.f32 %v1782, %v1903
      %1905 = vmatmul.bf16.gmra.mxu0 %v1713
      %v1906 = vpop.f32.mrf.mxu0
      %v1907 = vadd.f32 %v1782, %v1906
      %v1908 = vpop.f32.mrf.mxu0
      %v1909 = vadd.f32 %v1782, %v1908
      %1910 = vmatmul.bf16.gmra.mxu0 %v1714
      %v1911 = vpop.f32.mrf.mxu0
      %v1912 = vadd.f32 %v1782, %v1911
      %v1913 = vpop.f32.mrf.mxu0
      %v1914 = vadd.f32 %v1782, %v1913
      %1915 = vmatmul.bf16.gmra.mxu0 %v1715
      %v1916 = vpop.f32.mrf.mxu0
      %v1917 = vadd.f32 %v1782, %v1916
      %v1918 = vpop.f32.mrf.mxu0
      %v1919 = vadd.f32 %v1782, %v1918
      %1920 = vmatmul.bf16.gmra.mxu0 %v1716
      %v1921 = vpop.f32.mrf.mxu0
      %v1922 = vadd.f32 %v1782, %v1921
      %v1923 = vpop.f32.mrf.mxu0
      %v1924 = vadd.f32 %v1782, %v1923
      %1925 = vmatmul.bf16.gmra.mxu0 %v1717
      %v1926 = vpop.f32.mrf.mxu0
      %v1927 = vadd.f32 %v1782, %v1926
      %v1928 = vpop.f32.mrf.mxu0
      %v1929 = vadd.f32 %v1782, %v1928
      %1930 = vmatmul.bf16.gmra.mxu0 %v1718
      %v1931 = vpop.f32.mrf.mxu0
      %v1932 = vadd.f32 %v1782, %v1931
      %v1933 = vpop.f32.mrf.mxu0
      %v1934 = vadd.f32 %v1782, %v1933
      %1935 = vmatmul.bf16.gmra.mxu0 %v1719
      %v1936 = vpop.f32.mrf.mxu0
      %v1937 = vadd.f32 %v1782, %v1936
      %v1938 = vpop.f32.mrf.mxu0
      %v1939 = vadd.f32 %v1782, %v1938
      %1940 = vmatmul.bf16.gmra.mxu0 %v1720
      %v1941 = vpop.f32.mrf.mxu0
      %v1942 = vadd.f32 %v1782, %v1941
      %v1943 = vpop.f32.mrf.mxu0
      %v1944 = vadd.f32 %v1782, %v1943
      %1945 = vmatmul.bf16.gmra.mxu0 %v1721
      %v1946 = vpop.f32.mrf.mxu0
      %v1947 = vadd.f32 %v1782, %v1946
      %v1948 = vpop.f32.mrf.mxu0
      %v1949 = vadd.f32 %v1782, %v1948
      %1950 = vmatmul.bf16.gmra.mxu0 %v1722
      %v1951 = vpop.f32.mrf.mxu0
      %v1952 = vadd.f32 %v1782, %v1951
      %v1953 = vpop.f32.mrf.mxu0
      %v1954 = vadd.f32 %v1782, %v1953
      %1955 = vmatmul.bf16.gmra.mxu0 %v1723
      %v1956 = vpop.f32.mrf.mxu0
      %v1957 = vadd.f32 %v1782, %v1956
      %v1958 = vpop.f32.mrf.mxu0
      %v1959 = vadd.f32 %v1782, %v1958
      %1960 = vmatmul.bf16.gmra.mxu0 %v1724
      %v1961 = vpop.f32.mrf.mxu0
      %v1962 = vadd.f32 %v1782, %v1961
      %v1963 = vpop.f32.mrf.mxu0
      %v1964 = vadd.f32 %v1782, %v1963
      %1965 = vmatmul.bf16.gmra.mxu0 %v1725
      %v1966 = vpop.f32.mrf.mxu0
      %v1967 = vadd.f32 %v1782, %v1966
      %v1968 = vpop.f32.mrf.mxu0
      %v1969 = vadd.f32 %v1782, %v1968
      %1970 = vmatmul.bf16.gmra.mxu0 %v1726
      %v1971 = vpop.f32.mrf.mxu0
      %v1972 = vadd.f32 %v1782, %v1971
      %v1973 = vpop.f32.mrf.mxu0
      %v1974 = vadd.f32 %v1782, %v1973
      %1975 = vmatmul.bf16.gmra.mxu0 %v1727
      %v1976 = vpop.f32.mrf.mxu0
      %v1977 = vadd.f32 %v1782, %v1976
      %v1978 = vpop.f32.mrf.mxu0
      %v1979 = vadd.f32 %v1782, %v1978
      %1980 = vmatmul.bf16.gmra.mxu0 %v1728
      %v1981 = vpop.f32.mrf.mxu0
      %v1982 = vadd.f32 %v1782, %v1981
      %v1983 = vpop.f32.mrf.mxu0
      %v1984 = vadd.f32 %v1782, %v1983
      %1985 = vmatmul.bf16.gmra.mxu0 %v1729
      %v1986 = vpop.f32.mrf.mxu0
      %v1987 = vadd.f32 %v1782, %v1986
      %v1988 = vpop.f32.mrf.mxu0
      %v1989 = vadd.f32 %v1782, %v1988
      %1990 = vmatmul.bf16.gmra.mxu0 %v1730
      %v1991 = vpop.f32.mrf.mxu0
      %v1992 = vadd.f32 %v1782, %v1991
      %v1993 = vpop.f32.mrf.mxu0
      %v1994 = vadd.f32 %v1782, %v1993
      %1995 = vmatmul.bf16.gmra.mxu0 %v1731
      %v1996 = vpop.f32.mrf.mxu0
      %v1997 = vadd.f32 %v1782, %v1996
      %v1998 = vpop.f32.mrf.mxu0
      %v1999 = vadd.f32 %v1782, %v1998
      %2000 = vdwg.mxu0
      %v2001 = vmax.f32 %v1842, 0.0
      %v2002 = vmax.f32 %v1844, 0.0
      %v2003 = vmax.f32 %v1847, 0.0
      %v2004 = vmax.f32 %v1849, 0.0
      %v2005 = vmax.f32 %v1852, 0.0
      %v2006 = vmax.f32 %v1854, 0.0
      %v2007 = vmax.f32 %v1857, 0.0
      %v2008 = vmax.f32 %v1859, 0.0
      %v2009 = vmax.f32 %v1862, 0.0
      %v2010 = vmax.f32 %v1864, 0.0
      %v2011 = vmax.f32 %v1867, 0.0
      %v2012 = vmax.f32 %v1869, 0.0
      %v2013 = vmax.f32 %v1872, 0.0
      %v2014 = vmax.f32 %v1874, 0.0
      %v2015 = vmax.f32 %v1877, 0.0
      %v2016 = vmax.f32 %v1879, 0.0
      %v2017 = vmax.f32 %v1882, 0.0
      %v2018 = vmax.f32 %v1884, 0.0
      %v2019 = vmax.f32 %v1887, 0.0
      %v2020 = vmax.f32 %v1889, 0.0
      %v2021 = vmax.f32 %v1892, 0.0
      %v2022 = vmax.f32 %v1894, 0.0
      %v2023 = vmax.f32 %v1897, 0.0
      %v2024 = vmax.f32 %v1899, 0.0
      %v2025 = vmax.f32 %v1902, 0.0
      %v2026 = vmax.f32 %v1904, 0.0
      %v2027 = vmax.f32 %v1907, 0.0
      %v2028 = vmax.f32 %v1909, 0.0
      %v2029 = vmax.f32 %v1912, 0.0
      %v2030 = vmax.f32 %v1914, 0.0
      %v2031 = vmax.f32 %v1917, 0.0
      %v2032 = vmax.f32 %v1919, 0.0
      %v2033 = vmax.f32 %v1922, 0.0
      %v2034 = vmax.f32 %v1924, 0.0
      %v2035 = vmax.f32 %v1927, 0.0
      %v2036 = vmax.f32 %v1929, 0.0
      %v2037 = vmax.f32 %v1932, 0.0
      %v2038 = vmax.f32 %v1934, 0.0
      %v2039 = vmax.f32 %v1937, 0.0
      %v2040 = vmax.f32 %v1939, 0.0
      %v2041 = vmax.f32 %v1942, 0.0
      %v2042 = vmax.f32 %v1944, 0.0
      %v2043 = vmax.f32 %v1947, 0.0
      %v2044 = vmax.f32 %v1949, 0.0
      %v2045 = vmax.f32 %v1952, 0.0
      %v2046 = vmax.f32 %v1954, 0.0
      %v2047 = vmax.f32 %v1957, 0.0
      %v2048 = vmax.f32 %v1959, 0.0
      %v2049 = vmax.f32 %v1962, 0.0
      %v2050 = vmax.f32 %v1964, 0.0
      %v2051 = vmax.f32 %v1967, 0.0
      %v2052 = vmax.f32 %v1969, 0.0
      %v2053 = vmax.f32 %v1972, 0.0
      %v2054 = vmax.f32 %v1974, 0.0
      %v2055 = vmax.f32 %v1977, 0.0
      %v2056 = vmax.f32 %v1979, 0.0
      %v2057 = vmax.f32 %v1982, 0.0
      %v2058 = vmax.f32 %v1984, 0.0
      %v2059 = vmax.f32 %v1987, 0.0
      %v2060 = vmax.f32 %v1989, 0.0
      %v2061 = vmax.f32 %v1992, 0.0
      %v2062 = vmax.f32 %v1994, 0.0
      %v2063 = vmax.f32 %v1997, 0.0
      %v2064 = vmax.f32 %v1999, 0.0
      %v2065 = vpack.c.bf16 %v2002, %v2001
      %v2066 = vpack.c.bf16 %v2004, %v2003
      %v2067 = vpack.c.bf16 %v2006, %v2005
      %v2068 = vpack.c.bf16 %v2008, %v2007
      %v2069 = vpack.c.bf16 %v2010, %v2009
      %v2070 = vpack.c.bf16 %v2012, %v2011
      %v2071 = vpack.c.bf16 %v2014, %v2013
      %v2072 = vpack.c.bf16 %v2016, %v2015
      %v2073 = vpack.c.bf16 %v2018, %v2017
      %v2074 = vpack.c.bf16 %v2020, %v2019
      %v2075 = vpack.c.bf16 %v2022, %v2021
      %v2076 = vpack.c.bf16 %v2024, %v2023
      %v2077 = vpack.c.bf16 %v2026, %v2025
      %v2078 = vpack.c.bf16 %v2028, %v2027
      %v2079 = vpack.c.bf16 %v2030, %v2029
      %v2080 = vpack.c.bf16 %v2032, %v2031
      %v2081 = vpack.c.bf16 %v2034, %v2033
      %v2082 = vpack.c.bf16 %v2036, %v2035
      %v2083 = vpack.c.bf16 %v2038, %v2037
      %v2084 = vpack.c.bf16 %v2040, %v2039
      %v2085 = vpack.c.bf16 %v2042, %v2041
      %v2086 = vpack.c.bf16 %v2044, %v2043
      %v2087 = vpack.c.bf16 %v2046, %v2045
      %v2088 = vpack.c.bf16 %v2048, %v2047
      %v2089 = vpack.c.bf16 %v2050, %v2049
      %v2090 = vpack.c.bf16 %v2052, %v2051
      %v2091 = vpack.c.bf16 %v2054, %v2053
      %v2092 = vpack.c.bf16 %v2056, %v2055
      %v2093 = vpack.c.bf16 %v2058, %v2057
      %v2094 = vpack.c.bf16 %v2060, %v2059
      %v2095 = vpack.c.bf16 %v2062, %v2061
      %v2096 = vpack.c.bf16 %v2064, %v2063
      %v2097 = vld [vmem:[%s517 + $0x4] sm:$0xf]
      %v2098 = vld [vmem:[%s517 + $0xc] sm:$0xf]
      %v2099 = vld [vmem:[%s517 + $0x14] sm:$0xf]
      %v2100 = vld [vmem:[%s517 + $0x1c] sm:$0xf]
      %v2101 = vld [vmem:[%s517 + $0x24] sm:$0xf]
      %v2102 = vld [vmem:[%s517 + $0x2c] sm:$0xf]
      %v2103 = vld [vmem:[%s517 + $0x34] sm:$0xf]
      %v2104 = vld [vmem:[%s517 + $0x3c] sm:$0xf]
      %v2105 = vld [vmem:[%s517 + $0x44] sm:$0xf]
      %v2106 = vld [vmem:[%s517 + $0x4c] sm:$0xf]
      %v2107 = vld [vmem:[%s517 + $0x54] sm:$0xf]
      %v2108 = vld [vmem:[%s517 + $0x5c] sm:$0xf]
      %v2109 = vld [vmem:[%s517 + $0x64] sm:$0xf]
      %v2110 = vld [vmem:[%s517 + $0x6c] sm:$0xf]
      %v2111 = vld [vmem:[%s517 + $0x74] sm:$0xf]
      %v2112 = vld [vmem:[%s517 + $0x7c] sm:$0xf]
      %v2113 = vld [vmem:[%s523 + $0x1] sm:$0x1]
      %v2115 = vperm.slane %v2113, 0
      %v2133 = vunpack.c.l.b16 %v2097
      %v2134 = vunpack.c.l.b16 %v2098
      %v2135 = vunpack.c.l.b16 %v2099
      %v2136 = vunpack.c.l.b16 %v2100
      %v2137 = vunpack.c.l.b16 %v2101
      %v2138 = vunpack.c.l.b16 %v2102
      %v2139 = vunpack.c.l.b16 %v2103
      %v2140 = vunpack.c.l.b16 %v2104
      %v2141 = vunpack.c.l.b16 %v2105
      %v2142 = vunpack.c.l.b16 %v2106
      %v2143 = vunpack.c.l.b16 %v2107
      %v2144 = vunpack.c.l.b16 %v2108
      %v2145 = vunpack.c.l.b16 %v2109
      %v2146 = vunpack.c.l.b16 %v2110
      %v2147 = vunpack.c.l.b16 %v2111
      %v2148 = vunpack.c.l.b16 %v2112
      %v2149 = vpack.c.b16 %v2134, %v2133
      %v2150 = vpack.c.b16 %v2136, %v2135
      %v2151 = vpack.c.b16 %v2138, %v2137
      %v2152 = vpack.c.b16 %v2140, %v2139
      %v2153 = vpack.c.b16 %v2142, %v2141
      %v2154 = vpack.c.b16 %v2144, %v2143
      %v2155 = vpack.c.b16 %v2146, %v2145
      %v2156 = vpack.c.b16 %v2148, %v2147
      %2165 = vmatpush.bf16.msra.mxu0 %v2156
      %2166 = vmatpush.bf16.msra.mxu0 %v2155
      %2167 = vmatpush.bf16.msra.mxu0 %v2154
      %2168 = vmatpush.bf16.msra.mxu0 %v2153
      %2169 = vmatpush.bf16.msra.mxu0 %v2152
      %2170 = vmatpush.bf16.msra.mxu0 %v2151
      %2171 = vmatpush.bf16.msra.mxu0 %v2150
      %2172 = vmatpush.bf16.msra.mxu0 %v2149
      %2173 = vmatmul.bf16.gmra.mxu0 %v1732
      %v2174 = vpop.f32.mrf.mxu0
      %v2175 = vadd.f32 %v2115, %v2174
      %v2176 = vpop.f32.mrf.mxu0
      %v2177 = vadd.f32 %v2115, %v2176
      %2178 = vmatmul.bf16.gmra.mxu0 %v1733
      %v2179 = vpop.f32.mrf.mxu0
      %v2180 = vadd.f32 %v2115, %v2179
      %v2181 = vpop.f32.mrf.mxu0
      %v2182 = vadd.f32 %v2115, %v2181
      %2183 = vmatmul.bf16.gmra.mxu0 %v1734
      %v2184 = vpop.f32.mrf.mxu0
      %v2185 = vadd.f32 %v2115, %v2184
      %v2186 = vpop.f32.mrf.mxu0
      %v2187 = vadd.f32 %v2115, %v2186
      %2188 = vmatmul.bf16.gmra.mxu0 %v1735
      %v2189 = vpop.f32.mrf.mxu0
      %v2190 = vadd.f32 %v2115, %v2189
      %v2191 = vpop.f32.mrf.mxu0
      %v2192 = vadd.f32 %v2115, %v2191
      %2193 = vmatmul.bf16.gmra.mxu0 %v1736
      %v2194 = vpop.f32.mrf.mxu0
      %v2195 = vadd.f32 %v2115, %v2194
      %v2196 = vpop.f32.mrf.mxu0
      %v2197 = vadd.f32 %v2115, %v2196
      %2198 = vmatmul.bf16.gmra.mxu0 %v1737
      %v2199 = vpop.f32.mrf.mxu0
      %v2200 = vadd.f32 %v2115, %v2199
      %v2201 = vpop.f32.mrf.mxu0
      %v2202 = vadd.f32 %v2115, %v2201
      %2203 = vmatmul.bf16.gmra.mxu0 %v1738
      %v2204 = vpop.f32.mrf.mxu0
      %v2205 = vadd.f32 %v2115, %v2204
      %v2206 = vpop.f32.mrf.mxu0
      %v2207 = vadd.f32 %v2115, %v2206
      %2208 = vmatmul.bf16.gmra.mxu0 %v1739
      %v2209 = vpop.f32.mrf.mxu0
      %v2210 = vadd.f32 %v2115, %v2209
      %v2211 = vpop.f32.mrf.mxu0
      %v2212 = vadd.f32 %v2115, %v2211
      %2213 = vmatmul.bf16.gmra.mxu0 %v1740
      %v2214 = vpop.f32.mrf.mxu0
      %v2215 = vadd.f32 %v2115, %v2214
      %v2216 = vpop.f32.mrf.mxu0
      %v2217 = vadd.f32 %v2115, %v2216
      %2218 = vmatmul.bf16.gmra.mxu0 %v1741
      %v2219 = vpop.f32.mrf.mxu0
      %v2220 = vadd.f32 %v2115, %v2219
      %v2221 = vpop.f32.mrf.mxu0
      %v2222 = vadd.f32 %v2115, %v2221
      %2223 = vmatmul.bf16.gmra.mxu0 %v1742
      %v2224 = vpop.f32.mrf.mxu0
      %v2225 = vadd.f32 %v2115, %v2224
      %v2226 = vpop.f32.mrf.mxu0
      %v2227 = vadd.f32 %v2115, %v2226
      %2228 = vmatmul.bf16.gmra.mxu0 %v1743
      %v2229 = vpop.f32.mrf.mxu0
      %v2230 = vadd.f32 %v2115, %v2229
      %v2231 = vpop.f32.mrf.mxu0
      %v2232 = vadd.f32 %v2115, %v2231
      %2233 = vmatmul.bf16.gmra.mxu0 %v1744
      %v2234 = vpop.f32.mrf.mxu0
      %v2235 = vadd.f32 %v2115, %v2234
      %v2236 = vpop.f32.mrf.mxu0
      %v2237 = vadd.f32 %v2115, %v2236
      %2238 = vmatmul.bf16.gmra.mxu0 %v1745
      %v2239 = vpop.f32.mrf.mxu0
      %v2240 = vadd.f32 %v2115, %v2239
      %v2241 = vpop.f32.mrf.mxu0
      %v2242 = vadd.f32 %v2115, %v2241
      %2243 = vmatmul.bf16.gmra.mxu0 %v1746
      %v2244 = vpop.f32.mrf.mxu0
      %v2245 = vadd.f32 %v2115, %v2244
      %v2246 = vpop.f32.mrf.mxu0
      %v2247 = vadd.f32 %v2115, %v2246
      %2248 = vmatmul.bf16.gmra.mxu0 %v1747
      %v2249 = vpop.f32.mrf.mxu0
      %v2250 = vadd.f32 %v2115, %v2249
      %v2251 = vpop.f32.mrf.mxu0
      %v2252 = vadd.f32 %v2115, %v2251
      %2253 = vmatmul.bf16.gmra.mxu0 %v1748
      %v2254 = vpop.f32.mrf.mxu0
      %v2255 = vadd.f32 %v2115, %v2254
      %v2256 = vpop.f32.mrf.mxu0
      %v2257 = vadd.f32 %v2115, %v2256
      %2258 = vmatmul.bf16.gmra.mxu0 %v1749
      %v2259 = vpop.f32.mrf.mxu0
      %v2260 = vadd.f32 %v2115, %v2259
      %v2261 = vpop.f32.mrf.mxu0
      %v2262 = vadd.f32 %v2115, %v2261
      %2263 = vmatmul.bf16.gmra.mxu0 %v1750
      %v2264 = vpop.f32.mrf.mxu0
      %v2265 = vadd.f32 %v2115, %v2264
      %v2266 = vpop.f32.mrf.mxu0
      %v2267 = vadd.f32 %v2115, %v2266
      %2268 = vmatmul.bf16.gmra.mxu0 %v1751
      %v2269 = vpop.f32.mrf.mxu0
      %v2270 = vadd.f32 %v2115, %v2269
      %v2271 = vpop.f32.mrf.mxu0
      %v2272 = vadd.f32 %v2115, %v2271
      %2273 = vmatmul.bf16.gmra.mxu0 %v1752
      %v2274 = vpop.f32.mrf.mxu0
      %v2275 = vadd.f32 %v2115, %v2274
      %v2276 = vpop.f32.mrf.mxu0
      %v2277 = vadd.f32 %v2115, %v2276
      %2278 = vmatmul.bf16.gmra.mxu0 %v1753
      %v2279 = vpop.f32.mrf.mxu0
      %v2280 = vadd.f32 %v2115, %v2279
      %v2281 = vpop.f32.mrf.mxu0
      %v2282 = vadd.f32 %v2115, %v2281
      %2283 = vmatmul.bf16.gmra.mxu0 %v1754
      %v2284 = vpop.f32.mrf.mxu0
      %v2285 = vadd.f32 %v2115, %v2284
      %v2286 = vpop.f32.mrf.mxu0
      %v2287 = vadd.f32 %v2115, %v2286
      %2288 = vmatmul.bf16.gmra.mxu0 %v1755
      %v2289 = vpop.f32.mrf.mxu0
      %v2290 = vadd.f32 %v2115, %v2289
      %v2291 = vpop.f32.mrf.mxu0
      %v2292 = vadd.f32 %v2115, %v2291
      %2293 = vmatmul.bf16.gmra.mxu0 %v1756
      %v2294 = vpop.f32.mrf.mxu0
      %v2295 = vadd.f32 %v2115, %v2294
      %v2296 = vpop.f32.mrf.mxu0
      %v2297 = vadd.f32 %v2115, %v2296
      %2298 = vmatmul.bf16.gmra.mxu0 %v1757
      %v2299 = vpop.f32.mrf.mxu0
      %v2300 = vadd.f32 %v2115, %v2299
      %v2301 = vpop.f32.mrf.mxu0
      %v2302 = vadd.f32 %v2115, %v2301
      %2303 = vmatmul.bf16.gmra.mxu0 %v1758
      %v2304 = vpop.f32.mrf.mxu0
      %v2305 = vadd.f32 %v2115, %v2304
      %v2306 = vpop.f32.mrf.mxu0
      %v2307 = vadd.f32 %v2115, %v2306
      %2308 = vmatmul.bf16.gmra.mxu0 %v1759
      %v2309 = vpop.f32.mrf.mxu0
      %v2310 = vadd.f32 %v2115, %v2309
      %v2311 = vpop.f32.mrf.mxu0
      %v2312 = vadd.f32 %v2115, %v2311
      %2313 = vmatmul.bf16.gmra.mxu0 %v1760
      %v2314 = vpop.f32.mrf.mxu0
      %v2315 = vadd.f32 %v2115, %v2314
      %v2316 = vpop.f32.mrf.mxu0
      %v2317 = vadd.f32 %v2115, %v2316
      %2318 = vmatmul.bf16.gmra.mxu0 %v1761
      %v2319 = vpop.f32.mrf.mxu0
      %v2320 = vadd.f32 %v2115, %v2319
      %v2321 = vpop.f32.mrf.mxu0
      %v2322 = vadd.f32 %v2115, %v2321
      %2323 = vmatmul.bf16.gmra.mxu0 %v1762
      %v2324 = vpop.f32.mrf.mxu0
      %v2325 = vadd.f32 %v2115, %v2324
      %v2326 = vpop.f32.mrf.mxu0
      %v2327 = vadd.f32 %v2115, %v2326
      %2328 = vmatmul.bf16.gmra.mxu0 %v1763
      %v2329 = vpop.f32.mrf.mxu0
      %v2330 = vadd.f32 %v2115, %v2329
      %v2331 = vpop.f32.mrf.mxu0
      %v2332 = vadd.f32 %v2115, %v2331
      %2333 = vdwg.mxu0
      %v2334 = vmax.f32 %v2175, 0.0
      %v2335 = vmax.f32 %v2177, 0.0
      %v2336 = vmax.f32 %v2180, 0.0
      %v2337 = vmax.f32 %v2182, 0.0
      %v2338 = vmax.f32 %v2185, 0.0
      %v2339 = vmax.f32 %v2187, 0.0
      %v2340 = vmax.f32 %v2190, 0.0
      %v2341 = vmax.f32 %v2192, 0.0
      %v2342 = vmax.f32 %v2195, 0.0
      %v2343 = vmax.f32 %v2197, 0.0
      %v2344 = vmax.f32 %v2200, 0.0
      %v2345 = vmax.f32 %v2202, 0.0
      %v2346 = vmax.f32 %v2205, 0.0
      %v2347 = vmax.f32 %v2207, 0.0
      %v2348 = vmax.f32 %v2210, 0.0
      %v2349 = vmax.f32 %v2212, 0.0
      %v2350 = vmax.f32 %v2215, 0.0
      %v2351 = vmax.f32 %v2217, 0.0
      %v2352 = vmax.f32 %v2220, 0.0
      %v2353 = vmax.f32 %v2222, 0.0
      %v2354 = vmax.f32 %v2225, 0.0
      %v2355 = vmax.f32 %v2227, 0.0
      %v2356 = vmax.f32 %v2230, 0.0
      %v2357 = vmax.f32 %v2232, 0.0
      %v2358 = vmax.f32 %v2235, 0.0
      %v2359 = vmax.f32 %v2237, 0.0
      %v2360 = vmax.f32 %v2240, 0.0
      %v2361 = vmax.f32 %v2242, 0.0
      %v2362 = vmax.f32 %v2245, 0.0
      %v2363 = vmax.f32 %v2247, 0.0
      %v2364 = vmax.f32 %v2250, 0.0
      %v2365 = vmax.f32 %v2252, 0.0
      %v2366 = vmax.f32 %v2255, 0.0
      %v2367 = vmax.f32 %v2257, 0.0
      %v2368 = vmax.f32 %v2260, 0.0
      %v2369 = vmax.f32 %v2262, 0.0
      %v2370 = vmax.f32 %v2265, 0.0
      %v2371 = vmax.f32 %v2267, 0.0
      %v2372 = vmax.f32 %v2270, 0.0
      %v2373 = vmax.f32 %v2272, 0.0
      %v2374 = vmax.f32 %v2275, 0.0
      %v2375 = vmax.f32 %v2277, 0.0
      %v2376 = vmax.f32 %v2280, 0.0
      %v2377 = vmax.f32 %v2282, 0.0
      %v2378 = vmax.f32 %v2285, 0.0
      %v2379 = vmax.f32 %v2287, 0.0
      %v2380 = vmax.f32 %v2290, 0.0
      %v2381 = vmax.f32 %v2292, 0.0
      %v2382 = vmax.f32 %v2295, 0.0
      %v2383 = vmax.f32 %v2297, 0.0
      %v2384 = vmax.f32 %v2300, 0.0
      %v2385 = vmax.f32 %v2302, 0.0
      %v2386 = vmax.f32 %v2305, 0.0
      %v2387 = vmax.f32 %v2307, 0.0
      %v2388 = vmax.f32 %v2310, 0.0
      %v2389 = vmax.f32 %v2312, 0.0
      %v2390 = vmax.f32 %v2315, 0.0
      %v2391 = vmax.f32 %v2317, 0.0
      %v2392 = vmax.f32 %v2320, 0.0
      %v2393 = vmax.f32 %v2322, 0.0
      %v2394 = vmax.f32 %v2325, 0.0
      %v2395 = vmax.f32 %v2327, 0.0
      %v2396 = vmax.f32 %v2330, 0.0
      %v2397 = vmax.f32 %v2332, 0.0
      %v2398 = vpack.c.bf16 %v2335, %v2334
      %v2399 = vpack.c.bf16 %v2337, %v2336
      %v2400 = vpack.c.bf16 %v2339, %v2338
      %v2401 = vpack.c.bf16 %v2341, %v2340
      %v2402 = vpack.c.bf16 %v2343, %v2342
      %v2403 = vpack.c.bf16 %v2345, %v2344
      %v2404 = vpack.c.bf16 %v2347, %v2346
      %v2405 = vpack.c.bf16 %v2349, %v2348
      %v2406 = vpack.c.bf16 %v2351, %v2350
      %v2407 = vpack.c.bf16 %v2353, %v2352
      %v2408 = vpack.c.bf16 %v2355, %v2354
      %v2409 = vpack.c.bf16 %v2357, %v2356
      %v2410 = vpack.c.bf16 %v2359, %v2358
      %v2411 = vpack.c.bf16 %v2361, %v2360
      %v2412 = vpack.c.bf16 %v2363, %v2362
      %v2413 = vpack.c.bf16 %v2365, %v2364
      %v2414 = vpack.c.bf16 %v2367, %v2366
      %v2415 = vpack.c.bf16 %v2369, %v2368
      %v2416 = vpack.c.bf16 %v2371, %v2370
      %v2417 = vpack.c.bf16 %v2373, %v2372
      %v2418 = vpack.c.bf16 %v2375, %v2374
      %v2419 = vpack.c.bf16 %v2377, %v2376
      %v2420 = vpack.c.bf16 %v2379, %v2378
      %v2421 = vpack.c.bf16 %v2381, %v2380
      %v2422 = vpack.c.bf16 %v2383, %v2382
      %v2423 = vpack.c.bf16 %v2385, %v2384
      %v2424 = vpack.c.bf16 %v2387, %v2386
      %v2425 = vpack.c.bf16 %v2389, %v2388
      %v2426 = vpack.c.bf16 %v2391, %v2390
      %v2427 = vpack.c.bf16 %v2393, %v2392
      %v2428 = vpack.c.bf16 %v2395, %v2394
      %v2429 = vpack.c.bf16 %v2397, %v2396
      %v2430 = vld [vmem:[%s530] sm:$0xf]
      %v2431 = vld [vmem:[%s530 + $0x4] sm:$0xf]
      %v2432 = vld [vmem:[%s530 + $0x8] sm:$0xf]
      %v2433 = vld [vmem:[%s530 + $0xc] sm:$0xf]
      %v2434 = vld [vmem:[%s530 + $0x10] sm:$0xf]
      %v2435 = vld [vmem:[%s530 + $0x14] sm:$0xf]
      %v2436 = vld [vmem:[%s530 + $0x18] sm:$0xf]
      %v2437 = vld [vmem:[%s530 + $0x1c] sm:$0xf]
      %v2438 = vld [vmem:[%s530 + $0x20] sm:$0xf]
      %v2439 = vld [vmem:[%s530 + $0x24] sm:$0xf]
      %v2440 = vld [vmem:[%s530 + $0x28] sm:$0xf]
      %v2441 = vld [vmem:[%s530 + $0x2c] sm:$0xf]
      %v2442 = vld [vmem:[%s530 + $0x30] sm:$0xf]
      %v2443 = vld [vmem:[%s530 + $0x34] sm:$0xf]
      %v2444 = vld [vmem:[%s530 + $0x38] sm:$0xf]
      %v2445 = vld [vmem:[%s530 + $0x3c] sm:$0xf]
      %v2446 = vld [vmem:[%s530 + $0x40] sm:$0xf]
      %v2447 = vld [vmem:[%s530 + $0x44] sm:$0xf]
      %v2448 = vld [vmem:[%s530 + $0x48] sm:$0xf]
      %v2449 = vld [vmem:[%s530 + $0x4c] sm:$0xf]
      %v2450 = vld [vmem:[%s530 + $0x50] sm:$0xf]
      %v2451 = vld [vmem:[%s530 + $0x54] sm:$0xf]
      %v2452 = vld [vmem:[%s530 + $0x58] sm:$0xf]
      %v2453 = vld [vmem:[%s530 + $0x5c] sm:$0xf]
      %v2454 = vld [vmem:[%s530 + $0x60] sm:$0xf]
      %v2455 = vld [vmem:[%s530 + $0x64] sm:$0xf]
      %v2456 = vld [vmem:[%s530 + $0x68] sm:$0xf]
      %v2457 = vld [vmem:[%s530 + $0x6c] sm:$0xf]
      %v2458 = vld [vmem:[%s530 + $0x70] sm:$0xf]
      %v2459 = vld [vmem:[%s530 + $0x74] sm:$0xf]
      %v2460 = vld [vmem:[%s530 + $0x78] sm:$0xf]
      %v2461 = vld [vmem:[%s530 + $0x7c] sm:$0xf]
      %v2478 = vunpack.c.l.b16 %v2446
      %v2479 = vunpack.c.l.b16 %v2447
      %v2480 = vunpack.c.l.b16 %v2448
      %v2481 = vunpack.c.l.b16 %v2449
      %v2482 = vunpack.c.l.b16 %v2450
      %v2483 = vunpack.c.l.b16 %v2451
      %v2484 = vunpack.c.l.b16 %v2452
      %v2485 = vunpack.c.l.b16 %v2453
      %v2486 = vunpack.c.l.b16 %v2454
      %v2487 = vunpack.c.l.b16 %v2455
      %v2488 = vunpack.c.l.b16 %v2456
      %v2489 = vunpack.c.l.b16 %v2457
      %v2490 = vunpack.c.l.b16 %v2458
      %v2491 = vunpack.c.l.b16 %v2459
      %v2492 = vunpack.c.l.b16 %v2460
      %v2493 = vunpack.c.l.b16 %v2461
      %v2494 = vpack.c.b16 %v2479, %v2478
      %v2495 = vpack.c.b16 %v2481, %v2480
      %v2496 = vpack.c.b16 %v2483, %v2482
      %v2497 = vpack.c.b16 %v2485, %v2484
      %v2498 = vpack.c.b16 %v2487, %v2486
      %v2499 = vpack.c.b16 %v2489, %v2488
      %v2500 = vpack.c.b16 %v2491, %v2490
      %v2501 = vpack.c.b16 %v2493, %v2492
      %2510 = vmatpush.bf16.msra.mxu0 %v2501
      %2511 = vmatpush.bf16.msra.mxu0 %v2500
      %2512 = vmatpush.bf16.msra.mxu0 %v2499
      %2513 = vmatpush.bf16.msra.mxu0 %v2498
      %2514 = vmatpush.bf16.msra.mxu0 %v2497
      %2515 = vmatpush.bf16.msra.mxu0 %v2496
      %2516 = vmatpush.bf16.msra.mxu0 %v2495
      %2517 = vmatpush.bf16.msra.mxu0 %v2494
      %2518 = vmatmul.bf16.gmra.mxu0 %v2398
      %v2519 = vpop.f32.mrf.mxu0
      %v2520 = vadd.f32 0.0, %v2519
      %v2521 = vpop.f32.mrf.mxu0
      %v2522 = vadd.f32 0.0, %v2521
      %2523 = vmatmul.bf16.gmra.mxu0 %v2399
      %v2524 = vpop.f32.mrf.mxu0
      %v2525 = vadd.f32 0.0, %v2524
      %v2526 = vpop.f32.mrf.mxu0
      %v2527 = vadd.f32 0.0, %v2526
      %2528 = vmatmul.bf16.gmra.mxu0 %v2400
      %v2529 = vpop.f32.mrf.mxu0
      %v2530 = vadd.f32 0.0, %v2529
      %v2531 = vpop.f32.mrf.mxu0
      %v2532 = vadd.f32 0.0, %v2531
      %2533 = vmatmul.bf16.gmra.mxu0 %v2401
      %v2534 = vpop.f32.mrf.mxu0
      %v2535 = vadd.f32 0.0, %v2534
      %v2536 = vpop.f32.mrf.mxu0
      %v2537 = vadd.f32 0.0, %v2536
      %2538 = vmatmul.bf16.gmra.mxu0 %v2402
      %v2539 = vpop.f32.mrf.mxu0
      %v2540 = vadd.f32 0.0, %v2539
      %v2541 = vpop.f32.mrf.mxu0
      %v2542 = vadd.f32 0.0, %v2541
      %2543 = vmatmul.bf16.gmra.mxu0 %v2403
      %v2544 = vpop.f32.mrf.mxu0
      %v2545 = vadd.f32 0.0, %v2544
      %v2546 = vpop.f32.mrf.mxu0
      %v2547 = vadd.f32 0.0, %v2546
      %2548 = vmatmul.bf16.gmra.mxu0 %v2404
      %v2549 = vpop.f32.mrf.mxu0
      %v2550 = vadd.f32 0.0, %v2549
      %v2551 = vpop.f32.mrf.mxu0
      %v2552 = vadd.f32 0.0, %v2551
      %2553 = vmatmul.bf16.gmra.mxu0 %v2405
      %v2554 = vpop.f32.mrf.mxu0
      %v2555 = vadd.f32 0.0, %v2554
      %v2556 = vpop.f32.mrf.mxu0
      %v2557 = vadd.f32 0.0, %v2556
      %2558 = vmatmul.bf16.gmra.mxu0 %v2406
      %v2559 = vpop.f32.mrf.mxu0
      %v2560 = vadd.f32 0.0, %v2559
      %v2561 = vpop.f32.mrf.mxu0
      %v2562 = vadd.f32 0.0, %v2561
      %2563 = vmatmul.bf16.gmra.mxu0 %v2407
      %v2564 = vpop.f32.mrf.mxu0
      %v2565 = vadd.f32 0.0, %v2564
      %v2566 = vpop.f32.mrf.mxu0
      %v2567 = vadd.f32 0.0, %v2566
      %2568 = vmatmul.bf16.gmra.mxu0 %v2408
      %v2569 = vpop.f32.mrf.mxu0
      %v2570 = vadd.f32 0.0, %v2569
      %v2571 = vpop.f32.mrf.mxu0
      %v2572 = vadd.f32 0.0, %v2571
      %2573 = vmatmul.bf16.gmra.mxu0 %v2409
      %v2574 = vpop.f32.mrf.mxu0
      %v2575 = vadd.f32 0.0, %v2574
      %v2576 = vpop.f32.mrf.mxu0
      %v2577 = vadd.f32 0.0, %v2576
      %2578 = vmatmul.bf16.gmra.mxu0 %v2410
      %v2579 = vpop.f32.mrf.mxu0
      %v2580 = vadd.f32 0.0, %v2579
      %v2581 = vpop.f32.mrf.mxu0
      %v2582 = vadd.f32 0.0, %v2581
      %2583 = vmatmul.bf16.gmra.mxu0 %v2411
      %v2584 = vpop.f32.mrf.mxu0
      %v2585 = vadd.f32 0.0, %v2584
      %v2586 = vpop.f32.mrf.mxu0
      %v2587 = vadd.f32 0.0, %v2586
      %2588 = vmatmul.bf16.gmra.mxu0 %v2412
      %v2589 = vpop.f32.mrf.mxu0
      %v2590 = vadd.f32 0.0, %v2589
      %v2591 = vpop.f32.mrf.mxu0
      %v2592 = vadd.f32 0.0, %v2591
      %2593 = vmatmul.bf16.gmra.mxu0 %v2413
      %v2594 = vpop.f32.mrf.mxu0
      %v2595 = vadd.f32 0.0, %v2594
      %v2596 = vpop.f32.mrf.mxu0
      %v2597 = vadd.f32 0.0, %v2596
      %2598 = vmatmul.bf16.gmra.mxu0 %v2414
      %v2599 = vpop.f32.mrf.mxu0
      %v2600 = vadd.f32 0.0, %v2599
      %v2601 = vpop.f32.mrf.mxu0
      %v2602 = vadd.f32 0.0, %v2601
      %2603 = vmatmul.bf16.gmra.mxu0 %v2415
      %v2604 = vpop.f32.mrf.mxu0
      %v2605 = vadd.f32 0.0, %v2604
      %v2606 = vpop.f32.mrf.mxu0
      %v2607 = vadd.f32 0.0, %v2606
      %2608 = vmatmul.bf16.gmra.mxu0 %v2416
      %v2609 = vpop.f32.mrf.mxu0
      %v2610 = vadd.f32 0.0, %v2609
      %v2611 = vpop.f32.mrf.mxu0
      %v2612 = vadd.f32 0.0, %v2611
      %2613 = vmatmul.bf16.gmra.mxu0 %v2417
      %v2614 = vpop.f32.mrf.mxu0
      %v2615 = vadd.f32 0.0, %v2614
      %v2616 = vpop.f32.mrf.mxu0
      %v2617 = vadd.f32 0.0, %v2616
      %2618 = vmatmul.bf16.gmra.mxu0 %v2418
      %v2619 = vpop.f32.mrf.mxu0
      %v2620 = vadd.f32 0.0, %v2619
      %v2621 = vpop.f32.mrf.mxu0
      %v2622 = vadd.f32 0.0, %v2621
      %2623 = vmatmul.bf16.gmra.mxu0 %v2419
      %v2624 = vpop.f32.mrf.mxu0
      %v2625 = vadd.f32 0.0, %v2624
      %v2626 = vpop.f32.mrf.mxu0
      %v2627 = vadd.f32 0.0, %v2626
      %2628 = vmatmul.bf16.gmra.mxu0 %v2420
      %v2629 = vpop.f32.mrf.mxu0
      %v2630 = vadd.f32 0.0, %v2629
      %v2631 = vpop.f32.mrf.mxu0
      %v2632 = vadd.f32 0.0, %v2631
      %2633 = vmatmul.bf16.gmra.mxu0 %v2421
      %v2634 = vpop.f32.mrf.mxu0
      %v2635 = vadd.f32 0.0, %v2634
      %v2636 = vpop.f32.mrf.mxu0
      %v2637 = vadd.f32 0.0, %v2636
      %2638 = vmatmul.bf16.gmra.mxu0 %v2422
      %v2639 = vpop.f32.mrf.mxu0
      %v2640 = vadd.f32 0.0, %v2639
      %v2641 = vpop.f32.mrf.mxu0
      %v2642 = vadd.f32 0.0, %v2641
      %2643 = vmatmul.bf16.gmra.mxu0 %v2423
      %v2644 = vpop.f32.mrf.mxu0
      %v2645 = vadd.f32 0.0, %v2644
      %v2646 = vpop.f32.mrf.mxu0
      %v2647 = vadd.f32 0.0, %v2646
      %2648 = vmatmul.bf16.gmra.mxu0 %v2424
      %v2649 = vpop.f32.mrf.mxu0
      %v2650 = vadd.f32 0.0, %v2649
      %v2651 = vpop.f32.mrf.mxu0
      %v2652 = vadd.f32 0.0, %v2651
      %2653 = vmatmul.bf16.gmra.mxu0 %v2425
      %v2654 = vpop.f32.mrf.mxu0
      %v2655 = vadd.f32 0.0, %v2654
      %v2656 = vpop.f32.mrf.mxu0
      %v2657 = vadd.f32 0.0, %v2656
      %2658 = vmatmul.bf16.gmra.mxu0 %v2426
      %v2659 = vpop.f32.mrf.mxu0
      %v2660 = vadd.f32 0.0, %v2659
      %v2661 = vpop.f32.mrf.mxu0
      %v2662 = vadd.f32 0.0, %v2661
      %2663 = vmatmul.bf16.gmra.mxu0 %v2427
      %v2664 = vpop.f32.mrf.mxu0
      %v2665 = vadd.f32 0.0, %v2664
      %v2666 = vpop.f32.mrf.mxu0
      %v2667 = vadd.f32 0.0, %v2666
      %2668 = vmatmul.bf16.gmra.mxu0 %v2428
      %v2669 = vpop.f32.mrf.mxu0
      %v2670 = vadd.f32 0.0, %v2669
      %v2671 = vpop.f32.mrf.mxu0
      %v2672 = vadd.f32 0.0, %v2671
      %2673 = vmatmul.bf16.gmra.mxu0 %v2429
      %v2674 = vpop.f32.mrf.mxu0
      %v2675 = vadd.f32 0.0, %v2674
      %v2676 = vpop.f32.mrf.mxu0
      %v2677 = vadd.f32 0.0, %v2676
      %2678 = vdwg.mxu0
      %v2695 = vunpack.c.l.b16 %v2430
      %v2696 = vunpack.c.l.b16 %v2431
      %v2697 = vunpack.c.l.b16 %v2432
      %v2698 = vunpack.c.l.b16 %v2433
      %v2699 = vunpack.c.l.b16 %v2434
      %v2700 = vunpack.c.l.b16 %v2435
      %v2701 = vunpack.c.l.b16 %v2436
      %v2702 = vunpack.c.l.b16 %v2437
      %v2703 = vunpack.c.l.b16 %v2438
      %v2704 = vunpack.c.l.b16 %v2439
      %v2705 = vunpack.c.l.b16 %v2440
      %v2706 = vunpack.c.l.b16 %v2441
      %v2707 = vunpack.c.l.b16 %v2442
      %v2708 = vunpack.c.l.b16 %v2443
      %v2709 = vunpack.c.l.b16 %v2444
      %v2710 = vunpack.c.l.b16 %v2445
      %v2711 = vpack.c.b16 %v2696, %v2695
      %v2712 = vpack.c.b16 %v2698, %v2697
      %v2713 = vpack.c.b16 %v2700, %v2699
      %v2714 = vpack.c.b16 %v2702, %v2701
      %v2715 = vpack.c.b16 %v2704, %v2703
      %v2716 = vpack.c.b16 %v2706, %v2705
      %v2717 = vpack.c.b16 %v2708, %v2707
      %v2718 = vpack.c.b16 %v2710, %v2709
      %2727 = vmatpush.bf16.msra.mxu0 %v2718
      %2728 = vmatpush.bf16.msra.mxu0 %v2717
      %2729 = vmatpush.bf16.msra.mxu0 %v2716
      %2730 = vmatpush.bf16.msra.mxu0 %v2715
      %2731 = vmatpush.bf16.msra.mxu0 %v2714
      %2732 = vmatpush.bf16.msra.mxu0 %v2713
      %2733 = vmatpush.bf16.msra.mxu0 %v2712
      %2734 = vmatpush.bf16.msra.mxu0 %v2711
      %2735 = vmatmul.bf16.gmra.mxu0 %v2065
      %v2736 = vpop.f32.mrf.mxu0
      %v2737 = vadd.f32 %v2520, %v2736
      %v2738 = vpop.f32.mrf.mxu0
      %v2739 = vadd.f32 %v2522, %v2738
      %2740 = vmatmul.bf16.gmra.mxu0 %v2066
      %v2741 = vpop.f32.mrf.mxu0
      %v2742 = vadd.f32 %v2525, %v2741
      %v2743 = vpop.f32.mrf.mxu0
      %v2744 = vadd.f32 %v2527, %v2743
      %2745 = vmatmul.bf16.gmra.mxu0 %v2067
      %v2746 = vpop.f32.mrf.mxu0
      %v2747 = vadd.f32 %v2530, %v2746
      %v2748 = vpop.f32.mrf.mxu0
      %v2749 = vadd.f32 %v2532, %v2748
      %2750 = vmatmul.bf16.gmra.mxu0 %v2068
      %v2751 = vpop.f32.mrf.mxu0
      %v2752 = vadd.f32 %v2535, %v2751
      %v2753 = vpop.f32.mrf.mxu0
      %v2754 = vadd.f32 %v2537, %v2753
      %2755 = vmatmul.bf16.gmra.mxu0 %v2069
      %v2756 = vpop.f32.mrf.mxu0
      %v2757 = vadd.f32 %v2540, %v2756
      %v2758 = vpop.f32.mrf.mxu0
      %v2759 = vadd.f32 %v2542, %v2758
      %2760 = vmatmul.bf16.gmra.mxu0 %v2070
      %v2761 = vpop.f32.mrf.mxu0
      %v2762 = vadd.f32 %v2545, %v2761
      %v2763 = vpop.f32.mrf.mxu0
      %v2764 = vadd.f32 %v2547, %v2763
      %2765 = vmatmul.bf16.gmra.mxu0 %v2071
      %v2766 = vpop.f32.mrf.mxu0
      %v2767 = vadd.f32 %v2550, %v2766
      %v2768 = vpop.f32.mrf.mxu0
      %v2769 = vadd.f32 %v2552, %v2768
      %2770 = vmatmul.bf16.gmra.mxu0 %v2072
      %v2771 = vpop.f32.mrf.mxu0
      %v2772 = vadd.f32 %v2555, %v2771
      %v2773 = vpop.f32.mrf.mxu0
      %v2774 = vadd.f32 %v2557, %v2773
      %2775 = vmatmul.bf16.gmra.mxu0 %v2073
      %v2776 = vpop.f32.mrf.mxu0
      %v2777 = vadd.f32 %v2560, %v2776
      %v2778 = vpop.f32.mrf.mxu0
      %v2779 = vadd.f32 %v2562, %v2778
      %2780 = vmatmul.bf16.gmra.mxu0 %v2074
      %v2781 = vpop.f32.mrf.mxu0
      %v2782 = vadd.f32 %v2565, %v2781
      %v2783 = vpop.f32.mrf.mxu0
      %v2784 = vadd.f32 %v2567, %v2783
      %2785 = vmatmul.bf16.gmra.mxu0 %v2075
      %v2786 = vpop.f32.mrf.mxu0
      %v2787 = vadd.f32 %v2570, %v2786
      %v2788 = vpop.f32.mrf.mxu0
      %v2789 = vadd.f32 %v2572, %v2788
      %2790 = vmatmul.bf16.gmra.mxu0 %v2076
      %v2791 = vpop.f32.mrf.mxu0
      %v2792 = vadd.f32 %v2575, %v2791
      %v2793 = vpop.f32.mrf.mxu0
      %v2794 = vadd.f32 %v2577, %v2793
      %2795 = vmatmul.bf16.gmra.mxu0 %v2077
      %v2796 = vpop.f32.mrf.mxu0
      %v2797 = vadd.f32 %v2580, %v2796
      %v2798 = vpop.f32.mrf.mxu0
      %v2799 = vadd.f32 %v2582, %v2798
      %2800 = vmatmul.bf16.gmra.mxu0 %v2078
      %v2801 = vpop.f32.mrf.mxu0
      %v2802 = vadd.f32 %v2585, %v2801
      %v2803 = vpop.f32.mrf.mxu0
      %v2804 = vadd.f32 %v2587, %v2803
      %2805 = vmatmul.bf16.gmra.mxu0 %v2079
      %v2806 = vpop.f32.mrf.mxu0
      %v2807 = vadd.f32 %v2590, %v2806
      %v2808 = vpop.f32.mrf.mxu0
      %v2809 = vadd.f32 %v2592, %v2808
      %2810 = vmatmul.bf16.gmra.mxu0 %v2080
      %v2811 = vpop.f32.mrf.mxu0
      %v2812 = vadd.f32 %v2595, %v2811
      %v2813 = vpop.f32.mrf.mxu0
      %v2814 = vadd.f32 %v2597, %v2813
      %2815 = vmatmul.bf16.gmra.mxu0 %v2081
      %v2816 = vpop.f32.mrf.mxu0
      %v2817 = vadd.f32 %v2600, %v2816
      %v2818 = vpop.f32.mrf.mxu0
      %v2819 = vadd.f32 %v2602, %v2818
      %2820 = vmatmul.bf16.gmra.mxu0 %v2082
      %v2821 = vpop.f32.mrf.mxu0
      %v2822 = vadd.f32 %v2605, %v2821
      %v2823 = vpop.f32.mrf.mxu0
      %v2824 = vadd.f32 %v2607, %v2823
      %2825 = vmatmul.bf16.gmra.mxu0 %v2083
      %v2826 = vpop.f32.mrf.mxu0
      %v2827 = vadd.f32 %v2610, %v2826
      %v2828 = vpop.f32.mrf.mxu0
      %v2829 = vadd.f32 %v2612, %v2828
      %2830 = vmatmul.bf16.gmra.mxu0 %v2084
      %v2831 = vpop.f32.mrf.mxu0
      %v2832 = vadd.f32 %v2615, %v2831
      %v2833 = vpop.f32.mrf.mxu0
      %v2834 = vadd.f32 %v2617, %v2833
      %2835 = vmatmul.bf16.gmra.mxu0 %v2085
      %v2836 = vpop.f32.mrf.mxu0
      %v2837 = vadd.f32 %v2620, %v2836
      %v2838 = vpop.f32.mrf.mxu0
      %v2839 = vadd.f32 %v2622, %v2838
      %2840 = vmatmul.bf16.gmra.mxu0 %v2086
      %v2841 = vpop.f32.mrf.mxu0
      %v2842 = vadd.f32 %v2625, %v2841
      %v2843 = vpop.f32.mrf.mxu0
      %v2844 = vadd.f32 %v2627, %v2843
      %2845 = vmatmul.bf16.gmra.mxu0 %v2087
      %v2846 = vpop.f32.mrf.mxu0
      %v2847 = vadd.f32 %v2630, %v2846
      %v2848 = vpop.f32.mrf.mxu0
      %v2849 = vadd.f32 %v2632, %v2848
      %2850 = vmatmul.bf16.gmra.mxu0 %v2088
      %v2851 = vpop.f32.mrf.mxu0
      %v2852 = vadd.f32 %v2635, %v2851
      %v2853 = vpop.f32.mrf.mxu0
      %v2854 = vadd.f32 %v2637, %v2853
      %2855 = vmatmul.bf16.gmra.mxu0 %v2089
      %v2856 = vpop.f32.mrf.mxu0
      %v2857 = vadd.f32 %v2640, %v2856
      %v2858 = vpop.f32.mrf.mxu0
      %v2859 = vadd.f32 %v2642, %v2858
      %2860 = vmatmul.bf16.gmra.mxu0 %v2090
      %v2861 = vpop.f32.mrf.mxu0
      %v2862 = vadd.f32 %v2645, %v2861
      %v2863 = vpop.f32.mrf.mxu0
      %v2864 = vadd.f32 %v2647, %v2863
      %2865 = vmatmul.bf16.gmra.mxu0 %v2091
      %v2866 = vpop.f32.mrf.mxu0
      %v2867 = vadd.f32 %v2650, %v2866
      %v2868 = vpop.f32.mrf.mxu0
      %v2869 = vadd.f32 %v2652, %v2868
      %2870 = vmatmul.bf16.gmra.mxu0 %v2092
      %v2871 = vpop.f32.mrf.mxu0
      %v2872 = vadd.f32 %v2655, %v2871
      %v2873 = vpop.f32.mrf.mxu0
      %v2874 = vadd.f32 %v2657, %v2873
      %2875 = vmatmul.bf16.gmra.mxu0 %v2093
      %v2876 = vpop.f32.mrf.mxu0
      %v2877 = vadd.f32 %v2660, %v2876
      %v2878 = vpop.f32.mrf.mxu0
      %v2879 = vadd.f32 %v2662, %v2878
      %2880 = vmatmul.bf16.gmra.mxu0 %v2094
      %v2881 = vpop.f32.mrf.mxu0
      %v2882 = vadd.f32 %v2665, %v2881
      %v2883 = vpop.f32.mrf.mxu0
      %v2884 = vadd.f32 %v2667, %v2883
      %2885 = vmatmul.bf16.gmra.mxu0 %v2095
      %v2886 = vpop.f32.mrf.mxu0
      %v2887 = vadd.f32 %v2670, %v2886
      %v2888 = vpop.f32.mrf.mxu0
      %v2889 = vadd.f32 %v2672, %v2888
      %2890 = vmatmul.bf16.gmra.mxu0 %v2096
      %v2891 = vpop.f32.mrf.mxu0
      %v2892 = vadd.f32 %v2675, %v2891
      %v2893 = vpop.f32.mrf.mxu0
      %v2894 = vadd.f32 %v2677, %v2893
      %2895 = vdwg.mxu0
      %v2896 = vld [vmem:[%s535] sm:$0x1]
      %v2898 = vperm.slane %v2896, 0
      %v2900 = vadd.f32 %v2737, %v2898
      %v2901 = vadd.f32 %v2739, %v2898
      %v2902 = vadd.f32 %v2742, %v2898
      %v2903 = vadd.f32 %v2744, %v2898
      %v2904 = vadd.f32 %v2747, %v2898
      %v2905 = vadd.f32 %v2749, %v2898
      %v2906 = vadd.f32 %v2752, %v2898
      %v2907 = vadd.f32 %v2754, %v2898
      %v2908 = vadd.f32 %v2757, %v2898
      %v2909 = vadd.f32 %v2759, %v2898
      %v2910 = vadd.f32 %v2762, %v2898
      %v2911 = vadd.f32 %v2764, %v2898
      %v2912 = vadd.f32 %v2767, %v2898
      %v2913 = vadd.f32 %v2769, %v2898
      %v2914 = vadd.f32 %v2772, %v2898
      %v2915 = vadd.f32 %v2774, %v2898
      %v2916 = vadd.f32 %v2777, %v2898
      %v2917 = vadd.f32 %v2779, %v2898
      %v2918 = vadd.f32 %v2782, %v2898
      %v2919 = vadd.f32 %v2784, %v2898
      %v2920 = vadd.f32 %v2787, %v2898
      %v2921 = vadd.f32 %v2789, %v2898
      %v2922 = vadd.f32 %v2792, %v2898
      %v2923 = vadd.f32 %v2794, %v2898
      %v2924 = vadd.f32 %v2797, %v2898
      %v2925 = vadd.f32 %v2799, %v2898
      %v2926 = vadd.f32 %v2802, %v2898
      %v2927 = vadd.f32 %v2804, %v2898
      %v2928 = vadd.f32 %v2807, %v2898
      %v2929 = vadd.f32 %v2809, %v2898
      %v2930 = vadd.f32 %v2812, %v2898
      %v2931 = vadd.f32 %v2814, %v2898
      %v2932 = vadd.f32 %v2817, %v2898
      %v2933 = vadd.f32 %v2819, %v2898
      %v2934 = vadd.f32 %v2822, %v2898
      %v2935 = vadd.f32 %v2824, %v2898
      %v2936 = vadd.f32 %v2827, %v2898
      %v2937 = vadd.f32 %v2829, %v2898
      %v2938 = vadd.f32 %v2832, %v2898
      %v2939 = vadd.f32 %v2834, %v2898
      %v2940 = vadd.f32 %v2837, %v2898
      %v2941 = vadd.f32 %v2839, %v2898
      %v2942 = vadd.f32 %v2842, %v2898
      %v2943 = vadd.f32 %v2844, %v2898
      %v2944 = vadd.f32 %v2847, %v2898
      %v2945 = vadd.f32 %v2849, %v2898
      %v2946 = vadd.f32 %v2852, %v2898
      %v2947 = vadd.f32 %v2854, %v2898
      %v2948 = vadd.f32 %v2857, %v2898
      %v2949 = vadd.f32 %v2859, %v2898
      %v2950 = vadd.f32 %v2862, %v2898
      %v2951 = vadd.f32 %v2864, %v2898
      %v2952 = vadd.f32 %v2867, %v2898
      %v2953 = vadd.f32 %v2869, %v2898
      %v2954 = vadd.f32 %v2872, %v2898
      %v2955 = vadd.f32 %v2874, %v2898
      %v2956 = vadd.f32 %v2877, %v2898
      %v2957 = vadd.f32 %v2879, %v2898
      %v2958 = vadd.f32 %v2882, %v2898
      %v2959 = vadd.f32 %v2884, %v2898
      %v2960 = vadd.f32 %v2887, %v2898
      %v2961 = vadd.f32 %v2889, %v2898
      %v2962 = vadd.f32 %v2892, %v2898
      %v2963 = vadd.f32 %v2894, %v2898
      %v2964 = vlaneseq
      %v2965 = vand.u32 %v2964, 127
      %vm2966 = vcmp.ge.s32.totalorder %v2965, 9
      %vm2967 = vcmp.lt.s32.totalorder %v2965, 13
      %vm2968 = vmand %vm2966, %vm2967
      %v2969 = vmax.f32 %v2900, 0.0
      %v2970 = vmax.f32 %v2901, 0.0
      %v2971 = vmax.f32 %v2902, 0.0
      %v2972 = vmax.f32 %v2903, 0.0
      %v2973 = vmax.f32 %v2904, 0.0
      %v2974 = vmax.f32 %v2905, 0.0
      %v2975 = vmax.f32 %v2906, 0.0
      %v2976 = vmax.f32 %v2907, 0.0
      %v2977 = vmax.f32 %v2908, 0.0
      %v2978 = vmax.f32 %v2909, 0.0
      %v2979 = vmax.f32 %v2910, 0.0
      %v2980 = vmax.f32 %v2911, 0.0
      %v2981 = vmax.f32 %v2912, 0.0
      %v2982 = vmax.f32 %v2913, 0.0
      %v2983 = vmax.f32 %v2914, 0.0
      %v2984 = vmax.f32 %v2915, 0.0
      %v2985 = vmax.f32 %v2916, 0.0
      %v2986 = vmax.f32 %v2917, 0.0
      %v2987 = vmax.f32 %v2918, 0.0
      %v2988 = vmax.f32 %v2919, 0.0
      %v2989 = vmax.f32 %v2920, 0.0
      %v2990 = vmax.f32 %v2921, 0.0
      %v2991 = vmax.f32 %v2922, 0.0
      %v2992 = vmax.f32 %v2923, 0.0
      %v2993 = vmax.f32 %v2924, 0.0
      %v2994 = vmax.f32 %v2925, 0.0
      %v2995 = vmax.f32 %v2926, 0.0
      %v2996 = vmax.f32 %v2927, 0.0
      %v2997 = vmax.f32 %v2928, 0.0
      %v2998 = vmax.f32 %v2929, 0.0
      %v2999 = vmax.f32 %v2930, 0.0
      %v3000 = vmax.f32 %v2931, 0.0
      %v3001 = vmax.f32 %v2932, 0.0
      %v3002 = vmax.f32 %v2933, 0.0
      %v3003 = vmax.f32 %v2934, 0.0
      %v3004 = vmax.f32 %v2935, 0.0
      %v3005 = vmax.f32 %v2936, 0.0
      %v3006 = vmax.f32 %v2937, 0.0
      %v3007 = vmax.f32 %v2938, 0.0
      %v3008 = vmax.f32 %v2939, 0.0
      %v3009 = vmax.f32 %v2940, 0.0
      %v3010 = vmax.f32 %v2941, 0.0
      %v3011 = vmax.f32 %v2942, 0.0
      %v3012 = vmax.f32 %v2943, 0.0
      %v3013 = vmax.f32 %v2944, 0.0
      %v3014 = vmax.f32 %v2945, 0.0
      %v3015 = vmax.f32 %v2946, 0.0
      %v3016 = vmax.f32 %v2947, 0.0
      %v3017 = vmax.f32 %v2948, 0.0
      %v3018 = vmax.f32 %v2949, 0.0
      %v3019 = vmax.f32 %v2950, 0.0
      %v3020 = vmax.f32 %v2951, 0.0
      %v3021 = vmax.f32 %v2952, 0.0
      %v3022 = vmax.f32 %v2953, 0.0
      %v3023 = vmax.f32 %v2954, 0.0
      %v3024 = vmax.f32 %v2955, 0.0
      %v3025 = vmax.f32 %v2956, 0.0
      %v3026 = vmax.f32 %v2957, 0.0
      %v3027 = vmax.f32 %v2958, 0.0
      %v3028 = vmax.f32 %v2959, 0.0
      %v3029 = vmax.f32 %v2960, 0.0
      %v3030 = vmax.f32 %v2961, 0.0
      %v3031 = vmax.f32 %v2962, 0.0
      %v3032 = vmax.f32 %v2963, 0.0
      %v3033 = vsel %vm2968, %v2969, %v2900
      %v3034 = vsel %vm2968, %v2970, %v2901
      %v3035 = vsel %vm2968, %v2971, %v2902
      %v3036 = vsel %vm2968, %v2972, %v2903
      %v3037 = vsel %vm2968, %v2973, %v2904
      %v3038 = vsel %vm2968, %v2974, %v2905
      %v3039 = vsel %vm2968, %v2975, %v2906
      %v3040 = vsel %vm2968, %v2976, %v2907
      %v3041 = vsel %vm2968, %v2977, %v2908
      %v3042 = vsel %vm2968, %v2978, %v2909
      %v3043 = vsel %vm2968, %v2979, %v2910
      %v3044 = vsel %vm2968, %v2980, %v2911
      %v3045 = vsel %vm2968, %v2981, %v2912
      %v3046 = vsel %vm2968, %v2982, %v2913
      %v3047 = vsel %vm2968, %v2983, %v2914
      %v3048 = vsel %vm2968, %v2984, %v2915
      %v3049 = vsel %vm2968, %v2985, %v2916
      %v3050 = vsel %vm2968, %v2986, %v2917
      %v3051 = vsel %vm2968, %v2987, %v2918
      %v3052 = vsel %vm2968, %v2988, %v2919
      %v3053 = vsel %vm2968, %v2989, %v2920
      %v3054 = vsel %vm2968, %v2990, %v2921
      %v3055 = vsel %vm2968, %v2991, %v2922
      %v3056 = vsel %vm2968, %v2992, %v2923
      %v3057 = vsel %vm2968, %v2993, %v2924
      %v3058 = vsel %vm2968, %v2994, %v2925
      %v3059 = vsel %vm2968, %v2995, %v2926
      %v3060 = vsel %vm2968, %v2996, %v2927
      %v3061 = vsel %vm2968, %v2997, %v2928
      %v3062 = vsel %vm2968, %v2998, %v2929
      %v3063 = vsel %vm2968, %v2999, %v2930
      %v3064 = vsel %vm2968, %v3000, %v2931
      %v3065 = vsel %vm2968, %v3001, %v2932
      %v3066 = vsel %vm2968, %v3002, %v2933
      %v3067 = vsel %vm2968, %v3003, %v2934
      %v3068 = vsel %vm2968, %v3004, %v2935
      %v3069 = vsel %vm2968, %v3005, %v2936
      %v3070 = vsel %vm2968, %v3006, %v2937
      %v3071 = vsel %vm2968, %v3007, %v2938
      %v3072 = vsel %vm2968, %v3008, %v2939
      %v3073 = vsel %vm2968, %v3009, %v2940
      %v3074 = vsel %vm2968, %v3010, %v2941
      %v3075 = vsel %vm2968, %v3011, %v2942
      %v3076 = vsel %vm2968, %v3012, %v2943
      %v3077 = vsel %vm2968, %v3013, %v2944
      %v3078 = vsel %vm2968, %v3014, %v2945
      %v3079 = vsel %vm2968, %v3015, %v2946
      %v3080 = vsel %vm2968, %v3016, %v2947
      %v3081 = vsel %vm2968, %v3017, %v2948
      %v3082 = vsel %vm2968, %v3018, %v2949
      %v3083 = vsel %vm2968, %v3019, %v2950
      %v3084 = vsel %vm2968, %v3020, %v2951
      %v3085 = vsel %vm2968, %v3021, %v2952
      %v3086 = vsel %vm2968, %v3022, %v2953
      %v3087 = vsel %vm2968, %v3023, %v2954
      %v3088 = vsel %vm2968, %v3024, %v2955
      %v3089 = vsel %vm2968, %v3025, %v2956
      %v3090 = vsel %vm2968, %v3026, %v2957
      %v3091 = vsel %vm2968, %v3027, %v2958
      %v3092 = vsel %vm2968, %v3028, %v2959
      %v3093 = vsel %vm2968, %v3029, %v2960
      %v3094 = vsel %vm2968, %v3030, %v2961
      %v3095 = vsel %vm2968, %v3031, %v2962
      %v3096 = vsel %vm2968, %v3032, %v2963
      %v3097 = vpack.c.bf16 %v3033, %v3033
      %v3098 = vpack.c.bf16 %v3034, %v3034
      %v3099 = vpack.c.bf16 %v3035, %v3035
      %v3100 = vpack.c.bf16 %v3036, %v3036
      %v3101 = vpack.c.bf16 %v3037, %v3037
      %v3102 = vpack.c.bf16 %v3038, %v3038
      %v3103 = vpack.c.bf16 %v3039, %v3039
      %v3104 = vpack.c.bf16 %v3040, %v3040
      %v3105 = vpack.c.bf16 %v3041, %v3041
      %v3106 = vpack.c.bf16 %v3042, %v3042
      %v3107 = vpack.c.bf16 %v3043, %v3043
      %v3108 = vpack.c.bf16 %v3044, %v3044
      %v3109 = vpack.c.bf16 %v3045, %v3045
      %v3110 = vpack.c.bf16 %v3046, %v3046
      %v3111 = vpack.c.bf16 %v3047, %v3047
      %v3112 = vpack.c.bf16 %v3048, %v3048
      %v3113 = vpack.c.bf16 %v3049, %v3049
      %v3114 = vpack.c.bf16 %v3050, %v3050
      %v3115 = vpack.c.bf16 %v3051, %v3051
      %v3116 = vpack.c.bf16 %v3052, %v3052
      %v3117 = vpack.c.bf16 %v3053, %v3053
      %v3118 = vpack.c.bf16 %v3054, %v3054
      %v3119 = vpack.c.bf16 %v3055, %v3055
      %v3120 = vpack.c.bf16 %v3056, %v3056
      %v3121 = vpack.c.bf16 %v3057, %v3057
      %v3122 = vpack.c.bf16 %v3058, %v3058
      %v3123 = vpack.c.bf16 %v3059, %v3059
      %v3124 = vpack.c.bf16 %v3060, %v3060
      %v3125 = vpack.c.bf16 %v3061, %v3061
      %v3126 = vpack.c.bf16 %v3062, %v3062
      %v3127 = vpack.c.bf16 %v3063, %v3063
      %v3128 = vpack.c.bf16 %v3064, %v3064
      %v3129 = vpack.c.bf16 %v3065, %v3065
      %v3130 = vpack.c.bf16 %v3066, %v3066
      %v3131 = vpack.c.bf16 %v3067, %v3067
      %v3132 = vpack.c.bf16 %v3068, %v3068
      %v3133 = vpack.c.bf16 %v3069, %v3069
      %v3134 = vpack.c.bf16 %v3070, %v3070
      %v3135 = vpack.c.bf16 %v3071, %v3071
      %v3136 = vpack.c.bf16 %v3072, %v3072
      %v3137 = vpack.c.bf16 %v3073, %v3073
      %v3138 = vpack.c.bf16 %v3074, %v3074
      %v3139 = vpack.c.bf16 %v3075, %v3075
      %v3140 = vpack.c.bf16 %v3076, %v3076
      %v3141 = vpack.c.bf16 %v3077, %v3077
      %v3142 = vpack.c.bf16 %v3078, %v3078
      %v3143 = vpack.c.bf16 %v3079, %v3079
      %v3144 = vpack.c.bf16 %v3080, %v3080
      %v3145 = vpack.c.bf16 %v3081, %v3081
      %v3146 = vpack.c.bf16 %v3082, %v3082
      %v3147 = vpack.c.bf16 %v3083, %v3083
      %v3148 = vpack.c.bf16 %v3084, %v3084
      %v3149 = vpack.c.bf16 %v3085, %v3085
      %v3150 = vpack.c.bf16 %v3086, %v3086
      %v3151 = vpack.c.bf16 %v3087, %v3087
      %v3152 = vpack.c.bf16 %v3088, %v3088
      %v3153 = vpack.c.bf16 %v3089, %v3089
      %v3154 = vpack.c.bf16 %v3090, %v3090
      %v3155 = vpack.c.bf16 %v3091, %v3091
      %v3156 = vpack.c.bf16 %v3092, %v3092
      %v3157 = vpack.c.bf16 %v3093, %v3093
      %v3158 = vpack.c.bf16 %v3094, %v3094
      %v3159 = vpack.c.bf16 %v3095, %v3095
      %v3160 = vpack.c.bf16 %v3096, %v3096
      %3161 = vst [vmem:[%s541] sm:$0xf] %v3097
      %3162 = vst [vmem:[%s541 + $0x4] sm:$0xf] %v3098
      %3163 = vst [vmem:[%s541 + $0x8] sm:$0xf] %v3099
      %3164 = vst [vmem:[%s541 + $0xc] sm:$0xf] %v3100
      %3165 = vst [vmem:[%s541 + $0x10] sm:$0xf] %v3101
      %3166 = vst [vmem:[%s541 + $0x14] sm:$0xf] %v3102
      %3167 = vst [vmem:[%s541 + $0x18] sm:$0xf] %v3103
      %3168 = vst [vmem:[%s541 + $0x1c] sm:$0xf] %v3104
      %3169 = vst [vmem:[%s541 + $0x20] sm:$0xf] %v3105
      %3170 = vst [vmem:[%s541 + $0x24] sm:$0xf] %v3106
      %3171 = vst [vmem:[%s541 + $0x28] sm:$0xf] %v3107
      %3172 = vst [vmem:[%s541 + $0x2c] sm:$0xf] %v3108
      %3173 = vst [vmem:[%s541 + $0x30] sm:$0xf] %v3109
      %3174 = vst [vmem:[%s541 + $0x34] sm:$0xf] %v3110
      %3175 = vst [vmem:[%s541 + $0x38] sm:$0xf] %v3111
      %3176 = vst [vmem:[%s541 + $0x3c] sm:$0xf] %v3112
      %3177 = vst [vmem:[%s541 + $0x40] sm:$0xf] %v3113
      %3178 = vst [vmem:[%s541 + $0x44] sm:$0xf] %v3114
      %3179 = vst [vmem:[%s541 + $0x48] sm:$0xf] %v3115
      %3180 = vst [vmem:[%s541 + $0x4c] sm:$0xf] %v3116
      %3181 = vst [vmem:[%s541 + $0x50] sm:$0xf] %v3117
      %3182 = vst [vmem:[%s541 + $0x54] sm:$0xf] %v3118
      %3183 = vst [vmem:[%s541 + $0x58] sm:$0xf] %v3119
      %3184 = vst [vmem:[%s541 + $0x5c] sm:$0xf] %v3120
      %3185 = vst [vmem:[%s541 + $0x60] sm:$0xf] %v3121
      %3186 = vst [vmem:[%s541 + $0x64] sm:$0xf] %v3122
      %3187 = vst [vmem:[%s541 + $0x68] sm:$0xf] %v3123
      %3188 = vst [vmem:[%s541 + $0x6c] sm:$0xf] %v3124
      %3189 = vst [vmem:[%s541 + $0x70] sm:$0xf] %v3125
      %3190 = vst [vmem:[%s541 + $0x74] sm:$0xf] %v3126
      %3191 = vst [vmem:[%s541 + $0x78] sm:$0xf] %v3127
      %3192 = vst [vmem:[%s541 + $0x7c] sm:$0xf] %v3128
      %3193 = vst [vmem:[%s541 + $0x80] sm:$0xf] %v3129
      %3194 = vst [vmem:[%s541 + $0x84] sm:$0xf] %v3130
      %3195 = vst [vmem:[%s541 + $0x88] sm:$0xf] %v3131
      %3196 = vst [vmem:[%s541 + $0x8c] sm:$0xf] %v3132
      %3197 = vst [vmem:[%s541 + $0x90] sm:$0xf] %v3133
      %3198 = vst [vmem:[%s541 + $0x94] sm:$0xf] %v3134
      %3199 = vst [vmem:[%s541 + $0x98] sm:$0xf] %v3135
      %3200 = vst [vmem:[%s541 + $0x9c] sm:$0xf] %v3136
      %3201 = vst [vmem:[%s541 + $0xa0] sm:$0xf] %v3137
      %3202 = vst [vmem:[%s541 + $0xa4] sm:$0xf] %v3138
      %3203 = vst [vmem:[%s541 + $0xa8] sm:$0xf] %v3139
      %3204 = vst [vmem:[%s541 + $0xac] sm:$0xf] %v3140
      %3205 = vst [vmem:[%s541 + $0xb0] sm:$0xf] %v3141
      %3206 = vst [vmem:[%s541 + $0xb4] sm:$0xf] %v3142
      %3207 = vst [vmem:[%s541 + $0xb8] sm:$0xf] %v3143
      %3208 = vst [vmem:[%s541 + $0xbc] sm:$0xf] %v3144
      %3209 = vst [vmem:[%s541 + $0xc0] sm:$0xf] %v3145
      %3210 = vst [vmem:[%s541 + $0xc4] sm:$0xf] %v3146
      %3211 = vst [vmem:[%s541 + $0xc8] sm:$0xf] %v3147
      %3212 = vst [vmem:[%s541 + $0xcc] sm:$0xf] %v3148
      %3213 = vst [vmem:[%s541 + $0xd0] sm:$0xf] %v3149
      %3214 = vst [vmem:[%s541 + $0xd4] sm:$0xf] %v3150
      %3215 = vst [vmem:[%s541 + $0xd8] sm:$0xf] %v3151
      %3216 = vst [vmem:[%s541 + $0xdc] sm:$0xf] %v3152
      %3217 = vst [vmem:[%s541 + $0xe0] sm:$0xf] %v3153
      %3218 = vst [vmem:[%s541 + $0xe4] sm:$0xf] %v3154
      %3219 = vst [vmem:[%s541 + $0xe8] sm:$0xf] %v3155
      %3220 = vst [vmem:[%s541 + $0xec] sm:$0xf] %v3156
      %3221 = vst [vmem:[%s541 + $0xf0] sm:$0xf] %v3157
      %3222 = vst [vmem:[%s541 + $0xf4] sm:$0xf] %v3158
      %3223 = vst [vmem:[%s541 + $0xf8] sm:$0xf] %v3159
      %3224 = vst [vmem:[%s541 + $0xfc] sm:$0xf] %v3160
      %s3225 = smul.u32 64, %s29
      %p3226 = scmp.lt.s32.totalorder %s3225, 319
      %s3227 = scalar_select %p3226, %s3225, 319
      %s3228 = smul.addr %s3227, 4
      %s3229 = scalar_lea.vmem %s10, %s3228
      // Predicated region
      $region57: #{fcos_core_forward.1} parent=55 // pred_check
        %p3230 = pneg %p297
      $region58: #{fcos_core_forward.1} parent=55 // pred_check_branch
        %3232 = sbr.rel (%p3230) target = $region60
      $region59: #{fcos_core_forward.1} parent=55 // pred_region
        %s3233 = smul.u32 64, %s29
      $region60: #{fcos_core_forward.1} parent=55 // pred_fallthru
        _
    $region56: #{fcos_core_forward.1} parent=5 // pred_fallthru
      _
    %p3234 = scmp.le.s32.totalorder 2, %s24
    // Predicated region
    $region61: #{fcos_core_forward.1} parent=5 // pred_check
      %p3235 = pneg %p3234
    $region62: #{fcos_core_forward.1} parent=5 // pred_check_branch
      %3237 = sbr.rel (%p3235) target = $region64
    $region63: #{fcos_core_forward.1} parent=5 // pred_region
      %s3238 = ssub.s32 %s24, 2
      // Predicated region
      $region65: #{fcos_core_forward.1} parent=63 // pred_check
        %p3239 = pneg %p303
      $region66: #{fcos_core_forward.1} parent=63 // pred_check_branch
        %3241 = sbr.rel (%p3239) target = $region68
      $region67: #{fcos_core_forward.1} parent=63 // pred_region
        %s3242 = smul.u32 64, %s30
        %p3243 = scmp.lt.s32.totalorder %s3242, 319
        %s3244 = scalar_select %p3243, %s3242, 319
        %s3245 = smul.addr %s3244, 4
        %s3246 = scalar_lea.vmem %s10, %s3245
      $region68: #{fcos_core_forward.1} parent=63 // pred_fallthru
        _
    $region64: #{fcos_core_forward.1} parent=5 // pred_fallthru
      _
  $region6: #{fcos_core_forward.1} parent=0 // loop_footer
    %s28 = sadd.s32 1, %s24
  $region7: #{fcos_core_forward.1} parent=0 // loop_footer_branch
    %23 = sbr.rel target = $region3
  $region8: #{fcos_core_forward.1} parent=0 // loop_exit
    _

</llo_original>
